<compile_context>
chip_gen: v6e
topology: v6e:2x2x1
jax: 0.10.0
libtpu: 0.0.40
codegen_flags: <defaults>
</compile_context>

<pallas_src>
import functools

import jax
import jax.numpy as jnp
from jax.experimental import pallas as pl
from jax.experimental.pallas import tpu as pltpu


def _round_up(x, m):
    return ((x + m - 1) // m) * m


def attention_kernel(enc_ref, dec_ref,
                     w_enc_ref, b_enc_ref,
                     w_dec_ref, b_dec_ref,
                     w_full_ref, b_full_ref,
                     z_ref, alpha_ref,
                     *, n_valid, use_bf16_matmul):
    BB, N_pad, E = enc_ref.shape
    A = w_enc_ref.shape[1]

    enc = enc_ref[...]                      # (BB, N_pad, E) f32
    dec = dec_ref[...]                      # (BB, D)        f32

    mm_dtype = jnp.bfloat16 if use_bf16_matmul else jnp.float32

    # --- encoder projection: one large MXU matmul over all BB*N_pad rows ---
    enc2 = enc.reshape(BB * N_pad, E)       # fold batch into the M dimension
    att1 = jnp.dot(enc2.astype(mm_dtype), w_enc_ref[...].astype(mm_dtype),
                   preferred_element_type=jnp.float32) + b_enc_ref[...]
    att1 = att1.reshape(BB, N_pad, A)       # (BB, N_pad, A)

    # --- decoder projection: one (BB, D) @ (D, A) matmul per block ---
    att2 = jnp.dot(dec.astype(mm_dtype), w_dec_ref[...].astype(mm_dtype),
                   preferred_element_type=jnp.float32) + b_dec_ref[...]   # (BB, A)

    # relu(att1 + att2[:, None, :]) stays in f32 on the VPU.
    h = jnp.maximum(att1 + att2[:, None, :], 0.0)     # (BB, N_pad, A)

    # --- full_att as VPU multiply + lane reduce (no degenerate N=1 matmul) ---
    w_full_row = w_full_ref[...].reshape(1, 1, A)     # (1, 1, A)
    att = jnp.sum(h * w_full_row, axis=-1) + b_full_ref[...]   # (BB, N_pad)

    # --- mask padded pixel lanes, softmax over the lane (pixel) axis ---
    if n_valid < N_pad:
        lane = jax.lax.broadcasted_iota(jnp.int32, (BB, N_pad), 1)
        att = jnp.where(lane < n_valid, att, -jnp.inf)
    m = jnp.max(att, axis=-1, keepdims=True)          # (BB, 1)
    e = jnp.exp(att - m)                              # padded lanes -> 0
    denom = jnp.sum(e, axis=-1, keepdims=True)        # (BB, 1)
    alpha = e * pl.reciprocal(denom, approx=False)    # (BB, N_pad)

    # --- attention-weighted encoding: broadcast-mul + sublane reduce ---
    # (padded pixels contribute 0 because alpha == 0 there and enc is 0-padded)
    z = jnp.sum(alpha[:, :, None] * enc, axis=1)      # (BB, E)

    z_ref[...] = z.astype(z_ref.dtype)                # (BB, E)
    alpha_ref[...] = alpha.astype(alpha_ref.dtype)    # (BB, N_pad) lane-dense


def attention_forward(encoder_out, decoder_hidden, params, *,
                      block_b=8, use_bf16_matmul=False):
    """encoder_out: (B, N, E) f32, decoder_hidden: (B, D) f32."""
    B, N, E = encoder_out.shape
    _, D = decoder_hidden.shape
    A = params["w_enc"].shape[1]

    # Batch tile: multiple of 8 (sublane). Pad B / N so every block is full
    # and the alpha store is lane-dense. Padded rows/lanes are masked inside
    # the kernel or sliced away afterwards, so semantics are unchanged.
    BB = _round_up(max(8, block_b), 8)
    B_pad = _round_up(B, BB)
    N_pad = _round_up(N, 128)

    enc_p = encoder_out
    if (B_pad, N_pad) != (B, N):
        enc_p = jnp.pad(encoder_out, ((0, B_pad - B), (0, N_pad - N), (0, 0)))
    dec_p = decoder_hidden
    if B_pad != B:
        dec_p = jnp.pad(decoder_hidden, ((0, B_pad - B), (0, 0)))

    w_enc, b_enc = params["w_enc"], params["b_enc"]        # (E, A), (1, A)
    w_dec, b_dec = params["w_dec"], params["b_dec"]        # (D, A), (1, A)
    w_full_row = params["w_full"].reshape(1, A)            # (1, A) row layout
    b_full = params["b_full"].reshape(1, 1)                # (1, 1)

    grid = (B_pad // BB,)

    kernel = functools.partial(attention_kernel, n_valid=N,
                               use_bf16_matmul=use_bf16_matmul)

    flops = (2 * B_pad * N_pad * E * A        # encoder projection
             + 2 * B_pad * D * A              # decoder projection
             + 3 * B_pad * N_pad * A          # relu + full_att mul/reduce
             + 3 * B_pad * N_pad * E)         # weighted sum + softmax-ish
    bytes_accessed = 4 * (B_pad * N_pad * E + B_pad * D
                          + E * A + D * A + 2 * A + 1
                          + B_pad * E + B_pad * N_pad)
    cost = pl.CostEstimate(flops=flops,
                           transcendentals=B_pad * N_pad,
                           bytes_accessed=bytes_accessed)

    grid_spec = pltpu.PrefetchScalarGridSpec(
        num_scalar_prefetch=0,
        grid=grid,
        in_specs=[
            pl.BlockSpec((BB, N_pad, E), lambda b: (b, 0, 0)),   # encoder_out
            pl.BlockSpec((BB, D),        lambda b: (b, 0)),      # decoder_hidden
            pl.BlockSpec((E, A),         lambda b: (0, 0)),      # w_enc (resident)
            pl.BlockSpec((1, A),         lambda b: (0, 0)),      # b_enc
            pl.BlockSpec((D, A),         lambda b: (0, 0)),      # w_dec
            pl.BlockSpec((1, A),         lambda b: (0, 0)),      # b_dec
            pl.BlockSpec((1, A),         lambda b: (0, 0)),      # w_full (row)
            pl.BlockSpec((1, 1),         lambda b: (0, 0)),      # b_full
        ],
        out_specs=[
            pl.BlockSpec((BB, E),     lambda b: (b, 0)),         # z
            pl.BlockSpec((BB, N_pad), lambda b: (b, 0)),         # alpha (lane-dense)
        ],
    )

    z_p, alpha_p = pl.pallas_call(
        kernel,
        out_shape=(
            jax.ShapeDtypeStruct((B_pad, E), jnp.float32),
            jax.ShapeDtypeStruct((B_pad, N_pad), jnp.float32),
        ),
        grid_spec=grid_spec,
        compiler_params=pltpu.CompilerParams(
            dimension_semantics=("parallel",)),
        cost_estimate=cost,
    )(enc_p, dec_p, w_enc, b_enc, w_dec, b_dec, w_full_row, b_full)

    return z_p[:B], alpha_p[:B, :N]


def attention_reference(encoder_out, decoder_hidden, params):
    att1 = encoder_out @ params["w_enc"] + params["b_enc"]          # (B, N, A)
    att2 = decoder_hidden @ params["w_dec"] + params["b_dec"]       # (B, A)
    h = jnp.maximum(att1 + att2[:, None, :], 0.0)                   # (B, N, A)
    att = (h @ params["w_full"] + params["b_full"])[..., 0]         # (B, N)
    alpha = jax.nn.softmax(att, axis=1)                             # (B, N)
    z = jnp.sum(encoder_out * alpha[:, :, None], axis=1)            # (B, E)
    return z, alpha


def init_params(key, encoder_dim, decoder_dim, attention_dim):
    k1, k2, k3, k4, k5, k6 = jax.random.split(key, 6)

    def lin(kw, kb, fan_in, fan_out):
        bound = 1.0 / jnp.sqrt(fan_in)
        w = jax.random.uniform(kw, (fan_in, fan_out), jnp.float32, -bound, bound)
        b = jax.random.uniform(kb, (1, fan_out), jnp.float32, -bound, bound)
        return w, b

    w_enc, b_enc = lin(k1, k2, encoder_dim, attention_dim)
    w_dec, b_dec = lin(k3, k4, decoder_dim, attention_dim)
    w_full, b_full = lin(k5, k6, attention_dim, 1)
    return dict(w_enc=w_enc, b_enc=b_enc, w_dec=w_dec, b_dec=b_dec,
                w_full=w_full, b_full=b_full)


if __name__ == "__main__":
    B, N, E, D, A = 2, 16, 32, 32, 32   # batch, num_pixels, enc_dim, dec_dim, att_dim
    key = jax.random.PRNGKey(0)
    k_enc, k_dec, k_par = jax.random.split(key, 3)

    encoder_out = jax.random.normal(k_enc, (B, N, E), jnp.float32)
    decoder_hidden = jax.random.normal(k_dec, (B, D), jnp.float32)
    params = init_params(k_par, E, D, A)

    z, alpha = attention_forward(encoder_out, decoder_hidden, params)
    z = jax.block_until_ready(z)
    alpha = jax.block_until_ready(alpha)

    z_ref, alpha_ref = attention_reference(encoder_out, decoder_hidden, params)
    assert jnp.allclose(z, z_ref, atol=1e-5, rtol=1e-5), "z mismatch"
    assert jnp.allclose(alpha, alpha_ref, atol=1e-5, rtol=1e-5), "alpha mismatch"

    print("KERNEL_OK")
</pallas_src>

<mosaic_0001>
module attributes {stable_mosaic.version = 11 : i64} {
  func.func @attention_kernel(%arg0: i32, %arg1: memref<8x128x32xf32, #tpu.memory_space<vmem>>, %arg2: memref<8x32xf32, #tpu.memory_space<vmem>>, %arg3: memref<32x32xf32, #tpu.memory_space<vmem>>, %arg4: memref<1x32xf32, #tpu.memory_space<vmem>>, %arg5: memref<32x32xf32, #tpu.memory_space<vmem>>, %arg6: memref<1x32xf32, #tpu.memory_space<vmem>>, %arg7: memref<1x32xf32, #tpu.memory_space<vmem>>, %arg8: memref<1x1xf32, #tpu.memory_space<vmem>>, %arg9: memref<8x32xf32, #tpu.memory_space<vmem>>, %arg10: memref<8x128xf32, #tpu.memory_space<vmem>>) attributes {dimension_semantics = [#tpu.dimension_semantics<parallel>], iteration_bounds = array<i64: 1>, scalar_prefetch = 0 : i64, scratch_operands = 0 : i64, tpu.core_type = #tpu.core_type<tc>, window_params = [{transform_indices = @transform_0, window_bounds = array<i64: 8, 128, 32>}, {transform_indices = @transform_1, window_bounds = array<i64: 8, 32>}, {pipeline_mode = #tpu.pipeline_mode<synchronous>, transform_indices = @transform_2, window_bounds = array<i64: 32, 32>}, {pipeline_mode = #tpu.pipeline_mode<synchronous>, transform_indices = @transform_3, window_bounds = array<i64: 1, 32>}, {pipeline_mode = #tpu.pipeline_mode<synchronous>, transform_indices = @transform_4, window_bounds = array<i64: 32, 32>}, {pipeline_mode = #tpu.pipeline_mode<synchronous>, transform_indices = @transform_5, window_bounds = array<i64: 1, 32>}, {pipeline_mode = #tpu.pipeline_mode<synchronous>, transform_indices = @transform_6, window_bounds = array<i64: 1, 32>}, {pipeline_mode = #tpu.pipeline_mode<synchronous>, transform_indices = @transform_7, window_bounds = array<i64: 1, 1>}, {transform_indices = @transform_8, window_bounds = array<i64: 8, 32>}, {transform_indices = @transform_9, window_bounds = array<i64: 8, 128>}]} {
    %c0 = arith.constant 0 : index
    %c0_0 = arith.constant 0 : index
    %c0_1 = arith.constant 0 : index
    %0 = vector.load %arg1[%c0, %c0_0, %c0_1] : memref<8x128x32xf32, #tpu.memory_space<vmem>>, vector<8x128x32xf32>
    %c0_2 = arith.constant 0 : index
    %c0_3 = arith.constant 0 : index
    %1 = vector.load %arg2[%c0_2, %c0_3] : memref<8x32xf32, #tpu.memory_space<vmem>>, vector<8x32xf32>
    %2 = vector.shape_cast %0 : vector<8x128x32xf32> to vector<1024x32xf32>
    %c0_4 = arith.constant 0 : index
    %c0_5 = arith.constant 0 : index
    %3 = vector.load %arg3[%c0_4, %c0_5] : memref<32x32xf32, #tpu.memory_space<vmem>>, vector<32x32xf32>
    %cst = arith.constant dense<0.000000e+00> : vector<1024x32xf32>
    %4 = tpu.matmul %2, %3, %cst {dimension_numbers = #tpu.dot_dimension_numbers<[1], [0], [0], [1], [0, 0, 1, 1], [], []>} : vector<1024x32xf32>, vector<32x32xf32>, vector<1024x32xf32> -> vector<1024x32xf32>
    %c0_6 = arith.constant 0 : index
    %c0_7 = arith.constant 0 : index
    %5 = vector.load %arg4[%c0_6, %c0_7] : memref<1x32xf32, #tpu.memory_space<vmem>>, vector<1x32xf32>
    %6 = vector.broadcast %5 : vector<1x32xf32> to vector<1024x32xf32>
    %7 = arith.addf %4, %6 : vector<1024x32xf32>
    %8 = vector.shape_cast %7 : vector<1024x32xf32> to vector<8x128x32xf32>
    %c0_8 = arith.constant 0 : index
    %c0_9 = arith.constant 0 : index
    %9 = vector.load %arg5[%c0_8, %c0_9] : memref<32x32xf32, #tpu.memory_space<vmem>>, vector<32x32xf32>
    %cst_10 = arith.constant dense<0.000000e+00> : vector<8x32xf32>
    %10 = tpu.matmul %1, %9, %cst_10 {dimension_numbers = #tpu.dot_dimension_numbers<[1], [0], [0], [1], [0, 0, 1, 1], [], []>} : vector<8x32xf32>, vector<32x32xf32>, vector<8x32xf32> -> vector<8x32xf32>
    %c0_11 = arith.constant 0 : index
    %c0_12 = arith.constant 0 : index
    %11 = vector.load %arg6[%c0_11, %c0_12] : memref<1x32xf32, #tpu.memory_space<vmem>>, vector<1x32xf32>
    %12 = vector.broadcast %11 : vector<1x32xf32> to vector<8x32xf32>
    %13 = arith.addf %10, %12 : vector<8x32xf32>
    %14 = vector.shape_cast %13 : vector<8x32xf32> to vector<8x1x32xf32>
    %15 = vector.broadcast %14 : vector<8x1x32xf32> to vector<8x128x32xf32>
    %16 = arith.addf %8, %15 : vector<8x128x32xf32>
    %cst_13 = arith.constant 0.000000e+00 : f32
    %17 = vector.broadcast %cst_13 : f32 to vector<8x128x32xf32>
    %18 = arith.maximumf %16, %17 : vector<8x128x32xf32>
    %c0_14 = arith.constant 0 : index
    %c0_15 = arith.constant 0 : index
    %19 = vector.load %arg7[%c0_14, %c0_15] : memref<1x32xf32, #tpu.memory_space<vmem>>, vector<1x32xf32>
    %20 = vector.shape_cast %19 : vector<1x32xf32> to vector<1x1x32xf32>
    %21 = vector.broadcast %20 : vector<1x1x32xf32> to vector<8x128x32xf32>
    %22 = arith.mulf %18, %21 : vector<8x128x32xf32>
    %cst_16 = arith.constant dense<0.000000e+00> : vector<8x128xf32>
    %23 = vector.multi_reduction <add>, %22, %cst_16 [2] : vector<8x128x32xf32> to vector<8x128xf32>
    %c0_17 = arith.constant 0 : index
    %c0_18 = arith.constant 0 : index
    %24 = vector.load %arg8[%c0_17, %c0_18] : memref<1x1xf32, #tpu.memory_space<vmem>>, vector<1x1xf32>
    %25 = vector.broadcast %24 : vector<1x1xf32> to vector<8x128xf32>
    %26 = arith.addf %23, %25 : vector<8x128xf32>
    %27 = tpu.iota {dimensions = array<i32: 1>} : vector<8x128xi32>
    %c16_i32 = arith.constant 16 : i32
    %28 = vector.broadcast %c16_i32 : i32 to vector<8x128xi32>
    %29 = arith.cmpi slt, %27, %28 : vector<8x128xi32>
    %cst_19 = arith.constant 0xFF800000 : f32
    %30 = vector.broadcast %cst_19 : f32 to vector<8x128xf32>
    %31 = arith.select %29, %26, %30 : vector<8x128xi1>, vector<8x128xf32>
    %cst_20 = arith.constant dense<0xFF800000> : vector<8xf32>
    %32 = vector.multi_reduction <maximumf>, %31, %cst_20 [1] : vector<8x128xf32> to vector<8xf32>
    %33 = vector.shape_cast %32 : vector<8xf32> to vector<8x1xf32>
    %34 = vector.broadcast %33 : vector<8x1xf32> to vector<8x128xf32>
    %35 = arith.subf %31, %34 : vector<8x128xf32>
    %36 = math.exp %35 : vector<8x128xf32>
    %cst_21 = arith.constant dense<0.000000e+00> : vector<8xf32>
    %37 = vector.multi_reduction <add>, %36, %cst_21 [1] : vector<8x128xf32> to vector<8xf32>
    %38 = vector.shape_cast %37 : vector<8xf32> to vector<8x1xf32>
    %39 = tpu.reciprocal %38 : vector<8x1xf32> -> vector<8x1xf32>
    %40 = vector.broadcast %39 : vector<8x1xf32> to vector<8x128xf32>
    %41 = arith.mulf %36, %40 : vector<8x128xf32>
    %42 = vector.shape_cast %41 : vector<8x128xf32> to vector<8x128x1xf32>
    %43 = vector.broadcast %42 : vector<8x128x1xf32> to vector<8x128x32xf32>
    %44 = arith.mulf %43, %0 : vector<8x128x32xf32>
    %cst_22 = arith.constant dense<0.000000e+00> : vector<8x32xf32>
    %45 = vector.multi_reduction <add>, %44, %cst_22 [1] : vector<8x128x32xf32> to vector<8x32xf32>
    %c0_23 = arith.constant 0 : index
    %c0_24 = arith.constant 0 : index
    %46 = vector.load %arg9[%c0_23, %c0_24] : memref<8x32xf32, #tpu.memory_space<vmem>>, vector<8x32xf32>
    tpu.vector_store %arg9[%c0_23, %c0_24], %45 {strides = array<i32>} : memref<8x32xf32, #tpu.memory_space<vmem>>, vector<8x32xf32>,
    %c0_25 = arith.constant 0 : index
    %c0_26 = arith.constant 0 : index
    %47 = vector.load %arg10[%c0_25, %c0_26] : memref<8x128xf32, #tpu.memory_space<vmem>>, vector<8x128xf32>
    tpu.vector_store %arg10[%c0_25, %c0_26], %41 {strides = array<i32>} : memref<8x128xf32, #tpu.memory_space<vmem>>, vector<8x128xf32>,
    return
  }
  func.func @transform_0(%arg0: i32) -> (i32, i32, i32) {
    %c0_i32 = arith.constant 0 : i32
    %c0_i32_0 = arith.constant 0 : i32
    %c0_i32_1 = arith.constant 0 : i32
    return %arg0, %c0_i32, %c0_i32_0 : i32, i32, i32
  }
  func.func @transform_1(%arg0: i32) -> (i32, i32) {
    %c0_i32 = arith.constant 0 : i32
    %c0_i32_0 = arith.constant 0 : i32
    return %arg0, %c0_i32 : i32, i32
  }
  func.func @transform_2(%arg0: i32) -> (i32, i32) {
    %c0_i32 = arith.constant 0 : i32
    %c0_i32_0 = arith.constant 0 : i32
    %c0_i32_1 = arith.constant 0 : i32
    return %c0_i32, %c0_i32_0 : i32, i32
  }
  func.func @transform_3(%arg0: i32) -> (i32, i32) {
    %c0_i32 = arith.constant 0 : i32
    %c0_i32_0 = arith.constant 0 : i32
    %c0_i32_1 = arith.constant 0 : i32
    return %c0_i32, %c0_i32_0 : i32, i32
  }
  func.func @transform_4(%arg0: i32) -> (i32, i32) {
    %c0_i32 = arith.constant 0 : i32
    %c0_i32_0 = arith.constant 0 : i32
    %c0_i32_1 = arith.constant 0 : i32
    return %c0_i32, %c0_i32_0 : i32, i32
  }
  func.func @transform_5(%arg0: i32) -> (i32, i32) {
    %c0_i32 = arith.constant 0 : i32
    %c0_i32_0 = arith.constant 0 : i32
    %c0_i32_1 = arith.constant 0 : i32
    return %c0_i32, %c0_i32_0 : i32, i32
  }
  func.func @transform_6(%arg0: i32) -> (i32, i32) {
    %c0_i32 = arith.constant 0 : i32
    %c0_i32_0 = arith.constant 0 : i32
    %c0_i32_1 = arith.constant 0 : i32
    return %c0_i32, %c0_i32_0 : i32, i32
  }
  func.func @transform_7(%arg0: i32) -> (i32, i32) {
    %c0_i32 = arith.constant 0 : i32
    %c0_i32_0 = arith.constant 0 : i32
    %c0_i32_1 = arith.constant 0 : i32
    return %c0_i32, %c0_i32_0 : i32, i32
  }
  func.func @transform_8(%arg0: i32) -> (i32, i32) {
    %c0_i32 = arith.constant 0 : i32
    %c0_i32_0 = arith.constant 0 : i32
    return %arg0, %c0_i32 : i32, i32
  }
  func.func @transform_9(%arg0: i32) -> (i32, i32) {
    %c0_i32 = arith.constant 0 : i32
    %c0_i32_0 = arith.constant 0 : i32
    return %arg0, %c0_i32 : i32, i32
  }
}

</mosaic_0001>

<llo_original>
// kernel: tpu_custom_call.1
$region0: #{tpu_custom_call.1}
  #allocation0 [shape = 'u32[]', space=smem, size = 0x4, offset = 0x4, fixed_abs, tag = 'smem constant byte address 0x4 - core index']
  #allocation1 [shape = 'u32[144,128]{1,0:T(1,128)}', space=vmem, size = 0x12000, scoped, tag = 'internal scratch']
  #allocation2 [shape = 'f32[1,1]{1,0:T(1,128)S(1)}', space=vmem, size = 0x200, scoped, tag = 'scoped memory for tpu_custom_call.1']
  %s0 = inlined_call_operand.vmem [shape: f32[8,128,32], index: 0, kind: input, shape index: {}]
  %s1 = inlined_call_operand.vmem [shape: f32[8,32], index: 1, kind: input, shape index: {}]
  %s2 = inlined_call_operand.vmem [shape: f32[32,32], index: 2, kind: input, shape index: {}]
  %s3 = inlined_call_operand.vmem [shape: f32[1,32], index: 3, kind: input, shape index: {}]
  %s4 = inlined_call_operand.vmem [shape: f32[32,32], index: 4, kind: input, shape index: {}]
  %s5 = inlined_call_operand.vmem [shape: f32[1,32], index: 5, kind: input, shape index: {}]
  %s6 = inlined_call_operand.vmem [shape: f32[1,32], index: 6, kind: input, shape index: {}]
  %s7 = inlined_call_operand.<no memory space> [shape: f32[1,1], index: 7, kind: input, shape index: {}]
  %s8 = inlined_call_operand.hbm [shape: f32[8,32], index: 8, kind: output, shape index: {0}]
  %s9 = inlined_call_operand.hbm [shape: f32[8,128], index: 9, kind: output, shape index: {1}]
  %10 = xla_tuple %s8, %s9
  %s11 = sld [smem:[#allocation0]]
  $region50: #{tpu_custom_call.1} parent=0
    _
  %s13 = ssub.s32 1, %s11
  %s14 = scalar_select 0, %s13, %s11
  %v15 = vstv %s7
  %16 = vst [vmem:[#allocation2] sm:$0x1] %v15
  $region1: #{tpu_custom_call.1} parent=0
    #allocation3 [shape = 'u8[4096]{0}', space=vmem, size = 0x1000, scoped, tag = 'output window, operand 0, single buffered']
    #allocation4 [shape = 's32[1]{0}', space=sflag, size = 0x4, scoped, tag = 'scoped memory for tpu_custom_call.1']
    #allocation5 [shape = 'u8[4096]{0}', space=vmem, size = 0x1000, scoped, tag = 'output window, operand 1, single buffered']
    #allocation6 [shape = 's32[1]{0}', space=sflag, size = 0x4, scoped, tag = 'scoped memory for tpu_custom_call.1']
    %17 = vsyncpa [#allocation4], 0
    %18 = vsyncpa [#allocation6], 0
    // Predicated region
    $region2: #{tpu_custom_call.1} parent=1 // pred_check
      _
    $region3: #{tpu_custom_call.1} parent=1 // pred_check_branch
      %20 = sbr.rel (0) target = $region5
    $region4: #{tpu_custom_call.1} parent=1 // pred_region
      _
    $region5: #{tpu_custom_call.1} parent=1 // pred_fallthru
      _
    // Predicated region
    $region6: #{tpu_custom_call.1} parent=1 // pred_check
      _
    $region7: #{tpu_custom_call.1} parent=1 // pred_check_branch
      %22 = sbr.rel (0) target = $region9
    $region8: #{tpu_custom_call.1} parent=1 // pred_region
      _
    $region9: #{tpu_custom_call.1} parent=1 // pred_fallthru
      _
    // Predicated region
    $region10: #{tpu_custom_call.1} parent=1 // pred_check
      _
    $region11: #{tpu_custom_call.1} parent=1 // pred_check_branch
      %24 = sbr.rel (0) target = $region13
    $region12: #{tpu_custom_call.1} parent=1 // pred_region
      _
    $region13: #{tpu_custom_call.1} parent=1 // pred_fallthru
      _
    // Predicated region
    $region14: #{tpu_custom_call.1} parent=1 // pred_check
      _
    $region15: #{tpu_custom_call.1} parent=1 // pred_check_branch
      %26 = sbr.rel (0) target = $region17
    $region16: #{tpu_custom_call.1} parent=1 // pred_region
      _
    $region17: #{tpu_custom_call.1} parent=1 // pred_fallthru
      _
    // Predicated region
    $region18: #{tpu_custom_call.1} parent=1 // pred_check
      _
    $region19: #{tpu_custom_call.1} parent=1 // pred_check_branch
      %28 = sbr.rel (0) target = $region21
    $region20: #{tpu_custom_call.1} parent=1 // pred_region
      _
    $region21: #{tpu_custom_call.1} parent=1 // pred_fallthru
      _
    // Predicated region
    $region22: #{tpu_custom_call.1} parent=1 // pred_check
      _
    $region23: #{tpu_custom_call.1} parent=1 // pred_check_branch
      %30 = sbr.rel (0) target = $region25
    $region24: #{tpu_custom_call.1} parent=1 // pred_region
      _
    $region25: #{tpu_custom_call.1} parent=1 // pred_fallthru
      _
    // Predicated region
    $region26: #{tpu_custom_call.1} parent=1 // pred_check
      _
    $region27: #{tpu_custom_call.1} parent=1 // pred_check_branch
      %32 = sbr.rel (0) target = $region29
    $region28: #{tpu_custom_call.1} parent=1 // pred_region
      _
    $region29: #{tpu_custom_call.1} parent=1 // pred_fallthru
      _
    // Predicated region
    $region30: #{tpu_custom_call.1} parent=1 // pred_check
      _
    $region31: #{tpu_custom_call.1} parent=1 // pred_check_branch
      %34 = sbr.rel (0) target = $region33
    $region32: #{tpu_custom_call.1} parent=1 // pred_region
      _
    $region33: #{tpu_custom_call.1} parent=1 // pred_fallthru
      _
    %v35 = vld [vmem:[%s0] sm:$0xff]
    %v36 = vld [vmem:[%s0 + $0x8] sm:$0xff]
    %v37 = vld [vmem:[%s0 + $0x10] sm:$0xff]
    %v38 = vld [vmem:[%s0 + $0x18] sm:$0xff]
    %v39 = vld [vmem:[%s0 + $0x20] sm:$0xff]
    %v40 = vld [vmem:[%s0 + $0x28] sm:$0xff]
    %v41 = vld [vmem:[%s0 + $0x30] sm:$0xff]
    %v42 = vld [vmem:[%s0 + $0x38] sm:$0xff]
    %v43 = vld [vmem:[%s0 + $0x40] sm:$0xff]
    %v44 = vld [vmem:[%s0 + $0x48] sm:$0xff]
    %v45 = vld [vmem:[%s0 + $0x50] sm:$0xff]
    %v46 = vld [vmem:[%s0 + $0x58] sm:$0xff]
    %v47 = vld [vmem:[%s0 + $0x60] sm:$0xff]
    %v48 = vld [vmem:[%s0 + $0x68] sm:$0xff]
    %v49 = vld [vmem:[%s0 + $0x70] sm:$0xff]
    %v50 = vld [vmem:[%s0 + $0x78] sm:$0xff]
    %v51 = vld [vmem:[%s0 + $0x80] sm:$0xff]
    %v52 = vld [vmem:[%s0 + $0x88] sm:$0xff]
    %v53 = vld [vmem:[%s0 + $0x90] sm:$0xff]
    %v54 = vld [vmem:[%s0 + $0x98] sm:$0xff]
    %v55 = vld [vmem:[%s0 + $0xa0] sm:$0xff]
    %v56 = vld [vmem:[%s0 + $0xa8] sm:$0xff]
    %v57 = vld [vmem:[%s0 + $0xb0] sm:$0xff]
    %v58 = vld [vmem:[%s0 + $0xb8] sm:$0xff]
    %v59 = vld [vmem:[%s0 + $0xc0] sm:$0xff]
    %v60 = vld [vmem:[%s0 + $0xc8] sm:$0xff]
    %v61 = vld [vmem:[%s0 + $0xd0] sm:$0xff]
    %v62 = vld [vmem:[%s0 + $0xd8] sm:$0xff]
    %v63 = vld [vmem:[%s0 + $0xe0] sm:$0xff]
    %v64 = vld [vmem:[%s0 + $0xe8] sm:$0xff]
    %v65 = vld [vmem:[%s0 + $0xf0] sm:$0xff]
    %v66 = vld [vmem:[%s0 + $0xf8] sm:$0xff]
    %v67 = vld [vmem:[%s0 + $0x100] sm:$0xff]
    %v68 = vld [vmem:[%s0 + $0x108] sm:$0xff]
    %v69 = vld [vmem:[%s0 + $0x110] sm:$0xff]
    %v70 = vld [vmem:[%s0 + $0x118] sm:$0xff]
    %v71 = vld [vmem:[%s0 + $0x120] sm:$0xff]
    %v72 = vld [vmem:[%s0 + $0x128] sm:$0xff]
    %v73 = vld [vmem:[%s0 + $0x130] sm:$0xff]
    %v74 = vld [vmem:[%s0 + $0x138] sm:$0xff]
    %v75 = vld [vmem:[%s0 + $0x140] sm:$0xff]
    %v76 = vld [vmem:[%s0 + $0x148] sm:$0xff]
    %v77 = vld [vmem:[%s0 + $0x150] sm:$0xff]
    %v78 = vld [vmem:[%s0 + $0x158] sm:$0xff]
    %v79 = vld [vmem:[%s0 + $0x160] sm:$0xff]
    %v80 = vld [vmem:[%s0 + $0x168] sm:$0xff]
    %v81 = vld [vmem:[%s0 + $0x170] sm:$0xff]
    %v82 = vld [vmem:[%s0 + $0x178] sm:$0xff]
    %v83 = vld [vmem:[%s0 + $0x180] sm:$0xff]
    %v84 = vld [vmem:[%s0 + $0x188] sm:$0xff]
    %v85 = vld [vmem:[%s0 + $0x190] sm:$0xff]
    %v86 = vld [vmem:[%s0 + $0x198] sm:$0xff]
    %v87 = vld [vmem:[%s0 + $0x1a0] sm:$0xff]
    %v88 = vld [vmem:[%s0 + $0x1a8] sm:$0xff]
    %v89 = vld [vmem:[%s0 + $0x1b0] sm:$0xff]
    %v90 = vld [vmem:[%s0 + $0x1b8] sm:$0xff]
    %v91 = vld [vmem:[%s0 + $0x1c0] sm:$0xff]
    %v92 = vld [vmem:[%s0 + $0x1c8] sm:$0xff]
    %v93 = vld [vmem:[%s0 + $0x1d0] sm:$0xff]
    %v94 = vld [vmem:[%s0 + $0x1d8] sm:$0xff]
    %v95 = vld [vmem:[%s0 + $0x1e0] sm:$0xff]
    %v96 = vld [vmem:[%s0 + $0x1e8] sm:$0xff]
    %v97 = vld [vmem:[%s0 + $0x1f0] sm:$0xff]
    %v98 = vld [vmem:[%s0 + $0x1f8] sm:$0xff]
    %v99 = vld [vmem:[%s0 + $0x200] sm:$0xff]
    %v100 = vld [vmem:[%s0 + $0x208] sm:$0xff]
    %v101 = vld [vmem:[%s0 + $0x210] sm:$0xff]
    %v102 = vld [vmem:[%s0 + $0x218] sm:$0xff]
    %v103 = vld [vmem:[%s0 + $0x220] sm:$0xff]
    %v104 = vld [vmem:[%s0 + $0x228] sm:$0xff]
    %v105 = vld [vmem:[%s0 + $0x230] sm:$0xff]
    %v106 = vld [vmem:[%s0 + $0x238] sm:$0xff]
    %v107 = vld [vmem:[%s0 + $0x240] sm:$0xff]
    %v108 = vld [vmem:[%s0 + $0x248] sm:$0xff]
    %v109 = vld [vmem:[%s0 + $0x250] sm:$0xff]
    %v110 = vld [vmem:[%s0 + $0x258] sm:$0xff]
    %v111 = vld [vmem:[%s0 + $0x260] sm:$0xff]
    %v112 = vld [vmem:[%s0 + $0x268] sm:$0xff]
    %v113 = vld [vmem:[%s0 + $0x270] sm:$0xff]
    %v114 = vld [vmem:[%s0 + $0x278] sm:$0xff]
    %v115 = vld [vmem:[%s0 + $0x280] sm:$0xff]
    %v116 = vld [vmem:[%s0 + $0x288] sm:$0xff]
    %v117 = vld [vmem:[%s0 + $0x290] sm:$0xff]
    %v118 = vld [vmem:[%s0 + $0x298] sm:$0xff]
    %v119 = vld [vmem:[%s0 + $0x2a0] sm:$0xff]
    %v120 = vld [vmem:[%s0 + $0x2a8] sm:$0xff]
    %v121 = vld [vmem:[%s0 + $0x2b0] sm:$0xff]
    %v122 = vld [vmem:[%s0 + $0x2b8] sm:$0xff]
    %v123 = vld [vmem:[%s0 + $0x2c0] sm:$0xff]
    %v124 = vld [vmem:[%s0 + $0x2c8] sm:$0xff]
    %v125 = vld [vmem:[%s0 + $0x2d0] sm:$0xff]
    %v126 = vld [vmem:[%s0 + $0x2d8] sm:$0xff]
    %v127 = vld [vmem:[%s0 + $0x2e0] sm:$0xff]
    %v128 = vld [vmem:[%s0 + $0x2e8] sm:$0xff]
    %v129 = vld [vmem:[%s0 + $0x2f0] sm:$0xff]
    %v130 = vld [vmem:[%s0 + $0x2f8] sm:$0xff]
    %v131 = vld [vmem:[%s0 + $0x300] sm:$0xff]
    %v132 = vld [vmem:[%s0 + $0x308] sm:$0xff]
    %v133 = vld [vmem:[%s0 + $0x310] sm:$0xff]
    %v134 = vld [vmem:[%s0 + $0x318] sm:$0xff]
    %v135 = vld [vmem:[%s0 + $0x320] sm:$0xff]
    %v136 = vld [vmem:[%s0 + $0x328] sm:$0xff]
    %v137 = vld [vmem:[%s0 + $0x330] sm:$0xff]
    %v138 = vld [vmem:[%s0 + $0x338] sm:$0xff]
    %v139 = vld [vmem:[%s0 + $0x340] sm:$0xff]
    %v140 = vld [vmem:[%s0 + $0x348] sm:$0xff]
    %v141 = vld [vmem:[%s0 + $0x350] sm:$0xff]
    %v142 = vld [vmem:[%s0 + $0x358] sm:$0xff]
    %v143 = vld [vmem:[%s0 + $0x360] sm:$0xff]
    %v144 = vld [vmem:[%s0 + $0x368] sm:$0xff]
    %v145 = vld [vmem:[%s0 + $0x370] sm:$0xff]
    %v146 = vld [vmem:[%s0 + $0x378] sm:$0xff]
    %v147 = vld [vmem:[%s0 + $0x380] sm:$0xff]
    %v148 = vld [vmem:[%s0 + $0x388] sm:$0xff]
    %v149 = vld [vmem:[%s0 + $0x390] sm:$0xff]
    %v150 = vld [vmem:[%s0 + $0x398] sm:$0xff]
    %v151 = vld [vmem:[%s0 + $0x3a0] sm:$0xff]
    %v152 = vld [vmem:[%s0 + $0x3a8] sm:$0xff]
    %v153 = vld [vmem:[%s0 + $0x3b0] sm:$0xff]
    %v154 = vld [vmem:[%s0 + $0x3b8] sm:$0xff]
    %v155 = vld [vmem:[%s0 + $0x3c0] sm:$0xff]
    %v156 = vld [vmem:[%s0 + $0x3c8] sm:$0xff]
    %v157 = vld [vmem:[%s0 + $0x3d0] sm:$0xff]
    %v158 = vld [vmem:[%s0 + $0x3d8] sm:$0xff]
    %v159 = vld [vmem:[%s0 + $0x3e0] sm:$0xff]
    %v160 = vld [vmem:[%s0 + $0x3e8] sm:$0xff]
    %v161 = vld [vmem:[%s0 + $0x3f0] sm:$0xff]
    %v162 = vld [vmem:[%s0 + $0x3f8] sm:$0xff]
    %v163 = vld [vmem:[%s1] sm:$0xff]
    %v164 = vld [vmem:[%s2] sm:$0xff]
    %v165 = vld [vmem:[%s2 + $0x8] sm:$0xff]
    %v166 = vld [vmem:[%s2 + $0x10] sm:$0xff]
    %v167 = vld [vmem:[%s2 + $0x18] sm:$0xff]
    %v168 = vld [vmem:[%s3] sm:$0x1]
    %v170 = vlaneseq
    %v171 = vshrl.u32 %v170, 7
    %v172 = vsub.s32 0, %v171
    %v173 = vrot.slane %v168, %v172
    %vm175 = vcmask 261120
    %v177 = vsel %vm175, %v35, 0
    %v180 = vsel %vm175, %v36, 0
    %v183 = vsel %vm175, %v37, 0
    %v186 = vsel %vm175, %v38, 0
    %v189 = vsel %vm175, %v39, 0
    %v192 = vsel %vm175, %v40, 0
    %v195 = vsel %vm175, %v41, 0
    %v198 = vsel %vm175, %v42, 0
    %v201 = vsel %vm175, %v43, 0
    %v204 = vsel %vm175, %v44, 0
    %v207 = vsel %vm175, %v45, 0
    %v210 = vsel %vm175, %v46, 0
    %v213 = vsel %vm175, %v47, 0
    %v216 = vsel %vm175, %v48, 0
    %v219 = vsel %vm175, %v49, 0
    %v222 = vsel %vm175, %v50, 0
    %v225 = vsel %vm175, %v51, 0
    %v228 = vsel %vm175, %v52, 0
    %v231 = vsel %vm175, %v53, 0
    %v234 = vsel %vm175, %v54, 0
    %v237 = vsel %vm175, %v55, 0
    %v240 = vsel %vm175, %v56, 0
    %v243 = vsel %vm175, %v57, 0
    %v246 = vsel %vm175, %v58, 0
    %v249 = vsel %vm175, %v59, 0
    %v252 = vsel %vm175, %v60, 0
    %v255 = vsel %vm175, %v61, 0
    %v258 = vsel %vm175, %v62, 0
    %v261 = vsel %vm175, %v63, 0
    %v264 = vsel %vm175, %v64, 0
    %v267 = vsel %vm175, %v65, 0
    %v270 = vsel %vm175, %v66, 0
    %v273 = vsel %vm175, %v67, 0
    %v276 = vsel %vm175, %v68, 0
    %v279 = vsel %vm175, %v69, 0
    %v282 = vsel %vm175, %v70, 0
    %v285 = vsel %vm175, %v71, 0
    %v288 = vsel %vm175, %v72, 0
    %v291 = vsel %vm175, %v73, 0
    %v294 = vsel %vm175, %v74, 0
    %v297 = vsel %vm175, %v75, 0
    %v300 = vsel %vm175, %v76, 0
    %v303 = vsel %vm175, %v77, 0
    %v306 = vsel %vm175, %v78, 0
    %v309 = vsel %vm175, %v79, 0
    %v312 = vsel %vm175, %v80, 0
    %v315 = vsel %vm175, %v81, 0
    %v318 = vsel %vm175, %v82, 0
    %v321 = vsel %vm175, %v83, 0
    %v324 = vsel %vm175, %v84, 0
    %v327 = vsel %vm175, %v85, 0
    %v330 = vsel %vm175, %v86, 0
    %v333 = vsel %vm175, %v87, 0
    %v336 = vsel %vm175, %v88, 0
    %v339 = vsel %vm175, %v89, 0
    %v342 = vsel %vm175, %v90, 0
    %v345 = vsel %vm175, %v91, 0
    %v348 = vsel %vm175, %v92, 0
    %v351 = vsel %vm175, %v93, 0
    %v354 = vsel %vm175, %v94, 0
    %v357 = vsel %vm175, %v95, 0
    %v360 = vsel %vm175, %v96, 0
    %v363 = vsel %vm175, %v97, 0
    %v366 = vsel %vm175, %v98, 0
    %v369 = vsel %vm175, %v99, 0
    %v372 = vsel %vm175, %v100, 0
    %v375 = vsel %vm175, %v101, 0
    %v378 = vsel %vm175, %v102, 0
    %v381 = vsel %vm175, %v103, 0
    %v384 = vsel %vm175, %v104, 0
    %v387 = vsel %vm175, %v105, 0
    %v390 = vsel %vm175, %v106, 0
    %v393 = vsel %vm175, %v107, 0
    %v396 = vsel %vm175, %v108, 0
    %v399 = vsel %vm175, %v109, 0
    %v402 = vsel %vm175, %v110, 0
    %v405 = vsel %vm175, %v111, 0
    %v408 = vsel %vm175, %v112, 0
    %v411 = vsel %vm175, %v113, 0
    %v414 = vsel %vm175, %v114, 0
    %v417 = vsel %vm175, %v115, 0
    %v420 = vsel %vm175, %v116, 0
    %v423 = vsel %vm175, %v117, 0
    %v426 = vsel %vm175, %v118, 0
    %v429 = vsel %vm175, %v119, 0
    %v432 = vsel %vm175, %v120, 0
    %v435 = vsel %vm175, %v121, 0
    %v438 = vsel %vm175, %v122, 0
    %v441 = vsel %vm175, %v123, 0
    %v444 = vsel %vm175, %v124, 0
    %v447 = vsel %vm175, %v125, 0
    %v450 = vsel %vm175, %v126, 0
    %v453 = vsel %vm175, %v127, 0
    %v456 = vsel %vm175, %v128, 0
    %v459 = vsel %vm175, %v129, 0
    %v462 = vsel %vm175, %v130, 0
    %v465 = vsel %vm175, %v131, 0
    %v468 = vsel %vm175, %v132, 0
    %v471 = vsel %vm175, %v133, 0
    %v474 = vsel %vm175, %v134, 0
    %v477 = vsel %vm175, %v135, 0
    %v480 = vsel %vm175, %v136, 0
    %v483 = vsel %vm175, %v137, 0
    %v486 = vsel %vm175, %v138, 0
    %v489 = vsel %vm175, %v139, 0
    %v492 = vsel %vm175, %v140, 0
    %v495 = vsel %vm175, %v141, 0
    %v498 = vsel %vm175, %v142, 0
    %v501 = vsel %vm175, %v143, 0
    %v504 = vsel %vm175, %v144, 0
    %v507 = vsel %vm175, %v145, 0
    %v510 = vsel %vm175, %v146, 0
    %v513 = vsel %vm175, %v147, 0
    %v516 = vsel %vm175, %v148, 0
    %v519 = vsel %vm175, %v149, 0
    %v522 = vsel %vm175, %v150, 0
    %v525 = vsel %vm175, %v151, 0
    %v528 = vsel %vm175, %v152, 0
    %v531 = vsel %vm175, %v153, 0
    %v534 = vsel %vm175, %v154, 0
    %v537 = vsel %vm175, %v155, 0
    %v540 = vsel %vm175, %v156, 0
    %v543 = vsel %vm175, %v157, 0
    %v546 = vsel %vm175, %v158, 0
    %v549 = vsel %vm175, %v159, 0
    %v552 = vsel %vm175, %v160, 0
    %v555 = vsel %vm175, %v161, 0
    %v558 = vsel %vm175, %v162, 0
    %560 = vmatprep.subr.mxu0 0.0
    %561 = vmatpush1.msra.mxu0 0.0
    %562 = vmatprep.subr.mxu0 0.0
    %563 = vmatpush1.msra.mxu0 0.0
    %564 = vmatprep.subr.mxu0 0.0
    %565 = vmatpush1.msra.mxu0 0.0
    %566 = vmatprep.subr.mxu0 0.0
    %567 = vmatpush1.msra.mxu0 0.0
    %568 = vmatprep.subr.mxu0 0.0
    %569 = vmatpush1.msra.mxu0 0.0
    %570 = vmatprep.subr.mxu0 0.0
    %571 = vmatpush1.msra.mxu0 0.0
    %572 = vmatprep.subr.mxu0 0.0
    %573 = vmatpush1.msra.mxu0 0.0
    %574 = vmatprep.subr.mxu0 0.0
    %575 = vmatpush1.msra.mxu0 0.0
    %576 = vmatprep.subr.mxu0 0.0
    %577 = vmatpush1.msra.mxu0 0.0
    %578 = vmatprep.subr.mxu0 0.0
    %579 = vmatpush1.msra.mxu0 0.0
    %580 = vmatprep.subr.mxu0 0.0
    %581 = vmatpush1.msra.mxu0 0.0
    %582 = vmatprep.subr.mxu0 0.0
    %583 = vmatpush1.msra.mxu0 0.0
    %584 = vmatprep.subr.mxu0 0.0
    %585 = vmatpush1.msra.mxu0 %v167
    %586 = vmatprep.subr.mxu0 0.0
    %587 = vmatpush1.msra.mxu0 %v166
    %588 = vmatprep.subr.mxu0 0.0
    %589 = vmatpush1.msra.mxu0 %v165
    %590 = vmatprep.subr.mxu0 0.0
    %591 = vmatpush1.msra.mxu0 %v164
    %592 = vmatprep.subr.mxu0 0.0
    %593 = vmatpush2.msra.mxu0 0.0
    %594 = vmatprep.subr.mxu0 0.0
    %595 = vmatpush2.msra.mxu0 0.0
    %596 = vmatprep.subr.mxu0 0.0
    %597 = vmatpush2.msra.mxu0 0.0
    %598 = vmatprep.subr.mxu0 0.0
    %599 = vmatpush2.msra.mxu0 0.0
    %600 = vmatprep.subr.mxu0 0.0
    %601 = vmatpush2.msra.mxu0 0.0
    %602 = vmatprep.subr.mxu0 0.0
    %603 = vmatpush2.msra.mxu0 0.0
    %604 = vmatprep.subr.mxu0 0.0
    %605 = vmatpush2.msra.mxu0 0.0
    %606 = vmatprep.subr.mxu0 0.0
    %607 = vmatpush2.msra.mxu0 0.0
    %608 = vmatprep.subr.mxu0 0.0
    %609 = vmatpush2.msra.mxu0 0.0
    %610 = vmatprep.subr.mxu0 0.0
    %611 = vmatpush2.msra.mxu0 0.0
    %612 = vmatprep.subr.mxu0 0.0
    %613 = vmatpush2.msra.mxu0 0.0
    %614 = vmatprep.subr.mxu0 0.0
    %615 = vmatpush2.msra.mxu0 0.0
    %616 = vmatprep.subr.mxu0 0.0
    %617 = vmatpush2.msra.mxu0 0.0
    %618 = vmatprep.subr.mxu0 0.0
    %619 = vmatpush2.msra.mxu0 0.0
    %620 = vmatprep.subr.mxu0 0.0
    %621 = vmatpush2.msra.mxu0 0.0
    %622 = vmatprep.subr.mxu0 0.0
    %623 = vmatpush2.msra.mxu0 0.0
    %624 = vmatprep.mubr.f32.mxu0 0.0
    %625 = vmatmul.mubr.f32.gmra.mxu0 %v177
    %v626 = vpop.f32.mrf.mxu0
    %v627 = vadd.f32 %v173, %v626
    %v628 = vpop.f32.mrf.mxu0
    %629 = vmatprep.mubr.f32.mxu0 0.0
    %630 = vmatmul.mubr.f32.gmra.mxu0 %v180
    %v631 = vpop.f32.mrf.mxu0
    %v632 = vadd.f32 %v173, %v631
    %v633 = vpop.f32.mrf.mxu0
    %634 = vmatprep.mubr.f32.mxu0 0.0
    %635 = vmatmul.mubr.f32.gmra.mxu0 %v183
    %v636 = vpop.f32.mrf.mxu0
    %v637 = vadd.f32 %v173, %v636
    %v638 = vpop.f32.mrf.mxu0
    %639 = vmatprep.mubr.f32.mxu0 0.0
    %640 = vmatmul.mubr.f32.gmra.mxu0 %v186
    %v641 = vpop.f32.mrf.mxu0
    %v642 = vadd.f32 %v173, %v641
    %v643 = vpop.f32.mrf.mxu0
    %644 = vmatprep.mubr.f32.mxu0 0.0
    %645 = vmatmul.mubr.f32.gmra.mxu0 %v189
    %v646 = vpop.f32.mrf.mxu0
    %v647 = vadd.f32 %v173, %v646
    %v648 = vpop.f32.mrf.mxu0
    %649 = vmatprep.mubr.f32.mxu0 0.0
    %650 = vmatmul.mubr.f32.gmra.mxu0 %v192
    %v651 = vpop.f32.mrf.mxu0
    %v652 = vadd.f32 %v173, %v651
    %v653 = vpop.f32.mrf.mxu0
    %654 = vmatprep.mubr.f32.mxu0 0.0
    %655 = vmatmul.mubr.f32.gmra.mxu0 %v195
    %v656 = vpop.f32.mrf.mxu0
    %v657 = vadd.f32 %v173, %v656
    %v658 = vpop.f32.mrf.mxu0
    %659 = vmatprep.mubr.f32.mxu0 0.0
    %660 = vmatmul.mubr.f32.gmra.mxu0 %v198
    %v661 = vpop.f32.mrf.mxu0
    %v662 = vadd.f32 %v173, %v661
    %v663 = vpop.f32.mrf.mxu0
    %664 = vmatprep.mubr.f32.mxu0 0.0
    %665 = vmatmul.mubr.f32.gmra.mxu0 %v201
    %v666 = vpop.f32.mrf.mxu0
    %v667 = vadd.f32 %v173, %v666
    %v668 = vpop.f32.mrf.mxu0
    %669 = vmatprep.mubr.f32.mxu0 0.0
    %670 = vmatmul.mubr.f32.gmra.mxu0 %v204
    %v671 = vpop.f32.mrf.mxu0
    %v672 = vadd.f32 %v173, %v671
    %v673 = vpop.f32.mrf.mxu0
    %674 = vmatprep.mubr.f32.mxu0 0.0
    %675 = vmatmul.mubr.f32.gmra.mxu0 %v207
    %v676 = vpop.f32.mrf.mxu0
    %v677 = vadd.f32 %v173, %v676
    %v678 = vpop.f32.mrf.mxu0
    %679 = vmatprep.mubr.f32.mxu0 0.0
    %680 = vmatmul.mubr.f32.gmra.mxu0 %v210
    %v681 = vpop.f32.mrf.mxu0
    %v682 = vadd.f32 %v173, %v681
    %v683 = vpop.f32.mrf.mxu0
    %684 = vmatprep.mubr.f32.mxu0 0.0
    %685 = vmatmul.mubr.f32.gmra.mxu0 %v213
    %v686 = vpop.f32.mrf.mxu0
    %v687 = vadd.f32 %v173, %v686
    %v688 = vpop.f32.mrf.mxu0
    %689 = vmatprep.mubr.f32.mxu0 0.0
    %690 = vmatmul.mubr.f32.gmra.mxu0 %v216
    %v691 = vpop.f32.mrf.mxu0
    %v692 = vadd.f32 %v173, %v691
    %v693 = vpop.f32.mrf.mxu0
    %694 = vmatprep.mubr.f32.mxu0 0.0
    %695 = vmatmul.mubr.f32.gmra.mxu0 %v219
    %v696 = vpop.f32.mrf.mxu0
    %v697 = vadd.f32 %v173, %v696
    %v698 = vpop.f32.mrf.mxu0
    %699 = vmatprep.mubr.f32.mxu0 0.0
    %700 = vmatmul.mubr.f32.gmra.mxu0 %v222
    %v701 = vpop.f32.mrf.mxu0
    %v702 = vadd.f32 %v173, %v701
    %v703 = vpop.f32.mrf.mxu0
    %704 = vmatprep.mubr.f32.mxu0 0.0
    %705 = vmatmul.mubr.f32.gmra.mxu0 %v225
    %v706 = vpop.f32.mrf.mxu0
    %v707 = vadd.f32 %v173, %v706
    %v708 = vpop.f32.mrf.mxu0
    %709 = vmatprep.mubr.f32.mxu0 0.0
    %710 = vmatmul.mubr.f32.gmra.mxu0 %v228
    %v711 = vpop.f32.mrf.mxu0
    %v712 = vadd.f32 %v173, %v711
    %v713 = vpop.f32.mrf.mxu0
    %714 = vmatprep.mubr.f32.mxu0 0.0
    %715 = vmatmul.mubr.f32.gmra.mxu0 %v231
    %v716 = vpop.f32.mrf.mxu0
    %v717 = vadd.f32 %v173, %v716
    %v718 = vpop.f32.mrf.mxu0
    %719 = vmatprep.mubr.f32.mxu0 0.0
    %720 = vmatmul.mubr.f32.gmra.mxu0 %v234
    %v721 = vpop.f32.mrf.mxu0
    %v722 = vadd.f32 %v173, %v721
    %v723 = vpop.f32.mrf.mxu0
    %724 = vmatprep.mubr.f32.mxu0 0.0
    %725 = vmatmul.mubr.f32.gmra.mxu0 %v237
    %v726 = vpop.f32.mrf.mxu0
    %v727 = vadd.f32 %v173, %v726
    %v728 = vpop.f32.mrf.mxu0
    %729 = vmatprep.mubr.f32.mxu0 0.0
    %730 = vmatmul.mubr.f32.gmra.mxu0 %v240
    %v731 = vpop.f32.mrf.mxu0
    %v732 = vadd.f32 %v173, %v731
    %v733 = vpop.f32.mrf.mxu0
    %734 = vmatprep.mubr.f32.mxu0 0.0
    %735 = vmatmul.mubr.f32.gmra.mxu0 %v243
    %v736 = vpop.f32.mrf.mxu0
    %v737 = vadd.f32 %v173, %v736
    %v738 = vpop.f32.mrf.mxu0
    %739 = vmatprep.mubr.f32.mxu0 0.0
    %740 = vmatmul.mubr.f32.gmra.mxu0 %v246
    %v741 = vpop.f32.mrf.mxu0
    %v742 = vadd.f32 %v173, %v741
    %v743 = vpop.f32.mrf.mxu0
    %744 = vmatprep.mubr.f32.mxu0 0.0
    %745 = vmatmul.mubr.f32.gmra.mxu0 %v249
    %v746 = vpop.f32.mrf.mxu0
    %v747 = vadd.f32 %v173, %v746
    %v748 = vpop.f32.mrf.mxu0
    %749 = vmatprep.mubr.f32.mxu0 0.0
    %750 = vmatmul.mubr.f32.gmra.mxu0 %v252
    %v751 = vpop.f32.mrf.mxu0
    %v752 = vadd.f32 %v173, %v751
    %v753 = vpop.f32.mrf.mxu0
    %754 = vmatprep.mubr.f32.mxu0 0.0
    %755 = vmatmul.mubr.f32.gmra.mxu0 %v255
    %v756 = vpop.f32.mrf.mxu0
    %v757 = vadd.f32 %v173, %v756
    %v758 = vpop.f32.mrf.mxu0
    %759 = vmatprep.mubr.f32.mxu0 0.0
    %760 = vmatmul.mubr.f32.gmra.mxu0 %v258
    %v761 = vpop.f32.mrf.mxu0
    %v762 = vadd.f32 %v173, %v761
    %v763 = vpop.f32.mrf.mxu0
    %764 = vmatprep.mubr.f32.mxu0 0.0
    %765 = vmatmul.mubr.f32.gmra.mxu0 %v261
    %v766 = vpop.f32.mrf.mxu0
    %v767 = vadd.f32 %v173, %v766
    %v768 = vpop.f32.mrf.mxu0
    %769 = vmatprep.mubr.f32.mxu0 0.0
    %770 = vmatmul.mubr.f32.gmra.mxu0 %v264
    %v771 = vpop.f32.mrf.mxu0
    %v772 = vadd.f32 %v173, %v771
    %v773 = vpop.f32.mrf.mxu0
    %774 = vmatprep.mubr.f32.mxu0 0.0
    %775 = vmatmul.mubr.f32.gmra.mxu0 %v267
    %v776 = vpop.f32.mrf.mxu0
    %v777 = vadd.f32 %v173, %v776
    %v778 = vpop.f32.mrf.mxu0
    %779 = vmatprep.mubr.f32.mxu0 0.0
    %780 = vmatmul.mubr.f32.gmra.mxu0 %v270
    %v781 = vpop.f32.mrf.mxu0
    %v782 = vadd.f32 %v173, %v781
    %v783 = vpop.f32.mrf.mxu0
    %784 = vmatprep.mubr.f32.mxu0 0.0
    %785 = vmatmul.mubr.f32.gmra.mxu0 %v273
    %v786 = vpop.f32.mrf.mxu0
    %v787 = vadd.f32 %v173, %v786
    %v788 = vpop.f32.mrf.mxu0
    %789 = vmatprep.mubr.f32.mxu0 0.0
    %790 = vmatmul.mubr.f32.gmra.mxu0 %v276
    %v791 = vpop.f32.mrf.mxu0
    %v792 = vadd.f32 %v173, %v791
    %v793 = vpop.f32.mrf.mxu0
    %794 = vmatprep.mubr.f32.mxu0 0.0
    %795 = vmatmul.mubr.f32.gmra.mxu0 %v279
    %v796 = vpop.f32.mrf.mxu0
    %v797 = vadd.f32 %v173, %v796
    %v798 = vpop.f32.mrf.mxu0
    %799 = vmatprep.mubr.f32.mxu0 0.0
    %800 = vmatmul.mubr.f32.gmra.mxu0 %v282
    %v801 = vpop.f32.mrf.mxu0
    %v802 = vadd.f32 %v173, %v801
    %v803 = vpop.f32.mrf.mxu0
    %804 = vmatprep.mubr.f32.mxu0 0.0
    %805 = vmatmul.mubr.f32.gmra.mxu0 %v285
    %v806 = vpop.f32.mrf.mxu0
    %v807 = vadd.f32 %v173, %v806
    %v808 = vpop.f32.mrf.mxu0
    %809 = vmatprep.mubr.f32.mxu0 0.0
    %810 = vmatmul.mubr.f32.gmra.mxu0 %v288
    %v811 = vpop.f32.mrf.mxu0
    %v812 = vadd.f32 %v173, %v811
    %v813 = vpop.f32.mrf.mxu0
    %814 = vmatprep.mubr.f32.mxu0 0.0
    %815 = vmatmul.mubr.f32.gmra.mxu0 %v291
    %v816 = vpop.f32.mrf.mxu0
    %v817 = vadd.f32 %v173, %v816
    %v818 = vpop.f32.mrf.mxu0
    %819 = vmatprep.mubr.f32.mxu0 0.0
    %820 = vmatmul.mubr.f32.gmra.mxu0 %v294
    %v821 = vpop.f32.mrf.mxu0
    %v822 = vadd.f32 %v173, %v821
    %v823 = vpop.f32.mrf.mxu0
    %824 = vmatprep.mubr.f32.mxu0 0.0
    %825 = vmatmul.mubr.f32.gmra.mxu0 %v297
    %v826 = vpop.f32.mrf.mxu0
    %v827 = vadd.f32 %v173, %v826
    %v828 = vpop.f32.mrf.mxu0
    %829 = vmatprep.mubr.f32.mxu0 0.0
    %830 = vmatmul.mubr.f32.gmra.mxu0 %v300
    %v831 = vpop.f32.mrf.mxu0
    %v832 = vadd.f32 %v173, %v831
    %v833 = vpop.f32.mrf.mxu0
    %834 = vmatprep.mubr.f32.mxu0 0.0
    %835 = vmatmul.mubr.f32.gmra.mxu0 %v303
    %v836 = vpop.f32.mrf.mxu0
    %v837 = vadd.f32 %v173, %v836
    %v838 = vpop.f32.mrf.mxu0
    %839 = vmatprep.mubr.f32.mxu0 0.0
    %840 = vmatmul.mubr.f32.gmra.mxu0 %v306
    %v841 = vpop.f32.mrf.mxu0
    %v842 = vadd.f32 %v173, %v841
    %v843 = vpop.f32.mrf.mxu0
    %844 = vmatprep.mubr.f32.mxu0 0.0
    %845 = vmatmul.mubr.f32.gmra.mxu0 %v309
    %v846 = vpop.f32.mrf.mxu0
    %v847 = vadd.f32 %v173, %v846
    %v848 = vpop.f32.mrf.mxu0
    %849 = vmatprep.mubr.f32.mxu0 0.0
    %850 = vmatmul.mubr.f32.gmra.mxu0 %v312
    %v851 = vpop.f32.mrf.mxu0
    %v852 = vadd.f32 %v173, %v851
    %v853 = vpop.f32.mrf.mxu0
    %854 = vmatprep.mubr.f32.mxu0 0.0
    %855 = vmatmul.mubr.f32.gmra.mxu0 %v315
    %v856 = vpop.f32.mrf.mxu0
    %v857 = vadd.f32 %v173, %v856
    %v858 = vpop.f32.mrf.mxu0
    %859 = vmatprep.mubr.f32.mxu0 0.0
    %860 = vmatmul.mubr.f32.gmra.mxu0 %v318
    %v861 = vpop.f32.mrf.mxu0
    %v862 = vadd.f32 %v173, %v861
    %v863 = vpop.f32.mrf.mxu0
    %864 = vmatprep.mubr.f32.mxu0 0.0
    %865 = vmatmul.mubr.f32.gmra.mxu0 %v321
    %v866 = vpop.f32.mrf.mxu0
    %v867 = vadd.f32 %v173, %v866
    %v868 = vpop.f32.mrf.mxu0
    %869 = vmatprep.mubr.f32.mxu0 0.0
    %870 = vmatmul.mubr.f32.gmra.mxu0 %v324
    %v871 = vpop.f32.mrf.mxu0
    %v872 = vadd.f32 %v173, %v871
    %v873 = vpop.f32.mrf.mxu0
    %874 = vmatprep.mubr.f32.mxu0 0.0
    %875 = vmatmul.mubr.f32.gmra.mxu0 %v327
    %v876 = vpop.f32.mrf.mxu0
    %v877 = vadd.f32 %v173, %v876
    %v878 = vpop.f32.mrf.mxu0
    %879 = vmatprep.mubr.f32.mxu0 0.0
    %880 = vmatmul.mubr.f32.gmra.mxu0 %v330
    %v881 = vpop.f32.mrf.mxu0
    %v882 = vadd.f32 %v173, %v881
    %v883 = vpop.f32.mrf.mxu0
    %884 = vmatprep.mubr.f32.mxu0 0.0
    %885 = vmatmul.mubr.f32.gmra.mxu0 %v333
    %v886 = vpop.f32.mrf.mxu0
    %v887 = vadd.f32 %v173, %v886
    %v888 = vpop.f32.mrf.mxu0
    %889 = vmatprep.mubr.f32.mxu0 0.0
    %890 = vmatmul.mubr.f32.gmra.mxu0 %v336
    %v891 = vpop.f32.mrf.mxu0
    %v892 = vadd.f32 %v173, %v891
    %v893 = vpop.f32.mrf.mxu0
    %894 = vmatprep.mubr.f32.mxu0 0.0
    %895 = vmatmul.mubr.f32.gmra.mxu0 %v339
    %v896 = vpop.f32.mrf.mxu0
    %v897 = vadd.f32 %v173, %v896
    %v898 = vpop.f32.mrf.mxu0
    %899 = vmatprep.mubr.f32.mxu0 0.0
    %900 = vmatmul.mubr.f32.gmra.mxu0 %v342
    %v901 = vpop.f32.mrf.mxu0
    %v902 = vadd.f32 %v173, %v901
    %v903 = vpop.f32.mrf.mxu0
    %904 = vmatprep.mubr.f32.mxu0 0.0
    %905 = vmatmul.mubr.f32.gmra.mxu0 %v345
    %v906 = vpop.f32.mrf.mxu0
    %v907 = vadd.f32 %v173, %v906
    %v908 = vpop.f32.mrf.mxu0
    %909 = vmatprep.mubr.f32.mxu0 0.0
    %910 = vmatmul.mubr.f32.gmra.mxu0 %v348
    %v911 = vpop.f32.mrf.mxu0
    %v912 = vadd.f32 %v173, %v911
    %v913 = vpop.f32.mrf.mxu0
    %914 = vmatprep.mubr.f32.mxu0 0.0
    %915 = vmatmul.mubr.f32.gmra.mxu0 %v351
    %v916 = vpop.f32.mrf.mxu0
    %v917 = vadd.f32 %v173, %v916
    %v918 = vpop.f32.mrf.mxu0
    %919 = vmatprep.mubr.f32.mxu0 0.0
    %920 = vmatmul.mubr.f32.gmra.mxu0 %v354
    %v921 = vpop.f32.mrf.mxu0
    %v922 = vadd.f32 %v173, %v921
    %v923 = vpop.f32.mrf.mxu0
    %924 = vmatprep.mubr.f32.mxu0 0.0
    %925 = vmatmul.mubr.f32.gmra.mxu0 %v357
    %v926 = vpop.f32.mrf.mxu0
    %v927 = vadd.f32 %v173, %v926
    %v928 = vpop.f32.mrf.mxu0
    %929 = vmatprep.mubr.f32.mxu0 0.0
    %930 = vmatmul.mubr.f32.gmra.mxu0 %v360
    %v931 = vpop.f32.mrf.mxu0
    %v932 = vadd.f32 %v173, %v931
    %v933 = vpop.f32.mrf.mxu0
    %934 = vmatprep.mubr.f32.mxu0 0.0
    %935 = vmatmul.mubr.f32.gmra.mxu0 %v363
    %v936 = vpop.f32.mrf.mxu0
    %v937 = vadd.f32 %v173, %v936
    %v938 = vpop.f32.mrf.mxu0
    %939 = vmatprep.mubr.f32.mxu0 0.0
    %940 = vmatmul.mubr.f32.gmra.mxu0 %v366
    %v941 = vpop.f32.mrf.mxu0
    %v942 = vadd.f32 %v173, %v941
    %v943 = vpop.f32.mrf.mxu0
    %944 = vmatprep.mubr.f32.mxu0 0.0
    %945 = vmatmul.mubr.f32.gmra.mxu0 %v369
    %v946 = vpop.f32.mrf.mxu0
    %v947 = vadd.f32 %v173, %v946
    %v948 = vpop.f32.mrf.mxu0
    %949 = vmatprep.mubr.f32.mxu0 0.0
    %950 = vmatmul.mubr.f32.gmra.mxu0 %v372
    %v951 = vpop.f32.mrf.mxu0
    %v952 = vadd.f32 %v173, %v951
    %v953 = vpop.f32.mrf.mxu0
    %954 = vmatprep.mubr.f32.mxu0 0.0
    %955 = vmatmul.mubr.f32.gmra.mxu0 %v375
    %v956 = vpop.f32.mrf.mxu0
    %v957 = vadd.f32 %v173, %v956
    %v958 = vpop.f32.mrf.mxu0
    %959 = vmatprep.mubr.f32.mxu0 0.0
    %960 = vmatmul.mubr.f32.gmra.mxu0 %v378
    %v961 = vpop.f32.mrf.mxu0
    %v962 = vadd.f32 %v173, %v961
    %v963 = vpop.f32.mrf.mxu0
    %964 = vmatprep.mubr.f32.mxu0 0.0
    %965 = vmatmul.mubr.f32.gmra.mxu0 %v381
    %v966 = vpop.f32.mrf.mxu0
    %v967 = vadd.f32 %v173, %v966
    %v968 = vpop.f32.mrf.mxu0
    %969 = vmatprep.mubr.f32.mxu0 0.0
    %970 = vmatmul.mubr.f32.gmra.mxu0 %v384
    %v971 = vpop.f32.mrf.mxu0
    %v972 = vadd.f32 %v173, %v971
    %v973 = vpop.f32.mrf.mxu0
    %974 = vmatprep.mubr.f32.mxu0 0.0
    %975 = vmatmul.mubr.f32.gmra.mxu0 %v387
    %v976 = vpop.f32.mrf.mxu0
    %v977 = vadd.f32 %v173, %v976
    %v978 = vpop.f32.mrf.mxu0
    %979 = vmatprep.mubr.f32.mxu0 0.0
    %980 = vmatmul.mubr.f32.gmra.mxu0 %v390
    %v981 = vpop.f32.mrf.mxu0
    %v982 = vadd.f32 %v173, %v981
    %v983 = vpop.f32.mrf.mxu0
    %984 = vmatprep.mubr.f32.mxu0 0.0
    %985 = vmatmul.mubr.f32.gmra.mxu0 %v393
    %v986 = vpop.f32.mrf.mxu0
    %v987 = vadd.f32 %v173, %v986
    %v988 = vpop.f32.mrf.mxu0
    %989 = vmatprep.mubr.f32.mxu0 0.0
    %990 = vmatmul.mubr.f32.gmra.mxu0 %v396
    %v991 = vpop.f32.mrf.mxu0
    %v992 = vadd.f32 %v173, %v991
    %v993 = vpop.f32.mrf.mxu0
    %994 = vmatprep.mubr.f32.mxu0 0.0
    %995 = vmatmul.mubr.f32.gmra.mxu0 %v399
    %v996 = vpop.f32.mrf.mxu0
    %v997 = vadd.f32 %v173, %v996
    %v998 = vpop.f32.mrf.mxu0
    %999 = vmatprep.mubr.f32.mxu0 0.0
    %1000 = vmatmul.mubr.f32.gmra.mxu0 %v402
    %v1001 = vpop.f32.mrf.mxu0
    %v1002 = vadd.f32 %v173, %v1001
    %v1003 = vpop.f32.mrf.mxu0
    %1004 = vmatprep.mubr.f32.mxu0 0.0
    %1005 = vmatmul.mubr.f32.gmra.mxu0 %v405
    %v1006 = vpop.f32.mrf.mxu0
    %v1007 = vadd.f32 %v173, %v1006
    %v1008 = vpop.f32.mrf.mxu0
    %1009 = vmatprep.mubr.f32.mxu0 0.0
    %1010 = vmatmul.mubr.f32.gmra.mxu0 %v408
    %v1011 = vpop.f32.mrf.mxu0
    %v1012 = vadd.f32 %v173, %v1011
    %v1013 = vpop.f32.mrf.mxu0
    %1014 = vmatprep.mubr.f32.mxu0 0.0
    %1015 = vmatmul.mubr.f32.gmra.mxu0 %v411
    %v1016 = vpop.f32.mrf.mxu0
    %v1017 = vadd.f32 %v173, %v1016
    %v1018 = vpop.f32.mrf.mxu0
    %1019 = vmatprep.mubr.f32.mxu0 0.0
    %1020 = vmatmul.mubr.f32.gmra.mxu0 %v414
    %v1021 = vpop.f32.mrf.mxu0
    %v1022 = vadd.f32 %v173, %v1021
    %v1023 = vpop.f32.mrf.mxu0
    %1024 = vmatprep.mubr.f32.mxu0 0.0
    %1025 = vmatmul.mubr.f32.gmra.mxu0 %v417
    %v1026 = vpop.f32.mrf.mxu0
    %v1027 = vadd.f32 %v173, %v1026
    %v1028 = vpop.f32.mrf.mxu0
    %1029 = vmatprep.mubr.f32.mxu0 0.0
    %1030 = vmatmul.mubr.f32.gmra.mxu0 %v420
    %v1031 = vpop.f32.mrf.mxu0
    %v1032 = vadd.f32 %v173, %v1031
    %v1033 = vpop.f32.mrf.mxu0
    %1034 = vmatprep.mubr.f32.mxu0 0.0
    %1035 = vmatmul.mubr.f32.gmra.mxu0 %v423
    %v1036 = vpop.f32.mrf.mxu0
    %v1037 = vadd.f32 %v173, %v1036
    %v1038 = vpop.f32.mrf.mxu0
    %1039 = vmatprep.mubr.f32.mxu0 0.0
    %1040 = vmatmul.mubr.f32.gmra.mxu0 %v426
    %v1041 = vpop.f32.mrf.mxu0
    %v1042 = vadd.f32 %v173, %v1041
    %v1043 = vpop.f32.mrf.mxu0
    %1044 = vmatprep.mubr.f32.mxu0 0.0
    %1045 = vmatmul.mubr.f32.gmra.mxu0 %v429
    %v1046 = vpop.f32.mrf.mxu0
    %v1047 = vadd.f32 %v173, %v1046
    %v1048 = vpop.f32.mrf.mxu0
    %1049 = vmatprep.mubr.f32.mxu0 0.0
    %1050 = vmatmul.mubr.f32.gmra.mxu0 %v432
    %v1051 = vpop.f32.mrf.mxu0
    %v1052 = vadd.f32 %v173, %v1051
    %v1053 = vpop.f32.mrf.mxu0
    %1054 = vmatprep.mubr.f32.mxu0 0.0
    %1055 = vmatmul.mubr.f32.gmra.mxu0 %v435
    %v1056 = vpop.f32.mrf.mxu0
    %v1057 = vadd.f32 %v173, %v1056
    %v1058 = vpop.f32.mrf.mxu0
    %1059 = vmatprep.mubr.f32.mxu0 0.0
    %1060 = vmatmul.mubr.f32.gmra.mxu0 %v438
    %v1061 = vpop.f32.mrf.mxu0
    %v1062 = vadd.f32 %v173, %v1061
    %v1063 = vpop.f32.mrf.mxu0
    %1064 = vmatprep.mubr.f32.mxu0 0.0
    %1065 = vmatmul.mubr.f32.gmra.mxu0 %v441
    %v1066 = vpop.f32.mrf.mxu0
    %v1067 = vadd.f32 %v173, %v1066
    %v1068 = vpop.f32.mrf.mxu0
    %1069 = vmatprep.mubr.f32.mxu0 0.0
    %1070 = vmatmul.mubr.f32.gmra.mxu0 %v444
    %v1071 = vpop.f32.mrf.mxu0
    %v1072 = vadd.f32 %v173, %v1071
    %v1073 = vpop.f32.mrf.mxu0
    %1074 = vmatprep.mubr.f32.mxu0 0.0
    %1075 = vmatmul.mubr.f32.gmra.mxu0 %v447
    %v1076 = vpop.f32.mrf.mxu0
    %v1077 = vadd.f32 %v173, %v1076
    %v1078 = vpop.f32.mrf.mxu0
    %1079 = vmatprep.mubr.f32.mxu0 0.0
    %1080 = vmatmul.mubr.f32.gmra.mxu0 %v450
    %v1081 = vpop.f32.mrf.mxu0
    %v1082 = vadd.f32 %v173, %v1081
    %v1083 = vpop.f32.mrf.mxu0
    %1084 = vmatprep.mubr.f32.mxu0 0.0
    %1085 = vmatmul.mubr.f32.gmra.mxu0 %v453
    %v1086 = vpop.f32.mrf.mxu0
    %v1087 = vadd.f32 %v173, %v1086
    %v1088 = vpop.f32.mrf.mxu0
    %1089 = vmatprep.mubr.f32.mxu0 0.0
    %1090 = vmatmul.mubr.f32.gmra.mxu0 %v456
    %v1091 = vpop.f32.mrf.mxu0
    %v1092 = vadd.f32 %v173, %v1091
    %v1093 = vpop.f32.mrf.mxu0
    %1094 = vmatprep.mubr.f32.mxu0 0.0
    %1095 = vmatmul.mubr.f32.gmra.mxu0 %v459
    %v1096 = vpop.f32.mrf.mxu0
    %v1097 = vadd.f32 %v173, %v1096
    %v1098 = vpop.f32.mrf.mxu0
    %1099 = vmatprep.mubr.f32.mxu0 0.0
    %1100 = vmatmul.mubr.f32.gmra.mxu0 %v462
    %v1101 = vpop.f32.mrf.mxu0
    %v1102 = vadd.f32 %v173, %v1101
    %v1103 = vpop.f32.mrf.mxu0
    %1104 = vmatprep.mubr.f32.mxu0 0.0
    %1105 = vmatmul.mubr.f32.gmra.mxu0 %v465
    %v1106 = vpop.f32.mrf.mxu0
    %v1107 = vadd.f32 %v173, %v1106
    %v1108 = vpop.f32.mrf.mxu0
    %1109 = vmatprep.mubr.f32.mxu0 0.0
    %1110 = vmatmul.mubr.f32.gmra.mxu0 %v468
    %v1111 = vpop.f32.mrf.mxu0
    %v1112 = vadd.f32 %v173, %v1111
    %v1113 = vpop.f32.mrf.mxu0
    %1114 = vmatprep.mubr.f32.mxu0 0.0
    %1115 = vmatmul.mubr.f32.gmra.mxu0 %v471
    %v1116 = vpop.f32.mrf.mxu0
    %v1117 = vadd.f32 %v173, %v1116
    %v1118 = vpop.f32.mrf.mxu0
    %1119 = vmatprep.mubr.f32.mxu0 0.0
    %1120 = vmatmul.mubr.f32.gmra.mxu0 %v474
    %v1121 = vpop.f32.mrf.mxu0
    %v1122 = vadd.f32 %v173, %v1121
    %v1123 = vpop.f32.mrf.mxu0
    %1124 = vmatprep.mubr.f32.mxu0 0.0
    %1125 = vmatmul.mubr.f32.gmra.mxu0 %v477
    %v1126 = vpop.f32.mrf.mxu0
    %v1127 = vadd.f32 %v173, %v1126
    %v1128 = vpop.f32.mrf.mxu0
    %1129 = vmatprep.mubr.f32.mxu0 0.0
    %1130 = vmatmul.mubr.f32.gmra.mxu0 %v480
    %v1131 = vpop.f32.mrf.mxu0
    %v1132 = vadd.f32 %v173, %v1131
    %v1133 = vpop.f32.mrf.mxu0
    %1134 = vmatprep.mubr.f32.mxu0 0.0
    %1135 = vmatmul.mubr.f32.gmra.mxu0 %v483
    %v1136 = vpop.f32.mrf.mxu0
    %v1137 = vadd.f32 %v173, %v1136
    %v1138 = vpop.f32.mrf.mxu0
    %1139 = vmatprep.mubr.f32.mxu0 0.0
    %1140 = vmatmul.mubr.f32.gmra.mxu0 %v486
    %v1141 = vpop.f32.mrf.mxu0
    %v1142 = vadd.f32 %v173, %v1141
    %v1143 = vpop.f32.mrf.mxu0
    %1144 = vmatprep.mubr.f32.mxu0 0.0
    %1145 = vmatmul.mubr.f32.gmra.mxu0 %v489
    %v1146 = vpop.f32.mrf.mxu0
    %v1147 = vadd.f32 %v173, %v1146
    %v1148 = vpop.f32.mrf.mxu0
    %1149 = vmatprep.mubr.f32.mxu0 0.0
    %1150 = vmatmul.mubr.f32.gmra.mxu0 %v492
    %v1151 = vpop.f32.mrf.mxu0
    %v1152 = vadd.f32 %v173, %v1151
    %v1153 = vpop.f32.mrf.mxu0
    %1154 = vmatprep.mubr.f32.mxu0 0.0
    %1155 = vmatmul.mubr.f32.gmra.mxu0 %v495
    %v1156 = vpop.f32.mrf.mxu0
    %v1157 = vadd.f32 %v173, %v1156
    %v1158 = vpop.f32.mrf.mxu0
    %1159 = vmatprep.mubr.f32.mxu0 0.0
    %1160 = vmatmul.mubr.f32.gmra.mxu0 %v498
    %v1161 = vpop.f32.mrf.mxu0
    %v1162 = vadd.f32 %v173, %v1161
    %v1163 = vpop.f32.mrf.mxu0
    %1164 = vmatprep.mubr.f32.mxu0 0.0
    %1165 = vmatmul.mubr.f32.gmra.mxu0 %v501
    %v1166 = vpop.f32.mrf.mxu0
    %v1167 = vadd.f32 %v173, %v1166
    %v1168 = vpop.f32.mrf.mxu0
    %1169 = vmatprep.mubr.f32.mxu0 0.0
    %1170 = vmatmul.mubr.f32.gmra.mxu0 %v504
    %v1171 = vpop.f32.mrf.mxu0
    %v1172 = vadd.f32 %v173, %v1171
    %v1173 = vpop.f32.mrf.mxu0
    %1174 = vmatprep.mubr.f32.mxu0 0.0
    %1175 = vmatmul.mubr.f32.gmra.mxu0 %v507
    %v1176 = vpop.f32.mrf.mxu0
    %v1177 = vadd.f32 %v173, %v1176
    %v1178 = vpop.f32.mrf.mxu0
    %1179 = vmatprep.mubr.f32.mxu0 0.0
    %1180 = vmatmul.mubr.f32.gmra.mxu0 %v510
    %v1181 = vpop.f32.mrf.mxu0
    %v1182 = vadd.f32 %v173, %v1181
    %v1183 = vpop.f32.mrf.mxu0
    %1184 = vmatprep.mubr.f32.mxu0 0.0
    %1185 = vmatmul.mubr.f32.gmra.mxu0 %v513
    %v1186 = vpop.f32.mrf.mxu0
    %v1187 = vadd.f32 %v173, %v1186
    %v1188 = vpop.f32.mrf.mxu0
    %1189 = vmatprep.mubr.f32.mxu0 0.0
    %1190 = vmatmul.mubr.f32.gmra.mxu0 %v516
    %v1191 = vpop.f32.mrf.mxu0
    %v1192 = vadd.f32 %v173, %v1191
    %v1193 = vpop.f32.mrf.mxu0
    %1194 = vmatprep.mubr.f32.mxu0 0.0
    %1195 = vmatmul.mubr.f32.gmra.mxu0 %v519
    %v1196 = vpop.f32.mrf.mxu0
    %v1197 = vadd.f32 %v173, %v1196
    %v1198 = vpop.f32.mrf.mxu0
    %1199 = vmatprep.mubr.f32.mxu0 0.0
    %1200 = vmatmul.mubr.f32.gmra.mxu0 %v522
    %v1201 = vpop.f32.mrf.mxu0
    %v1202 = vadd.f32 %v173, %v1201
    %v1203 = vpop.f32.mrf.mxu0
    %1204 = vmatprep.mubr.f32.mxu0 0.0
    %1205 = vmatmul.mubr.f32.gmra.mxu0 %v525
    %v1206 = vpop.f32.mrf.mxu0
    %v1207 = vadd.f32 %v173, %v1206
    %v1208 = vpop.f32.mrf.mxu0
    %1209 = vmatprep.mubr.f32.mxu0 0.0
    %1210 = vmatmul.mubr.f32.gmra.mxu0 %v528
    %v1211 = vpop.f32.mrf.mxu0
    %v1212 = vadd.f32 %v173, %v1211
    %v1213 = vpop.f32.mrf.mxu0
    %1214 = vmatprep.mubr.f32.mxu0 0.0
    %1215 = vmatmul.mubr.f32.gmra.mxu0 %v531
    %v1216 = vpop.f32.mrf.mxu0
    %v1217 = vadd.f32 %v173, %v1216
    %v1218 = vpop.f32.mrf.mxu0
    %1219 = vmatprep.mubr.f32.mxu0 0.0
    %1220 = vmatmul.mubr.f32.gmra.mxu0 %v534
    %v1221 = vpop.f32.mrf.mxu0
    %v1222 = vadd.f32 %v173, %v1221
    %v1223 = vpop.f32.mrf.mxu0
    %1224 = vmatprep.mubr.f32.mxu0 0.0
    %1225 = vmatmul.mubr.f32.gmra.mxu0 %v537
    %v1226 = vpop.f32.mrf.mxu0
    %v1227 = vadd.f32 %v173, %v1226
    %v1228 = vpop.f32.mrf.mxu0
    %1229 = vmatprep.mubr.f32.mxu0 0.0
    %1230 = vmatmul.mubr.f32.gmra.mxu0 %v540
    %v1231 = vpop.f32.mrf.mxu0
    %v1232 = vadd.f32 %v173, %v1231
    %v1233 = vpop.f32.mrf.mxu0
    %1234 = vmatprep.mubr.f32.mxu0 0.0
    %1235 = vmatmul.mubr.f32.gmra.mxu0 %v543
    %v1236 = vpop.f32.mrf.mxu0
    %v1237 = vadd.f32 %v173, %v1236
    %v1238 = vpop.f32.mrf.mxu0
    %1239 = vmatprep.mubr.f32.mxu0 0.0
    %1240 = vmatmul.mubr.f32.gmra.mxu0 %v546
    %v1241 = vpop.f32.mrf.mxu0
    %v1242 = vadd.f32 %v173, %v1241
    %v1243 = vpop.f32.mrf.mxu0
    %1244 = vmatprep.mubr.f32.mxu0 0.0
    %1245 = vmatmul.mubr.f32.gmra.mxu0 %v549
    %v1246 = vpop.f32.mrf.mxu0
    %v1247 = vadd.f32 %v173, %v1246
    %v1248 = vpop.f32.mrf.mxu0
    %1249 = vmatprep.mubr.f32.mxu0 0.0
    %1250 = vmatmul.mubr.f32.gmra.mxu0 %v552
    %v1251 = vpop.f32.mrf.mxu0
    %v1252 = vadd.f32 %v173, %v1251
    %v1253 = vpop.f32.mrf.mxu0
    %1254 = vmatprep.mubr.f32.mxu0 0.0
    %1255 = vmatmul.mubr.f32.gmra.mxu0 %v555
    %v1256 = vpop.f32.mrf.mxu0
    %v1257 = vadd.f32 %v173, %v1256
    %v1258 = vpop.f32.mrf.mxu0
    %1259 = vmatprep.mubr.f32.mxu0 0.0
    %1260 = vmatmul.mubr.f32.gmra.mxu0 %v558
    %v1261 = vpop.f32.mrf.mxu0
    %v1262 = vadd.f32 %v173, %v1261
    %v1263 = vpop.f32.mrf.mxu0
    %1264 = vdwg.mxu0
    %v1265 = vld [vmem:[%s4] sm:$0xff]
    %v1266 = vld [vmem:[%s4 + $0x8] sm:$0xff]
    %v1267 = vld [vmem:[%s4 + $0x10] sm:$0xff]
    %v1268 = vld [vmem:[%s4 + $0x18] sm:$0xff]
    %v1269 = vld [vmem:[%s5] sm:$0x1]
    %v1271 = vlaneseq
    %v1272 = vshrl.u32 %v1271, 7
    %v1273 = vsub.s32 0, %v1272
    %v1274 = vrot.slane %v1269, %v1273
    %v1277 = vsel %vm175, %v163, 0
    %1279 = vmatprep.subr.mxu0 0.0
    %1280 = vmatpush1.msra.mxu0 0.0
    %1281 = vmatprep.subr.mxu0 0.0
    %1282 = vmatpush1.msra.mxu0 0.0
    %1283 = vmatprep.subr.mxu0 0.0
    %1284 = vmatpush1.msra.mxu0 0.0
    %1285 = vmatprep.subr.mxu0 0.0
    %1286 = vmatpush1.msra.mxu0 0.0
    %1287 = vmatprep.subr.mxu0 0.0
    %1288 = vmatpush1.msra.mxu0 0.0
    %1289 = vmatprep.subr.mxu0 0.0
    %1290 = vmatpush1.msra.mxu0 0.0
    %1291 = vmatprep.subr.mxu0 0.0
    %1292 = vmatpush1.msra.mxu0 0.0
    %1293 = vmatprep.subr.mxu0 0.0
    %1294 = vmatpush1.msra.mxu0 0.0
    %1295 = vmatprep.subr.mxu0 0.0
    %1296 = vmatpush1.msra.mxu0 0.0
    %1297 = vmatprep.subr.mxu0 0.0
    %1298 = vmatpush1.msra.mxu0 0.0
    %1299 = vmatprep.subr.mxu0 0.0
    %1300 = vmatpush1.msra.mxu0 0.0
    %1301 = vmatprep.subr.mxu0 0.0
    %1302 = vmatpush1.msra.mxu0 0.0
    %1303 = vmatprep.subr.mxu0 0.0
    %1304 = vmatpush1.msra.mxu0 %v1268
    %1305 = vmatprep.subr.mxu0 0.0
    %1306 = vmatpush1.msra.mxu0 %v1267
    %1307 = vmatprep.subr.mxu0 0.0
    %1308 = vmatpush1.msra.mxu0 %v1266
    %1309 = vmatprep.subr.mxu0 0.0
    %1310 = vmatpush1.msra.mxu0 %v1265
    %1311 = vmatprep.subr.mxu0 0.0
    %1312 = vmatpush2.msra.mxu0 0.0
    %1313 = vmatprep.subr.mxu0 0.0
    %1314 = vmatpush2.msra.mxu0 0.0
    %1315 = vmatprep.subr.mxu0 0.0
    %1316 = vmatpush2.msra.mxu0 0.0
    %1317 = vmatprep.subr.mxu0 0.0
    %1318 = vmatpush2.msra.mxu0 0.0
    %1319 = vmatprep.subr.mxu0 0.0
    %1320 = vmatpush2.msra.mxu0 0.0
    %1321 = vmatprep.subr.mxu0 0.0
    %1322 = vmatpush2.msra.mxu0 0.0
    %1323 = vmatprep.subr.mxu0 0.0
    %1324 = vmatpush2.msra.mxu0 0.0
    %1325 = vmatprep.subr.mxu0 0.0
    %1326 = vmatpush2.msra.mxu0 0.0
    %1327 = vmatprep.subr.mxu0 0.0
    %1328 = vmatpush2.msra.mxu0 0.0
    %1329 = vmatprep.subr.mxu0 0.0
    %1330 = vmatpush2.msra.mxu0 0.0
    %1331 = vmatprep.subr.mxu0 0.0
    %1332 = vmatpush2.msra.mxu0 0.0
    %1333 = vmatprep.subr.mxu0 0.0
    %1334 = vmatpush2.msra.mxu0 0.0
    %1335 = vmatprep.subr.mxu0 0.0
    %1336 = vmatpush2.msra.mxu0 0.0
    %1337 = vmatprep.subr.mxu0 0.0
    %1338 = vmatpush2.msra.mxu0 0.0
    %1339 = vmatprep.subr.mxu0 0.0
    %1340 = vmatpush2.msra.mxu0 0.0
    %1341 = vmatprep.subr.mxu0 0.0
    %1342 = vmatpush2.msra.mxu0 0.0
    %1343 = vmatprep.mubr.f32.mxu0 0.0
    %1344 = vmatmul.mubr.f32.gmra.mxu0 %v1277
    %v1345 = vpop.f32.mrf.mxu0
    %v1346 = vadd.f32 %v1274, %v1345
    %v1347 = vpop.f32.mrf.mxu0
    %1348 = vdwg.mxu0
    %v1350 = vcombine.high %v1346, %v1346
    %v1352 = vunpack.c.l.s4 1966171168
    %v1353 = vunpack.c.0.s8 %v1352
    %v1354 = vlaneseq
    %v1355 = vshrl.u32 %v1354, 7
    %v1356 = vsub.s32 %v1353, %v1355
    %v1357 = vrot.slane %v1346, %v1356
    %v1359 = vunpack.c.l.s4 1966171168
    %v1360 = vunpack.c.0.s8 %v1359
    %v1361 = vlaneseq
    %v1362 = vshrl.u32 %v1361, 7
    %v1363 = vsub.s32 %v1360, %v1362
    %v1364 = vrot.slane %v1350, %v1363
    %v1365 = vcombine.high %v1357, %v1357
    %v1366 = vcombine.high %v1364, %v1364
    %v1368 = vunpack.c.l.s4 1966171168
    %v1369 = vunpack.c.0.s8 %v1368
    %v1370 = vlaneseq
    %v1371 = vshrl.u32 %v1370, 7
    %v1372 = vsub.s32 %v1369, %v1371
    %v1373 = vrot.slane %v1357, %v1372
    %v1375 = vunpack.c.l.s4 1966171168
    %v1376 = vunpack.c.0.s8 %v1375
    %v1377 = vlaneseq
    %v1378 = vshrl.u32 %v1377, 7
    %v1379 = vsub.s32 %v1376, %v1378
    %v1380 = vrot.slane %v1364, %v1379
    %v1382 = vunpack.c.l.s4 1966171168
    %v1383 = vunpack.c.0.s8 %v1382
    %v1384 = vlaneseq
    %v1385 = vshrl.u32 %v1384, 7
    %v1386 = vsub.s32 %v1383, %v1385
    %v1387 = vrot.slane %v1365, %v1386
    %v1389 = vunpack.c.l.s4 1966171168
    %v1390 = vunpack.c.0.s8 %v1389
    %v1391 = vlaneseq
    %v1392 = vshrl.u32 %v1391, 7
    %v1393 = vsub.s32 %v1390, %v1392
    %v1394 = vrot.slane %v1366, %v1393
    %v1395 = vcombine.high %v1373, %v1373
    %v1396 = vcombine.high %v1380, %v1380
    %v1397 = vcombine.high %v1387, %v1387
    %v1398 = vcombine.high %v1394, %v1394
    %v1399 = vlaneseq
    %v1400 = vshrl.u32 %v1399, 7
    %v1401 = vsub.s32 0, %v1400
    %v1402 = vrot.slane %v1373, %v1401
    %v1403 = vlaneseq
    %v1404 = vshrl.u32 %v1403, 7
    %v1405 = vsub.s32 0, %v1404
    %v1406 = vrot.slane %v1387, %v1405
    %v1407 = vlaneseq
    %v1408 = vshrl.u32 %v1407, 7
    %v1409 = vsub.s32 0, %v1408
    %v1410 = vrot.slane %v1395, %v1409
    %v1411 = vlaneseq
    %v1412 = vshrl.u32 %v1411, 7
    %v1413 = vsub.s32 0, %v1412
    %v1414 = vrot.slane %v1397, %v1413
    %v1415 = vlaneseq
    %v1416 = vshrl.u32 %v1415, 7
    %v1417 = vsub.s32 0, %v1416
    %v1418 = vrot.slane %v1380, %v1417
    %v1419 = vlaneseq
    %v1420 = vshrl.u32 %v1419, 7
    %v1421 = vsub.s32 0, %v1420
    %v1422 = vrot.slane %v1394, %v1421
    %v1423 = vlaneseq
    %v1424 = vshrl.u32 %v1423, 7
    %v1425 = vsub.s32 0, %v1424
    %v1426 = vrot.slane %v1396, %v1425
    %v1427 = vlaneseq
    %v1428 = vshrl.u32 %v1427, 7
    %v1429 = vsub.s32 0, %v1428
    %v1430 = vrot.slane %v1398, %v1429
    %v1439 = vadd.f32 %v627, %v1402
    %v1440 = vadd.f32 %v632, %v1402
    %v1441 = vadd.f32 %v637, %v1402
    %v1442 = vadd.f32 %v642, %v1402
    %v1443 = vadd.f32 %v647, %v1402
    %v1444 = vadd.f32 %v652, %v1402
    %v1445 = vadd.f32 %v657, %v1402
    %v1446 = vadd.f32 %v662, %v1402
    %v1447 = vadd.f32 %v667, %v1402
    %v1448 = vadd.f32 %v672, %v1402
    %v1449 = vadd.f32 %v677, %v1402
    %v1450 = vadd.f32 %v682, %v1402
    %v1451 = vadd.f32 %v687, %v1402
    %v1452 = vadd.f32 %v692, %v1402
    %v1453 = vadd.f32 %v697, %v1402
    %v1454 = vadd.f32 %v702, %v1402
    %v1455 = vadd.f32 %v707, %v1406
    %v1456 = vadd.f32 %v712, %v1406
    %v1457 = vadd.f32 %v717, %v1406
    %v1458 = vadd.f32 %v722, %v1406
    %v1459 = vadd.f32 %v727, %v1406
    %v1460 = vadd.f32 %v732, %v1406
    %v1461 = vadd.f32 %v737, %v1406
    %v1462 = vadd.f32 %v742, %v1406
    %v1463 = vadd.f32 %v747, %v1406
    %v1464 = vadd.f32 %v752, %v1406
    %v1465 = vadd.f32 %v757, %v1406
    %v1466 = vadd.f32 %v762, %v1406
    %v1467 = vadd.f32 %v767, %v1406
    %v1468 = vadd.f32 %v772, %v1406
    %v1469 = vadd.f32 %v777, %v1406
    %v1470 = vadd.f32 %v782, %v1406
    %v1471 = vadd.f32 %v787, %v1410
    %v1472 = vadd.f32 %v792, %v1410
    %v1473 = vadd.f32 %v797, %v1410
    %v1474 = vadd.f32 %v802, %v1410
    %v1475 = vadd.f32 %v807, %v1410
    %v1476 = vadd.f32 %v812, %v1410
    %v1477 = vadd.f32 %v817, %v1410
    %v1478 = vadd.f32 %v822, %v1410
    %v1479 = vadd.f32 %v827, %v1410
    %v1480 = vadd.f32 %v832, %v1410
    %v1481 = vadd.f32 %v837, %v1410
    %v1482 = vadd.f32 %v842, %v1410
    %v1483 = vadd.f32 %v847, %v1410
    %v1484 = vadd.f32 %v852, %v1410
    %v1485 = vadd.f32 %v857, %v1410
    %v1486 = vadd.f32 %v862, %v1410
    %v1487 = vadd.f32 %v867, %v1414
    %v1488 = vadd.f32 %v872, %v1414
    %v1489 = vadd.f32 %v877, %v1414
    %v1490 = vadd.f32 %v882, %v1414
    %v1491 = vadd.f32 %v887, %v1414
    %v1492 = vadd.f32 %v892, %v1414
    %v1493 = vadd.f32 %v897, %v1414
    %v1494 = vadd.f32 %v902, %v1414
    %v1495 = vadd.f32 %v907, %v1414
    %v1496 = vadd.f32 %v912, %v1414
    %v1497 = vadd.f32 %v917, %v1414
    %v1498 = vadd.f32 %v922, %v1414
    %v1499 = vadd.f32 %v927, %v1414
    %v1500 = vadd.f32 %v932, %v1414
    %v1501 = vadd.f32 %v937, %v1414
    %v1502 = vadd.f32 %v942, %v1414
    %v1503 = vadd.f32 %v947, %v1418
    %v1504 = vadd.f32 %v952, %v1418
    %v1505 = vadd.f32 %v957, %v1418
    %v1506 = vadd.f32 %v962, %v1418
    %v1507 = vadd.f32 %v967, %v1418
    %v1508 = vadd.f32 %v972, %v1418
    %v1509 = vadd.f32 %v977, %v1418
    %v1510 = vadd.f32 %v982, %v1418
    %v1511 = vadd.f32 %v987, %v1418
    %v1512 = vadd.f32 %v992, %v1418
    %v1513 = vadd.f32 %v997, %v1418
    %v1514 = vadd.f32 %v1002, %v1418
    %v1515 = vadd.f32 %v1007, %v1418
    %v1516 = vadd.f32 %v1012, %v1418
    %v1517 = vadd.f32 %v1017, %v1418
    %v1518 = vadd.f32 %v1022, %v1418
    %v1519 = vadd.f32 %v1027, %v1422
    %v1520 = vadd.f32 %v1032, %v1422
    %v1521 = vadd.f32 %v1037, %v1422
    %v1522 = vadd.f32 %v1042, %v1422
    %v1523 = vadd.f32 %v1047, %v1422
    %v1524 = vadd.f32 %v1052, %v1422
    %v1525 = vadd.f32 %v1057, %v1422
    %v1526 = vadd.f32 %v1062, %v1422
    %v1527 = vadd.f32 %v1067, %v1422
    %v1528 = vadd.f32 %v1072, %v1422
    %v1529 = vadd.f32 %v1077, %v1422
    %v1530 = vadd.f32 %v1082, %v1422
    %v1531 = vadd.f32 %v1087, %v1422
    %v1532 = vadd.f32 %v1092, %v1422
    %v1533 = vadd.f32 %v1097, %v1422
    %v1534 = vadd.f32 %v1102, %v1422
    %v1535 = vadd.f32 %v1107, %v1426
    %v1536 = vadd.f32 %v1112, %v1426
    %v1537 = vadd.f32 %v1117, %v1426
    %v1538 = vadd.f32 %v1122, %v1426
    %v1539 = vadd.f32 %v1127, %v1426
    %v1540 = vadd.f32 %v1132, %v1426
    %v1541 = vadd.f32 %v1137, %v1426
    %v1542 = vadd.f32 %v1142, %v1426
    %v1543 = vadd.f32 %v1147, %v1426
    %v1544 = vadd.f32 %v1152, %v1426
    %v1545 = vadd.f32 %v1157, %v1426
    %v1546 = vadd.f32 %v1162, %v1426
    %v1547 = vadd.f32 %v1167, %v1426
    %v1548 = vadd.f32 %v1172, %v1426
    %v1549 = vadd.f32 %v1177, %v1426
    %v1550 = vadd.f32 %v1182, %v1426
    %v1551 = vadd.f32 %v1187, %v1430
    %v1552 = vadd.f32 %v1192, %v1430
    %v1553 = vadd.f32 %v1197, %v1430
    %v1554 = vadd.f32 %v1202, %v1430
    %v1555 = vadd.f32 %v1207, %v1430
    %v1556 = vadd.f32 %v1212, %v1430
    %v1557 = vadd.f32 %v1217, %v1430
    %v1558 = vadd.f32 %v1222, %v1430
    %v1559 = vadd.f32 %v1227, %v1430
    %v1560 = vadd.f32 %v1232, %v1430
    %v1561 = vadd.f32 %v1237, %v1430
    %v1562 = vadd.f32 %v1242, %v1430
    %v1563 = vadd.f32 %v1247, %v1430
    %v1564 = vadd.f32 %v1252, %v1430
    %v1565 = vadd.f32 %v1257, %v1430
    %v1566 = vadd.f32 %v1262, %v1430
    %v1567 = vmax.f32 %v1439, 0.0
    %v1568 = vmax.f32 %v1440, 0.0
    %v1569 = vmax.f32 %v1441, 0.0
    %v1570 = vmax.f32 %v1442, 0.0
    %v1571 = vmax.f32 %v1443, 0.0
    %v1572 = vmax.f32 %v1444, 0.0
    %v1573 = vmax.f32 %v1445, 0.0
    %v1574 = vmax.f32 %v1446, 0.0
    %v1575 = vmax.f32 %v1447, 0.0
    %v1576 = vmax.f32 %v1448, 0.0
    %v1577 = vmax.f32 %v1449, 0.0
    %v1578 = vmax.f32 %v1450, 0.0
    %v1579 = vmax.f32 %v1451, 0.0
    %v1580 = vmax.f32 %v1452, 0.0
    %v1581 = vmax.f32 %v1453, 0.0
    %v1582 = vmax.f32 %v1454, 0.0
    %v1583 = vmax.f32 %v1455, 0.0
    %v1584 = vmax.f32 %v1456, 0.0
    %v1585 = vmax.f32 %v1457, 0.0
    %v1586 = vmax.f32 %v1458, 0.0
    %v1587 = vmax.f32 %v1459, 0.0
    %v1588 = vmax.f32 %v1460, 0.0
    %v1589 = vmax.f32 %v1461, 0.0
    %v1590 = vmax.f32 %v1462, 0.0
    %v1591 = vmax.f32 %v1463, 0.0
    %v1592 = vmax.f32 %v1464, 0.0
    %v1593 = vmax.f32 %v1465, 0.0
    %v1594 = vmax.f32 %v1466, 0.0
    %v1595 = vmax.f32 %v1467, 0.0
    %v1596 = vmax.f32 %v1468, 0.0
    %v1597 = vmax.f32 %v1469, 0.0
    %v1598 = vmax.f32 %v1470, 0.0
    %v1599 = vmax.f32 %v1471, 0.0
    %v1600 = vmax.f32 %v1472, 0.0
    %v1601 = vmax.f32 %v1473, 0.0
    %v1602 = vmax.f32 %v1474, 0.0
    %v1603 = vmax.f32 %v1475, 0.0
    %v1604 = vmax.f32 %v1476, 0.0
    %v1605 = vmax.f32 %v1477, 0.0
    %v1606 = vmax.f32 %v1478, 0.0
    %v1607 = vmax.f32 %v1479, 0.0
    %v1608 = vmax.f32 %v1480, 0.0
    %v1609 = vmax.f32 %v1481, 0.0
    %v1610 = vmax.f32 %v1482, 0.0
    %v1611 = vmax.f32 %v1483, 0.0
    %v1612 = vmax.f32 %v1484, 0.0
    %v1613 = vmax.f32 %v1485, 0.0
    %v1614 = vmax.f32 %v1486, 0.0
    %v1615 = vmax.f32 %v1487, 0.0
    %v1616 = vmax.f32 %v1488, 0.0
    %v1617 = vmax.f32 %v1489, 0.0
    %v1618 = vmax.f32 %v1490, 0.0
    %v1619 = vmax.f32 %v1491, 0.0
    %v1620 = vmax.f32 %v1492, 0.0
    %v1621 = vmax.f32 %v1493, 0.0
    %v1622 = vmax.f32 %v1494, 0.0
    %v1623 = vmax.f32 %v1495, 0.0
    %v1624 = vmax.f32 %v1496, 0.0
    %v1625 = vmax.f32 %v1497, 0.0
    %v1626 = vmax.f32 %v1498, 0.0
    %v1627 = vmax.f32 %v1499, 0.0
    %v1628 = vmax.f32 %v1500, 0.0
    %v1629 = vmax.f32 %v1501, 0.0
    %v1630 = vmax.f32 %v1502, 0.0
    %v1631 = vmax.f32 %v1503, 0.0
    %v1632 = vmax.f32 %v1504, 0.0
    %v1633 = vmax.f32 %v1505, 0.0
    %v1634 = vmax.f32 %v1506, 0.0
    %v1635 = vmax.f32 %v1507, 0.0
    %v1636 = vmax.f32 %v1508, 0.0
    %v1637 = vmax.f32 %v1509, 0.0
    %v1638 = vmax.f32 %v1510, 0.0
    %v1639 = vmax.f32 %v1511, 0.0
    %v1640 = vmax.f32 %v1512, 0.0
    %v1641 = vmax.f32 %v1513, 0.0
    %v1642 = vmax.f32 %v1514, 0.0
    %v1643 = vmax.f32 %v1515, 0.0
    %v1644 = vmax.f32 %v1516, 0.0
    %v1645 = vmax.f32 %v1517, 0.0
    %v1646 = vmax.f32 %v1518, 0.0
    %v1647 = vmax.f32 %v1519, 0.0
    %v1648 = vmax.f32 %v1520, 0.0
    %v1649 = vmax.f32 %v1521, 0.0
    %v1650 = vmax.f32 %v1522, 0.0
    %v1651 = vmax.f32 %v1523, 0.0
    %v1652 = vmax.f32 %v1524, 0.0
    %v1653 = vmax.f32 %v1525, 0.0
    %v1654 = vmax.f32 %v1526, 0.0
    %v1655 = vmax.f32 %v1527, 0.0
    %v1656 = vmax.f32 %v1528, 0.0
    %v1657 = vmax.f32 %v1529, 0.0
    %v1658 = vmax.f32 %v1530, 0.0
    %v1659 = vmax.f32 %v1531, 0.0
    %v1660 = vmax.f32 %v1532, 0.0
    %v1661 = vmax.f32 %v1533, 0.0
    %v1662 = vmax.f32 %v1534, 0.0
    %v1663 = vmax.f32 %v1535, 0.0
    %v1664 = vmax.f32 %v1536, 0.0
    %v1665 = vmax.f32 %v1537, 0.0
    %v1666 = vmax.f32 %v1538, 0.0
    %v1667 = vmax.f32 %v1539, 0.0
    %v1668 = vmax.f32 %v1540, 0.0
    %v1669 = vmax.f32 %v1541, 0.0
    %v1670 = vmax.f32 %v1542, 0.0
    %v1671 = vmax.f32 %v1543, 0.0
    %v1672 = vmax.f32 %v1544, 0.0
    %v1673 = vmax.f32 %v1545, 0.0
    %v1674 = vmax.f32 %v1546, 0.0
    %v1675 = vmax.f32 %v1547, 0.0
    %v1676 = vmax.f32 %v1548, 0.0
    %v1677 = vmax.f32 %v1549, 0.0
    %v1678 = vmax.f32 %v1550, 0.0
    %v1679 = vmax.f32 %v1551, 0.0
    %v1680 = vmax.f32 %v1552, 0.0
    %v1681 = vmax.f32 %v1553, 0.0
    %v1682 = vmax.f32 %v1554, 0.0
    %v1683 = vmax.f32 %v1555, 0.0
    %v1684 = vmax.f32 %v1556, 0.0
    %v1685 = vmax.f32 %v1557, 0.0
    %v1686 = vmax.f32 %v1558, 0.0
    %v1687 = vmax.f32 %v1559, 0.0
    %v1688 = vmax.f32 %v1560, 0.0
    %v1689 = vmax.f32 %v1561, 0.0
    %v1690 = vmax.f32 %v1562, 0.0
    %v1691 = vmax.f32 %v1563, 0.0
    %v1692 = vmax.f32 %v1564, 0.0
    %v1693 = vmax.f32 %v1565, 0.0
    %v1694 = vmax.f32 %v1566, 0.0
    %v1695 = vld [vmem:[%s6] sm:$0x1]
    %v1697 = vlaneseq
    %v1698 = vshrl.u32 %v1697, 7
    %v1699 = vsub.s32 0, %v1698
    %v1700 = vrot.slane %v1695, %v1699
    %v1702 = vmul.f32 %v1567, %v1700
    %v1703 = vmul.f32 %v1568, %v1700
    %v1704 = vmul.f32 %v1569, %v1700
    %v1705 = vmul.f32 %v1570, %v1700
    %v1706 = vmul.f32 %v1571, %v1700
    %v1707 = vmul.f32 %v1572, %v1700
    %v1708 = vmul.f32 %v1573, %v1700
    %v1709 = vmul.f32 %v1574, %v1700
    %v1710 = vmul.f32 %v1575, %v1700
    %v1711 = vmul.f32 %v1576, %v1700
    %v1712 = vmul.f32 %v1577, %v1700
    %v1713 = vmul.f32 %v1578, %v1700
    %v1714 = vmul.f32 %v1579, %v1700
    %v1715 = vmul.f32 %v1580, %v1700
    %v1716 = vmul.f32 %v1581, %v1700
    %v1717 = vmul.f32 %v1582, %v1700
    %v1718 = vmul.f32 %v1583, %v1700
    %v1719 = vmul.f32 %v1584, %v1700
    %v1720 = vmul.f32 %v1585, %v1700
    %v1721 = vmul.f32 %v1586, %v1700
    %v1722 = vmul.f32 %v1587, %v1700
    %v1723 = vmul.f32 %v1588, %v1700
    %v1724 = vmul.f32 %v1589, %v1700
    %v1725 = vmul.f32 %v1590, %v1700
    %v1726 = vmul.f32 %v1591, %v1700
    %v1727 = vmul.f32 %v1592, %v1700
    %v1728 = vmul.f32 %v1593, %v1700
    %v1729 = vmul.f32 %v1594, %v1700
    %v1730 = vmul.f32 %v1595, %v1700
    %v1731 = vmul.f32 %v1596, %v1700
    %v1732 = vmul.f32 %v1597, %v1700
    %v1733 = vmul.f32 %v1598, %v1700
    %v1734 = vmul.f32 %v1599, %v1700
    %v1735 = vmul.f32 %v1600, %v1700
    %v1736 = vmul.f32 %v1601, %v1700
    %v1737 = vmul.f32 %v1602, %v1700
    %v1738 = vmul.f32 %v1603, %v1700
    %v1739 = vmul.f32 %v1604, %v1700
    %v1740 = vmul.f32 %v1605, %v1700
    %v1741 = vmul.f32 %v1606, %v1700
    %v1742 = vmul.f32 %v1607, %v1700
    %v1743 = vmul.f32 %v1608, %v1700
    %v1744 = vmul.f32 %v1609, %v1700
    %v1745 = vmul.f32 %v1610, %v1700
    %v1746 = vmul.f32 %v1611, %v1700
    %v1747 = vmul.f32 %v1612, %v1700
    %v1748 = vmul.f32 %v1613, %v1700
    %v1749 = vmul.f32 %v1614, %v1700
    %v1750 = vmul.f32 %v1615, %v1700
    %v1751 = vmul.f32 %v1616, %v1700
    %v1752 = vmul.f32 %v1617, %v1700
    %v1753 = vmul.f32 %v1618, %v1700
    %v1754 = vmul.f32 %v1619, %v1700
    %v1755 = vmul.f32 %v1620, %v1700
    %v1756 = vmul.f32 %v1621, %v1700
    %v1757 = vmul.f32 %v1622, %v1700
    %v1758 = vmul.f32 %v1623, %v1700
    %v1759 = vmul.f32 %v1624, %v1700
    %v1760 = vmul.f32 %v1625, %v1700
    %v1761 = vmul.f32 %v1626, %v1700
    %v1762 = vmul.f32 %v1627, %v1700
    %v1763 = vmul.f32 %v1628, %v1700
    %v1764 = vmul.f32 %v1629, %v1700
    %v1765 = vmul.f32 %v1630, %v1700
    %v1766 = vmul.f32 %v1631, %v1700
    %v1767 = vmul.f32 %v1632, %v1700
    %v1768 = vmul.f32 %v1633, %v1700
    %v1769 = vmul.f32 %v1634, %v1700
    %v1770 = vmul.f32 %v1635, %v1700
    %v1771 = vmul.f32 %v1636, %v1700
    %v1772 = vmul.f32 %v1637, %v1700
    %v1773 = vmul.f32 %v1638, %v1700
    %v1774 = vmul.f32 %v1639, %v1700
    %v1775 = vmul.f32 %v1640, %v1700
    %v1776 = vmul.f32 %v1641, %v1700
    %v1777 = vmul.f32 %v1642, %v1700
    %v1778 = vmul.f32 %v1643, %v1700
    %v1779 = vmul.f32 %v1644, %v1700
    %v1780 = vmul.f32 %v1645, %v1700
    %v1781 = vmul.f32 %v1646, %v1700
    %v1782 = vmul.f32 %v1647, %v1700
    %v1783 = vmul.f32 %v1648, %v1700
    %v1784 = vmul.f32 %v1649, %v1700
    %v1785 = vmul.f32 %v1650, %v1700
    %v1786 = vmul.f32 %v1651, %v1700
    %v1787 = vmul.f32 %v1652, %v1700
    %v1788 = vmul.f32 %v1653, %v1700
    %v1789 = vmul.f32 %v1654, %v1700
    %v1790 = vmul.f32 %v1655, %v1700
    %v1791 = vmul.f32 %v1656, %v1700
    %v1792 = vmul.f32 %v1657, %v1700
    %v1793 = vmul.f32 %v1658, %v1700
    %v1794 = vmul.f32 %v1659, %v1700
    %v1795 = vmul.f32 %v1660, %v1700
    %v1796 = vmul.f32 %v1661, %v1700
    %v1797 = vmul.f32 %v1662, %v1700
    %v1798 = vmul.f32 %v1663, %v1700
    %v1799 = vmul.f32 %v1664, %v1700
    %v1800 = vmul.f32 %v1665, %v1700
    %v1801 = vmul.f32 %v1666, %v1700
    %v1802 = vmul.f32 %v1667, %v1700
    %v1803 = vmul.f32 %v1668, %v1700
    %v1804 = vmul.f32 %v1669, %v1700
    %v1805 = vmul.f32 %v1670, %v1700
    %v1806 = vmul.f32 %v1671, %v1700
    %v1807 = vmul.f32 %v1672, %v1700
    %v1808 = vmul.f32 %v1673, %v1700
    %v1809 = vmul.f32 %v1674, %v1700
    %v1810 = vmul.f32 %v1675, %v1700
    %v1811 = vmul.f32 %v1676, %v1700
    %v1812 = vmul.f32 %v1677, %v1700
    %v1813 = vmul.f32 %v1678, %v1700
    %v1814 = vmul.f32 %v1679, %v1700
    %v1815 = vmul.f32 %v1680, %v1700
    %v1816 = vmul.f32 %v1681, %v1700
    %v1817 = vmul.f32 %v1682, %v1700
    %v1818 = vmul.f32 %v1683, %v1700
    %v1819 = vmul.f32 %v1684, %v1700
    %v1820 = vmul.f32 %v1685, %v1700
    %v1821 = vmul.f32 %v1686, %v1700
    %v1822 = vmul.f32 %v1687, %v1700
    %v1823 = vmul.f32 %v1688, %v1700
    %v1824 = vmul.f32 %v1689, %v1700
    %v1825 = vmul.f32 %v1690, %v1700
    %v1826 = vmul.f32 %v1691, %v1700
    %v1827 = vmul.f32 %v1692, %v1700
    %v1828 = vmul.f32 %v1693, %v1700
    %v1829 = vmul.f32 %v1694, %v1700
    %v1830 = vsel %vm175, %v1702, 0.0
    %1831 = vadd.xlane.f32.xlu0 %v1830
    %v1832 = vpop.xlane.xlu0 %1831
    %v1833 = vsel %vm175, %v1703, 0.0
    %1834 = vadd.xlane.f32.xlu0 %v1833
    %v1835 = vpop.xlane.xlu0 %1834
    %v1836 = vsel %vm175, %v1704, 0.0
    %1837 = vadd.xlane.f32.xlu0 %v1836
    %v1838 = vpop.xlane.xlu0 %1837
    %v1839 = vsel %vm175, %v1705, 0.0
    %1840 = vadd.xlane.f32.xlu0 %v1839
    %v1841 = vpop.xlane.xlu0 %1840
    %v1842 = vsel %vm175, %v1706, 0.0
    %1843 = vadd.xlane.f32.xlu0 %v1842
    %v1844 = vpop.xlane.xlu0 %1843
    %v1845 = vsel %vm175, %v1707, 0.0
    %1846 = vadd.xlane.f32.xlu0 %v1845
    %v1847 = vpop.xlane.xlu0 %1846
    %v1848 = vsel %vm175, %v1708, 0.0
    %1849 = vadd.xlane.f32.xlu0 %v1848
    %v1850 = vpop.xlane.xlu0 %1849
    %v1851 = vsel %vm175, %v1709, 0.0
    %1852 = vadd.xlane.f32.xlu0 %v1851
    %v1853 = vpop.xlane.xlu0 %1852
    %v1854 = vsel %vm175, %v1710, 0.0
    %1855 = vadd.xlane.f32.xlu0 %v1854
    %v1856 = vpop.xlane.xlu0 %1855
    %v1857 = vsel %vm175, %v1711, 0.0
    %1858 = vadd.xlane.f32.xlu0 %v1857
    %v1859 = vpop.xlane.xlu0 %1858
    %v1860 = vsel %vm175, %v1712, 0.0
    %1861 = vadd.xlane.f32.xlu0 %v1860
    %v1862 = vpop.xlane.xlu0 %1861
    %v1863 = vsel %vm175, %v1713, 0.0
    %1864 = vadd.xlane.f32.xlu0 %v1863
    %v1865 = vpop.xlane.xlu0 %1864
    %v1866 = vsel %vm175, %v1714, 0.0
    %1867 = vadd.xlane.f32.xlu0 %v1866
    %v1868 = vpop.xlane.xlu0 %1867
    %v1869 = vsel %vm175, %v1715, 0.0
    %1870 = vadd.xlane.f32.xlu0 %v1869
    %v1871 = vpop.xlane.xlu0 %1870
    %v1872 = vsel %vm175, %v1716, 0.0
    %1873 = vadd.xlane.f32.xlu0 %v1872
    %v1874 = vpop.xlane.xlu0 %1873
    %v1875 = vsel %vm175, %v1717, 0.0
    %1876 = vadd.xlane.f32.xlu0 %v1875
    %v1877 = vpop.xlane.xlu0 %1876
    %v1878 = vsel %vm175, %v1718, 0.0
    %1879 = vadd.xlane.f32.xlu0 %v1878
    %v1880 = vpop.xlane.xlu0 %1879
    %v1881 = vsel %vm175, %v1719, 0.0
    %1882 = vadd.xlane.f32.xlu0 %v1881
    %v1883 = vpop.xlane.xlu0 %1882
    %v1884 = vsel %vm175, %v1720, 0.0
    %1885 = vadd.xlane.f32.xlu0 %v1884
    %v1886 = vpop.xlane.xlu0 %1885
    %v1887 = vsel %vm175, %v1721, 0.0
    %1888 = vadd.xlane.f32.xlu0 %v1887
    %v1889 = vpop.xlane.xlu0 %1888
    %v1890 = vsel %vm175, %v1722, 0.0
    %1891 = vadd.xlane.f32.xlu0 %v1890
    %v1892 = vpop.xlane.xlu0 %1891
    %v1893 = vsel %vm175, %v1723, 0.0
    %1894 = vadd.xlane.f32.xlu0 %v1893
    %v1895 = vpop.xlane.xlu0 %1894
    %v1896 = vsel %vm175, %v1724, 0.0
    %1897 = vadd.xlane.f32.xlu0 %v1896
    %v1898 = vpop.xlane.xlu0 %1897
    %v1899 = vsel %vm175, %v1725, 0.0
    %1900 = vadd.xlane.f32.xlu0 %v1899
    %v1901 = vpop.xlane.xlu0 %1900
    %v1902 = vsel %vm175, %v1726, 0.0
    %1903 = vadd.xlane.f32.xlu0 %v1902
    %v1904 = vpop.xlane.xlu0 %1903
    %v1905 = vsel %vm175, %v1727, 0.0
    %1906 = vadd.xlane.f32.xlu0 %v1905
    %v1907 = vpop.xlane.xlu0 %1906
    %v1908 = vsel %vm175, %v1728, 0.0
    %1909 = vadd.xlane.f32.xlu0 %v1908
    %v1910 = vpop.xlane.xlu0 %1909
    %v1911 = vsel %vm175, %v1729, 0.0
    %1912 = vadd.xlane.f32.xlu0 %v1911
    %v1913 = vpop.xlane.xlu0 %1912
    %v1914 = vsel %vm175, %v1730, 0.0
    %1915 = vadd.xlane.f32.xlu0 %v1914
    %v1916 = vpop.xlane.xlu0 %1915
    %v1917 = vsel %vm175, %v1731, 0.0
    %1918 = vadd.xlane.f32.xlu0 %v1917
    %v1919 = vpop.xlane.xlu0 %1918
    %v1920 = vsel %vm175, %v1732, 0.0
    %1921 = vadd.xlane.f32.xlu0 %v1920
    %v1922 = vpop.xlane.xlu0 %1921
    %v1923 = vsel %vm175, %v1733, 0.0
    %1924 = vadd.xlane.f32.xlu0 %v1923
    %v1925 = vpop.xlane.xlu0 %1924
    %v1926 = vsel %vm175, %v1734, 0.0
    %1927 = vadd.xlane.f32.xlu0 %v1926
    %v1928 = vpop.xlane.xlu0 %1927
    %v1929 = vsel %vm175, %v1735, 0.0
    %1930 = vadd.xlane.f32.xlu0 %v1929
    %v1931 = vpop.xlane.xlu0 %1930
    %v1932 = vsel %vm175, %v1736, 0.0
    %1933 = vadd.xlane.f32.xlu0 %v1932
    %v1934 = vpop.xlane.xlu0 %1933
    %v1935 = vsel %vm175, %v1737, 0.0
    %1936 = vadd.xlane.f32.xlu0 %v1935
    %v1937 = vpop.xlane.xlu0 %1936
    %v1938 = vsel %vm175, %v1738, 0.0
    %1939 = vadd.xlane.f32.xlu0 %v1938
    %v1940 = vpop.xlane.xlu0 %1939
    %v1941 = vsel %vm175, %v1739, 0.0
    %1942 = vadd.xlane.f32.xlu0 %v1941
    %v1943 = vpop.xlane.xlu0 %1942
    %v1944 = vsel %vm175, %v1740, 0.0
    %1945 = vadd.xlane.f32.xlu0 %v1944
    %v1946 = vpop.xlane.xlu0 %1945
    %v1947 = vsel %vm175, %v1741, 0.0
    %1948 = vadd.xlane.f32.xlu0 %v1947
    %v1949 = vpop.xlane.xlu0 %1948
    %v1950 = vsel %vm175, %v1742, 0.0
    %1951 = vadd.xlane.f32.xlu0 %v1950
    %v1952 = vpop.xlane.xlu0 %1951
    %v1953 = vsel %vm175, %v1743, 0.0
    %1954 = vadd.xlane.f32.xlu0 %v1953
    %v1955 = vpop.xlane.xlu0 %1954
    %v1956 = vsel %vm175, %v1744, 0.0
    %1957 = vadd.xlane.f32.xlu0 %v1956
    %v1958 = vpop.xlane.xlu0 %1957
    %v1959 = vsel %vm175, %v1745, 0.0
    %1960 = vadd.xlane.f32.xlu0 %v1959
    %v1961 = vpop.xlane.xlu0 %1960
    %v1962 = vsel %vm175, %v1746, 0.0
    %1963 = vadd.xlane.f32.xlu0 %v1962
    %v1964 = vpop.xlane.xlu0 %1963
    %v1965 = vsel %vm175, %v1747, 0.0
    %1966 = vadd.xlane.f32.xlu0 %v1965
    %v1967 = vpop.xlane.xlu0 %1966
    %v1968 = vsel %vm175, %v1748, 0.0
    %1969 = vadd.xlane.f32.xlu0 %v1968
    %v1970 = vpop.xlane.xlu0 %1969
    %v1971 = vsel %vm175, %v1749, 0.0
    %1972 = vadd.xlane.f32.xlu0 %v1971
    %v1973 = vpop.xlane.xlu0 %1972
    %v1974 = vsel %vm175, %v1750, 0.0
    %1975 = vadd.xlane.f32.xlu0 %v1974
    %v1976 = vpop.xlane.xlu0 %1975
    %v1977 = vsel %vm175, %v1751, 0.0
    %1978 = vadd.xlane.f32.xlu0 %v1977
    %v1979 = vpop.xlane.xlu0 %1978
    %v1980 = vsel %vm175, %v1752, 0.0
    %1981 = vadd.xlane.f32.xlu0 %v1980
    %v1982 = vpop.xlane.xlu0 %1981
    %v1983 = vsel %vm175, %v1753, 0.0
    %1984 = vadd.xlane.f32.xlu0 %v1983
    %v1985 = vpop.xlane.xlu0 %1984
    %v1986 = vsel %vm175, %v1754, 0.0
    %1987 = vadd.xlane.f32.xlu0 %v1986
    %v1988 = vpop.xlane.xlu0 %1987
    %v1989 = vsel %vm175, %v1755, 0.0
    %1990 = vadd.xlane.f32.xlu0 %v1989
    %v1991 = vpop.xlane.xlu0 %1990
    %v1992 = vsel %vm175, %v1756, 0.0
    %1993 = vadd.xlane.f32.xlu0 %v1992
    %v1994 = vpop.xlane.xlu0 %1993
    %v1995 = vsel %vm175, %v1757, 0.0
    %1996 = vadd.xlane.f32.xlu0 %v1995
    %v1997 = vpop.xlane.xlu0 %1996
    %v1998 = vsel %vm175, %v1758, 0.0
    %1999 = vadd.xlane.f32.xlu0 %v1998
    %v2000 = vpop.xlane.xlu0 %1999
    %v2001 = vsel %vm175, %v1759, 0.0
    %2002 = vadd.xlane.f32.xlu0 %v2001
    %v2003 = vpop.xlane.xlu0 %2002
    %v2004 = vsel %vm175, %v1760, 0.0
    %2005 = vadd.xlane.f32.xlu0 %v2004
    %v2006 = vpop.xlane.xlu0 %2005
    %v2007 = vsel %vm175, %v1761, 0.0
    %2008 = vadd.xlane.f32.xlu0 %v2007
    %v2009 = vpop.xlane.xlu0 %2008
    %v2010 = vsel %vm175, %v1762, 0.0
    %2011 = vadd.xlane.f32.xlu0 %v2010
    %v2012 = vpop.xlane.xlu0 %2011
    %v2013 = vsel %vm175, %v1763, 0.0
    %2014 = vadd.xlane.f32.xlu0 %v2013
    %v2015 = vpop.xlane.xlu0 %2014
    %v2016 = vsel %vm175, %v1764, 0.0
    %2017 = vadd.xlane.f32.xlu0 %v2016
    %v2018 = vpop.xlane.xlu0 %2017
    %v2019 = vsel %vm175, %v1765, 0.0
    %2020 = vadd.xlane.f32.xlu0 %v2019
    %v2021 = vpop.xlane.xlu0 %2020
    %v2022 = vsel %vm175, %v1766, 0.0
    %2023 = vadd.xlane.f32.xlu0 %v2022
    %v2024 = vpop.xlane.xlu0 %2023
    %v2025 = vsel %vm175, %v1767, 0.0
    %2026 = vadd.xlane.f32.xlu0 %v2025
    %v2027 = vpop.xlane.xlu0 %2026
    %v2028 = vsel %vm175, %v1768, 0.0
    %2029 = vadd.xlane.f32.xlu0 %v2028
    %v2030 = vpop.xlane.xlu0 %2029
    %v2031 = vsel %vm175, %v1769, 0.0
    %2032 = vadd.xlane.f32.xlu0 %v2031
    %v2033 = vpop.xlane.xlu0 %2032
    %v2034 = vsel %vm175, %v1770, 0.0
    %2035 = vadd.xlane.f32.xlu0 %v2034
    %v2036 = vpop.xlane.xlu0 %2035
    %v2037 = vsel %vm175, %v1771, 0.0
    %2038 = vadd.xlane.f32.xlu0 %v2037
    %v2039 = vpop.xlane.xlu0 %2038
    %v2040 = vsel %vm175, %v1772, 0.0
    %2041 = vadd.xlane.f32.xlu0 %v2040
    %v2042 = vpop.xlane.xlu0 %2041
    %v2043 = vsel %vm175, %v1773, 0.0
    %2044 = vadd.xlane.f32.xlu0 %v2043
    %v2045 = vpop.xlane.xlu0 %2044
    %v2046 = vsel %vm175, %v1774, 0.0
    %2047 = vadd.xlane.f32.xlu0 %v2046
    %v2048 = vpop.xlane.xlu0 %2047
    %v2049 = vsel %vm175, %v1775, 0.0
    %2050 = vadd.xlane.f32.xlu0 %v2049
    %v2051 = vpop.xlane.xlu0 %2050
    %v2052 = vsel %vm175, %v1776, 0.0
    %2053 = vadd.xlane.f32.xlu0 %v2052
    %v2054 = vpop.xlane.xlu0 %2053
    %v2055 = vsel %vm175, %v1777, 0.0
    %2056 = vadd.xlane.f32.xlu0 %v2055
    %v2057 = vpop.xlane.xlu0 %2056
    %v2058 = vsel %vm175, %v1778, 0.0
    %2059 = vadd.xlane.f32.xlu0 %v2058
    %v2060 = vpop.xlane.xlu0 %2059
    %v2061 = vsel %vm175, %v1779, 0.0
    %2062 = vadd.xlane.f32.xlu0 %v2061
    %v2063 = vpop.xlane.xlu0 %2062
    %v2064 = vsel %vm175, %v1780, 0.0
    %2065 = vadd.xlane.f32.xlu0 %v2064
    %v2066 = vpop.xlane.xlu0 %2065
    %v2067 = vsel %vm175, %v1781, 0.0
    %2068 = vadd.xlane.f32.xlu0 %v2067
    %v2069 = vpop.xlane.xlu0 %2068
    %v2070 = vsel %vm175, %v1782, 0.0
    %2071 = vadd.xlane.f32.xlu0 %v2070
    %v2072 = vpop.xlane.xlu0 %2071
    %v2073 = vsel %vm175, %v1783, 0.0
    %2074 = vadd.xlane.f32.xlu0 %v2073
    %v2075 = vpop.xlane.xlu0 %2074
    %v2076 = vsel %vm175, %v1784, 0.0
    %2077 = vadd.xlane.f32.xlu0 %v2076
    %v2078 = vpop.xlane.xlu0 %2077
    %v2079 = vsel %vm175, %v1785, 0.0
    %2080 = vadd.xlane.f32.xlu0 %v2079
    %v2081 = vpop.xlane.xlu0 %2080
    %v2082 = vsel %vm175, %v1786, 0.0
    %2083 = vadd.xlane.f32.xlu0 %v2082
    %v2084 = vpop.xlane.xlu0 %2083
    %v2085 = vsel %vm175, %v1787, 0.0
    %2086 = vadd.xlane.f32.xlu0 %v2085
    %v2087 = vpop.xlane.xlu0 %2086
    %v2088 = vsel %vm175, %v1788, 0.0
    %2089 = vadd.xlane.f32.xlu0 %v2088
    %v2090 = vpop.xlane.xlu0 %2089
    %v2091 = vsel %vm175, %v1789, 0.0
    %2092 = vadd.xlane.f32.xlu0 %v2091
    %v2093 = vpop.xlane.xlu0 %2092
    %v2094 = vsel %vm175, %v1790, 0.0
    %2095 = vadd.xlane.f32.xlu0 %v2094
    %v2096 = vpop.xlane.xlu0 %2095
    %v2097 = vsel %vm175, %v1791, 0.0
    %2098 = vadd.xlane.f32.xlu0 %v2097
    %v2099 = vpop.xlane.xlu0 %2098
    %v2100 = vsel %vm175, %v1792, 0.0
    %2101 = vadd.xlane.f32.xlu0 %v2100
    %v2102 = vpop.xlane.xlu0 %2101
    %v2103 = vsel %vm175, %v1793, 0.0
    %2104 = vadd.xlane.f32.xlu0 %v2103
    %v2105 = vpop.xlane.xlu0 %2104
    %v2106 = vsel %vm175, %v1794, 0.0
    %2107 = vadd.xlane.f32.xlu0 %v2106
    %v2108 = vpop.xlane.xlu0 %2107
    %v2109 = vsel %vm175, %v1795, 0.0
    %2110 = vadd.xlane.f32.xlu0 %v2109
    %v2111 = vpop.xlane.xlu0 %2110
    %v2112 = vsel %vm175, %v1796, 0.0
    %2113 = vadd.xlane.f32.xlu0 %v2112
    %v2114 = vpop.xlane.xlu0 %2113
    %v2115 = vsel %vm175, %v1797, 0.0
    %2116 = vadd.xlane.f32.xlu0 %v2115
    %v2117 = vpop.xlane.xlu0 %2116
    %v2118 = vsel %vm175, %v1798, 0.0
    %2119 = vadd.xlane.f32.xlu0 %v2118
    %v2120 = vpop.xlane.xlu0 %2119
    %v2121 = vsel %vm175, %v1799, 0.0
    %2122 = vadd.xlane.f32.xlu0 %v2121
    %v2123 = vpop.xlane.xlu0 %2122
    %v2124 = vsel %vm175, %v1800, 0.0
    %2125 = vadd.xlane.f32.xlu0 %v2124
    %v2126 = vpop.xlane.xlu0 %2125
    %v2127 = vsel %vm175, %v1801, 0.0
    %2128 = vadd.xlane.f32.xlu0 %v2127
    %v2129 = vpop.xlane.xlu0 %2128
    %v2130 = vsel %vm175, %v1802, 0.0
    %2131 = vadd.xlane.f32.xlu0 %v2130
    %v2132 = vpop.xlane.xlu0 %2131
    %v2133 = vsel %vm175, %v1803, 0.0
    %2134 = vadd.xlane.f32.xlu0 %v2133
    %v2135 = vpop.xlane.xlu0 %2134
    %v2136 = vsel %vm175, %v1804, 0.0
    %2137 = vadd.xlane.f32.xlu0 %v2136
    %v2138 = vpop.xlane.xlu0 %2137
    %v2139 = vsel %vm175, %v1805, 0.0
    %2140 = vadd.xlane.f32.xlu0 %v2139
    %v2141 = vpop.xlane.xlu0 %2140
    %v2142 = vsel %vm175, %v1806, 0.0
    %2143 = vadd.xlane.f32.xlu0 %v2142
    %v2144 = vpop.xlane.xlu0 %2143
    %v2145 = vsel %vm175, %v1807, 0.0
    %2146 = vadd.xlane.f32.xlu0 %v2145
    %v2147 = vpop.xlane.xlu0 %2146
    %v2148 = vsel %vm175, %v1808, 0.0
    %2149 = vadd.xlane.f32.xlu0 %v2148
    %v2150 = vpop.xlane.xlu0 %2149
    %v2151 = vsel %vm175, %v1809, 0.0
    %2152 = vadd.xlane.f32.xlu0 %v2151
    %v2153 = vpop.xlane.xlu0 %2152
    %v2154 = vsel %vm175, %v1810, 0.0
    %2155 = vadd.xlane.f32.xlu0 %v2154
    %v2156 = vpop.xlane.xlu0 %2155
    %v2157 = vsel %vm175, %v1811, 0.0
    %2158 = vadd.xlane.f32.xlu0 %v2157
    %v2159 = vpop.xlane.xlu0 %2158
    %v2160 = vsel %vm175, %v1812, 0.0
    %2161 = vadd.xlane.f32.xlu0 %v2160
    %v2162 = vpop.xlane.xlu0 %2161
    %v2163 = vsel %vm175, %v1813, 0.0
    %2164 = vadd.xlane.f32.xlu0 %v2163
    %v2165 = vpop.xlane.xlu0 %2164
    %v2166 = vsel %vm175, %v1814, 0.0
    %2167 = vadd.xlane.f32.xlu0 %v2166
    %v2168 = vpop.xlane.xlu0 %2167
    %v2169 = vsel %vm175, %v1815, 0.0
    %2170 = vadd.xlane.f32.xlu0 %v2169
    %v2171 = vpop.xlane.xlu0 %2170
    %v2172 = vsel %vm175, %v1816, 0.0
    %2173 = vadd.xlane.f32.xlu0 %v2172
    %v2174 = vpop.xlane.xlu0 %2173
    %v2175 = vsel %vm175, %v1817, 0.0
    %2176 = vadd.xlane.f32.xlu0 %v2175
    %v2177 = vpop.xlane.xlu0 %2176
    %v2178 = vsel %vm175, %v1818, 0.0
    %2179 = vadd.xlane.f32.xlu0 %v2178
    %v2180 = vpop.xlane.xlu0 %2179
    %v2181 = vsel %vm175, %v1819, 0.0
    %2182 = vadd.xlane.f32.xlu0 %v2181
    %v2183 = vpop.xlane.xlu0 %2182
    %v2184 = vsel %vm175, %v1820, 0.0
    %2185 = vadd.xlane.f32.xlu0 %v2184
    %v2186 = vpop.xlane.xlu0 %2185
    %v2187 = vsel %vm175, %v1821, 0.0
    %2188 = vadd.xlane.f32.xlu0 %v2187
    %v2189 = vpop.xlane.xlu0 %2188
    %v2190 = vsel %vm175, %v1822, 0.0
    %2191 = vadd.xlane.f32.xlu0 %v2190
    %v2192 = vpop.xlane.xlu0 %2191
    %v2193 = vsel %vm175, %v1823, 0.0
    %2194 = vadd.xlane.f32.xlu0 %v2193
    %v2195 = vpop.xlane.xlu0 %2194
    %v2196 = vsel %vm175, %v1824, 0.0
    %2197 = vadd.xlane.f32.xlu0 %v2196
    %v2198 = vpop.xlane.xlu0 %2197
    %v2199 = vsel %vm175, %v1825, 0.0
    %2200 = vadd.xlane.f32.xlu0 %v2199
    %v2201 = vpop.xlane.xlu0 %2200
    %v2202 = vsel %vm175, %v1826, 0.0
    %2203 = vadd.xlane.f32.xlu0 %v2202
    %v2204 = vpop.xlane.xlu0 %2203
    %v2205 = vsel %vm175, %v1827, 0.0
    %2206 = vadd.xlane.f32.xlu0 %v2205
    %v2207 = vpop.xlane.xlu0 %2206
    %v2208 = vsel %vm175, %v1828, 0.0
    %2209 = vadd.xlane.f32.xlu0 %v2208
    %v2210 = vpop.xlane.xlu0 %2209
    %v2211 = vsel %vm175, %v1829, 0.0
    %2212 = vadd.xlane.f32.xlu0 %v2211
    %v2213 = vpop.xlane.xlu0 %2212
    %v2214 = vld [vmem:[#allocation2] sm:$0x1]
    %v2216 = vlaneseq
    %v2217 = vshrl.u32 %v2216, 7
    %v2218 = vsub.s32 0, %v2217
    %v2219 = vrot.slane %v2214, %v2218
    %2220 = vset.pattern.permute.xlu0 0
    %2221 = vperm.xlu0 %2220, %v2219
    %v2222 = vpop.permute.xlu0 %2221
    %v2224 = vadd.f32 %v1832, %v2222
    %v2225 = vadd.f32 %v1835, %v2222
    %v2226 = vadd.f32 %v1838, %v2222
    %v2227 = vadd.f32 %v1841, %v2222
    %v2228 = vadd.f32 %v1844, %v2222
    %v2229 = vadd.f32 %v1847, %v2222
    %v2230 = vadd.f32 %v1850, %v2222
    %v2231 = vadd.f32 %v1853, %v2222
    %v2232 = vadd.f32 %v1856, %v2222
    %v2233 = vadd.f32 %v1859, %v2222
    %v2234 = vadd.f32 %v1862, %v2222
    %v2235 = vadd.f32 %v1865, %v2222
    %v2236 = vadd.f32 %v1868, %v2222
    %v2237 = vadd.f32 %v1871, %v2222
    %v2238 = vadd.f32 %v1874, %v2222
    %v2239 = vadd.f32 %v1877, %v2222
    %v2240 = vadd.f32 %v1880, %v2222
    %v2241 = vadd.f32 %v1883, %v2222
    %v2242 = vadd.f32 %v1886, %v2222
    %v2243 = vadd.f32 %v1889, %v2222
    %v2244 = vadd.f32 %v1892, %v2222
    %v2245 = vadd.f32 %v1895, %v2222
    %v2246 = vadd.f32 %v1898, %v2222
    %v2247 = vadd.f32 %v1901, %v2222
    %v2248 = vadd.f32 %v1904, %v2222
    %v2249 = vadd.f32 %v1907, %v2222
    %v2250 = vadd.f32 %v1910, %v2222
    %v2251 = vadd.f32 %v1913, %v2222
    %v2252 = vadd.f32 %v1916, %v2222
    %v2253 = vadd.f32 %v1919, %v2222
    %v2254 = vadd.f32 %v1922, %v2222
    %v2255 = vadd.f32 %v1925, %v2222
    %v2256 = vadd.f32 %v1928, %v2222
    %v2257 = vadd.f32 %v1931, %v2222
    %v2258 = vadd.f32 %v1934, %v2222
    %v2259 = vadd.f32 %v1937, %v2222
    %v2260 = vadd.f32 %v1940, %v2222
    %v2261 = vadd.f32 %v1943, %v2222
    %v2262 = vadd.f32 %v1946, %v2222
    %v2263 = vadd.f32 %v1949, %v2222
    %v2264 = vadd.f32 %v1952, %v2222
    %v2265 = vadd.f32 %v1955, %v2222
    %v2266 = vadd.f32 %v1958, %v2222
    %v2267 = vadd.f32 %v1961, %v2222
    %v2268 = vadd.f32 %v1964, %v2222
    %v2269 = vadd.f32 %v1967, %v2222
    %v2270 = vadd.f32 %v1970, %v2222
    %v2271 = vadd.f32 %v1973, %v2222
    %v2272 = vadd.f32 %v1976, %v2222
    %v2273 = vadd.f32 %v1979, %v2222
    %v2274 = vadd.f32 %v1982, %v2222
    %v2275 = vadd.f32 %v1985, %v2222
    %v2276 = vadd.f32 %v1988, %v2222
    %v2277 = vadd.f32 %v1991, %v2222
    %v2278 = vadd.f32 %v1994, %v2222
    %v2279 = vadd.f32 %v1997, %v2222
    %v2280 = vadd.f32 %v2000, %v2222
    %v2281 = vadd.f32 %v2003, %v2222
    %v2282 = vadd.f32 %v2006, %v2222
    %v2283 = vadd.f32 %v2009, %v2222
    %v2284 = vadd.f32 %v2012, %v2222
    %v2285 = vadd.f32 %v2015, %v2222
    %v2286 = vadd.f32 %v2018, %v2222
    %v2287 = vadd.f32 %v2021, %v2222
    %v2288 = vadd.f32 %v2024, %v2222
    %v2289 = vadd.f32 %v2027, %v2222
    %v2290 = vadd.f32 %v2030, %v2222
    %v2291 = vadd.f32 %v2033, %v2222
    %v2292 = vadd.f32 %v2036, %v2222
    %v2293 = vadd.f32 %v2039, %v2222
    %v2294 = vadd.f32 %v2042, %v2222
    %v2295 = vadd.f32 %v2045, %v2222
    %v2296 = vadd.f32 %v2048, %v2222
    %v2297 = vadd.f32 %v2051, %v2222
    %v2298 = vadd.f32 %v2054, %v2222
    %v2299 = vadd.f32 %v2057, %v2222
    %v2300 = vadd.f32 %v2060, %v2222
    %v2301 = vadd.f32 %v2063, %v2222
    %v2302 = vadd.f32 %v2066, %v2222
    %v2303 = vadd.f32 %v2069, %v2222
    %v2304 = vadd.f32 %v2072, %v2222
    %v2305 = vadd.f32 %v2075, %v2222
    %v2306 = vadd.f32 %v2078, %v2222
    %v2307 = vadd.f32 %v2081, %v2222
    %v2308 = vadd.f32 %v2084, %v2222
    %v2309 = vadd.f32 %v2087, %v2222
    %v2310 = vadd.f32 %v2090, %v2222
    %v2311 = vadd.f32 %v2093, %v2222
    %v2312 = vadd.f32 %v2096, %v2222
    %v2313 = vadd.f32 %v2099, %v2222
    %v2314 = vadd.f32 %v2102, %v2222
    %v2315 = vadd.f32 %v2105, %v2222
    %v2316 = vadd.f32 %v2108, %v2222
    %v2317 = vadd.f32 %v2111, %v2222
    %v2318 = vadd.f32 %v2114, %v2222
    %v2319 = vadd.f32 %v2117, %v2222
    %v2320 = vadd.f32 %v2120, %v2222
    %v2321 = vadd.f32 %v2123, %v2222
    %v2322 = vadd.f32 %v2126, %v2222
    %v2323 = vadd.f32 %v2129, %v2222
    %v2324 = vadd.f32 %v2132, %v2222
    %v2325 = vadd.f32 %v2135, %v2222
    %v2326 = vadd.f32 %v2138, %v2222
    %v2327 = vadd.f32 %v2141, %v2222
    %v2328 = vadd.f32 %v2144, %v2222
    %v2329 = vadd.f32 %v2147, %v2222
    %v2330 = vadd.f32 %v2150, %v2222
    %v2331 = vadd.f32 %v2153, %v2222
    %v2332 = vadd.f32 %v2156, %v2222
    %v2333 = vadd.f32 %v2159, %v2222
    %v2334 = vadd.f32 %v2162, %v2222
    %v2335 = vadd.f32 %v2165, %v2222
    %v2336 = vadd.f32 %v2168, %v2222
    %v2337 = vadd.f32 %v2171, %v2222
    %v2338 = vadd.f32 %v2174, %v2222
    %v2339 = vadd.f32 %v2177, %v2222
    %v2340 = vadd.f32 %v2180, %v2222
    %v2341 = vadd.f32 %v2183, %v2222
    %v2342 = vadd.f32 %v2186, %v2222
    %v2343 = vadd.f32 %v2189, %v2222
    %v2344 = vadd.f32 %v2192, %v2222
    %v2345 = vadd.f32 %v2195, %v2222
    %v2346 = vadd.f32 %v2198, %v2222
    %v2347 = vadd.f32 %v2201, %v2222
    %v2348 = vadd.f32 %v2204, %v2222
    %v2349 = vadd.f32 %v2207, %v2222
    %v2350 = vadd.f32 %v2210, %v2222
    %v2351 = vadd.f32 %v2213, %v2222
    %v2352 = vlaneseq
    %v2353 = vand.u32 %v2352, 127
    %vm2354 = vcmp.lt.s32.totalorder %v2353, 16
    %v2483 = vlaneseq
    %v2484 = vshrl.u32 %v2483, 7
    %v2485 = vsub.s32 %v2353, %v2484
    %v2486 = vrot.slane %v2224, %v2485
    %v2487 = vadd.s32 %v2353, 4294967288
    %v2488 = vlaneseq
    %v2489 = vshrl.u32 %v2488, 7
    %v2490 = vsub.s32 %v2487, %v2489
    %v2491 = vrot.slane %v2225, %v2490
    %vm2492 = vcmask 130112
    %v2493 = vsel %vm2492, %v2491, %v2486
    %v2494 = vadd.s32 %v2353, 4294967280
    %v2495 = vlaneseq
    %v2496 = vshrl.u32 %v2495, 7
    %v2497 = vsub.s32 %v2494, %v2496
    %v2498 = vrot.slane %v2226, %v2497
    %vm2499 = vcmask 195712
    %v2500 = vsel %vm2499, %v2498, %v2493
    %v2501 = vadd.s32 %v2353, 4294967272
    %v2502 = vlaneseq
    %v2503 = vshrl.u32 %v2502, 7
    %v2504 = vsub.s32 %v2501, %v2503
    %v2505 = vrot.slane %v2227, %v2504
    %vm2506 = vcmask 261312
    %v2507 = vsel %vm2506, %v2505, %v2500
    %v2508 = vadd.s32 %v2353, 4294967264
    %v2509 = vlaneseq
    %v2510 = vshrl.u32 %v2509, 7
    %v2511 = vsub.s32 %v2508, %v2510
    %v2512 = vrot.slane %v2228, %v2511
    %vm2513 = vcmask 326912
    %v2514 = vsel %vm2513, %v2512, %v2507
    %v2515 = vadd.s32 %v2353, 4294967256
    %v2516 = vlaneseq
    %v2517 = vshrl.u32 %v2516, 7
    %v2518 = vsub.s32 %v2515, %v2517
    %v2519 = vrot.slane %v2229, %v2518
    %vm2520 = vcmask 392512
    %v2521 = vsel %vm2520, %v2519, %v2514
    %v2522 = vadd.s32 %v2353, 4294967248
    %v2523 = vlaneseq
    %v2524 = vshrl.u32 %v2523, 7
    %v2525 = vsub.s32 %v2522, %v2524
    %v2526 = vrot.slane %v2230, %v2525
    %vm2527 = vcmask 458112
    %v2528 = vsel %vm2527, %v2526, %v2521
    %v2529 = vadd.s32 %v2353, 4294967240
    %v2530 = vlaneseq
    %v2531 = vshrl.u32 %v2530, 7
    %v2532 = vsub.s32 %v2529, %v2531
    %v2533 = vrot.slane %v2231, %v2532
    %vm2534 = vcmask 523712
    %v2535 = vsel %vm2534, %v2533, %v2528
    %v2536 = vadd.s32 %v2353, 4294967232
    %v2537 = vlaneseq
    %v2538 = vshrl.u32 %v2537, 7
    %v2539 = vsub.s32 %v2536, %v2538
    %v2540 = vrot.slane %v2232, %v2539
    %vm2541 = vcmask 589312
    %v2542 = vsel %vm2541, %v2540, %v2535
    %v2543 = vadd.s32 %v2353, 4294967224
    %v2544 = vlaneseq
    %v2545 = vshrl.u32 %v2544, 7
    %v2546 = vsub.s32 %v2543, %v2545
    %v2547 = vrot.slane %v2233, %v2546
    %vm2548 = vcmask 654912
    %v2549 = vsel %vm2548, %v2547, %v2542
    %v2550 = vadd.s32 %v2353, 4294967216
    %v2551 = vlaneseq
    %v2552 = vshrl.u32 %v2551, 7
    %v2553 = vsub.s32 %v2550, %v2552
    %v2554 = vrot.slane %v2234, %v2553
    %vm2555 = vcmask 720512
    %v2556 = vsel %vm2555, %v2554, %v2549
    %v2557 = vadd.s32 %v2353, 4294967208
    %v2558 = vlaneseq
    %v2559 = vshrl.u32 %v2558, 7
    %v2560 = vsub.s32 %v2557, %v2559
    %v2561 = vrot.slane %v2235, %v2560
    %vm2562 = vcmask 786112
    %v2563 = vsel %vm2562, %v2561, %v2556
    %v2564 = vadd.s32 %v2353, 4294967200
    %v2565 = vlaneseq
    %v2566 = vshrl.u32 %v2565, 7
    %v2567 = vsub.s32 %v2564, %v2566
    %v2568 = vrot.slane %v2236, %v2567
    %vm2569 = vcmask 851712
    %v2570 = vsel %vm2569, %v2568, %v2563
    %v2571 = vadd.s32 %v2353, 4294967192
    %v2572 = vlaneseq
    %v2573 = vshrl.u32 %v2572, 7
    %v2574 = vsub.s32 %v2571, %v2573
    %v2575 = vrot.slane %v2237, %v2574
    %vm2576 = vcmask 917312
    %v2577 = vsel %vm2576, %v2575, %v2570
    %v2578 = vadd.s32 %v2353, 4294967184
    %v2579 = vlaneseq
    %v2580 = vshrl.u32 %v2579, 7
    %v2581 = vsub.s32 %v2578, %v2580
    %v2582 = vrot.slane %v2238, %v2581
    %vm2583 = vcmask 982912
    %v2584 = vsel %vm2583, %v2582, %v2577
    %v2585 = vadd.s32 %v2353, 4294967176
    %v2586 = vlaneseq
    %v2587 = vshrl.u32 %v2586, 7
    %v2588 = vsub.s32 %v2585, %v2587
    %v2589 = vrot.slane %v2239, %v2588
    %vm2590 = vcmask 1048512
    %v2591 = vsel %vm2590, %v2589, %v2584
    %v2592 = vlaneseq
    %v2593 = vshrl.u32 %v2592, 7
    %v2594 = vsub.s32 %v2353, %v2593
    %v2595 = vrot.slane %v2240, %v2594
    %v2596 = vlaneseq
    %v2597 = vshrl.u32 %v2596, 7
    %v2598 = vsub.s32 %v2487, %v2597
    %v2599 = vrot.slane %v2241, %v2598
    %v2600 = vsel %vm2492, %v2599, %v2595
    %v2601 = vlaneseq
    %v2602 = vshrl.u32 %v2601, 7
    %v2603 = vsub.s32 %v2494, %v2602
    %v2604 = vrot.slane %v2242, %v2603
    %v2605 = vsel %vm2499, %v2604, %v2600
    %v2606 = vlaneseq
    %v2607 = vshrl.u32 %v2606, 7
    %v2608 = vsub.s32 %v2501, %v2607
    %v2609 = vrot.slane %v2243, %v2608
    %v2610 = vsel %vm2506, %v2609, %v2605
    %v2611 = vlaneseq
    %v2612 = vshrl.u32 %v2611, 7
    %v2613 = vsub.s32 %v2508, %v2612
    %v2614 = vrot.slane %v2244, %v2613
    %v2615 = vsel %vm2513, %v2614, %v2610
    %v2616 = vlaneseq
    %v2617 = vshrl.u32 %v2616, 7
    %v2618 = vsub.s32 %v2515, %v2617
    %v2619 = vrot.slane %v2245, %v2618
    %v2620 = vsel %vm2520, %v2619, %v2615
    %v2621 = vlaneseq
    %v2622 = vshrl.u32 %v2621, 7
    %v2623 = vsub.s32 %v2522, %v2622
    %v2624 = vrot.slane %v2246, %v2623
    %v2625 = vsel %vm2527, %v2624, %v2620
    %v2626 = vlaneseq
    %v2627 = vshrl.u32 %v2626, 7
    %v2628 = vsub.s32 %v2529, %v2627
    %v2629 = vrot.slane %v2247, %v2628
    %v2630 = vsel %vm2534, %v2629, %v2625
    %v2631 = vlaneseq
    %v2632 = vshrl.u32 %v2631, 7
    %v2633 = vsub.s32 %v2536, %v2632
    %v2634 = vrot.slane %v2248, %v2633
    %v2635 = vsel %vm2541, %v2634, %v2630
    %v2636 = vlaneseq
    %v2637 = vshrl.u32 %v2636, 7
    %v2638 = vsub.s32 %v2543, %v2637
    %v2639 = vrot.slane %v2249, %v2638
    %v2640 = vsel %vm2548, %v2639, %v2635
    %v2641 = vlaneseq
    %v2642 = vshrl.u32 %v2641, 7
    %v2643 = vsub.s32 %v2550, %v2642
    %v2644 = vrot.slane %v2250, %v2643
    %v2645 = vsel %vm2555, %v2644, %v2640
    %v2646 = vlaneseq
    %v2647 = vshrl.u32 %v2646, 7
    %v2648 = vsub.s32 %v2557, %v2647
    %v2649 = vrot.slane %v2251, %v2648
    %v2650 = vsel %vm2562, %v2649, %v2645
    %v2651 = vlaneseq
    %v2652 = vshrl.u32 %v2651, 7
    %v2653 = vsub.s32 %v2564, %v2652
    %v2654 = vrot.slane %v2252, %v2653
    %v2655 = vsel %vm2569, %v2654, %v2650
    %v2656 = vlaneseq
    %v2657 = vshrl.u32 %v2656, 7
    %v2658 = vsub.s32 %v2571, %v2657
    %v2659 = vrot.slane %v2253, %v2658
    %v2660 = vsel %vm2576, %v2659, %v2655
    %v2661 = vlaneseq
    %v2662 = vshrl.u32 %v2661, 7
    %v2663 = vsub.s32 %v2578, %v2662
    %v2664 = vrot.slane %v2254, %v2663
    %v2665 = vsel %vm2583, %v2664, %v2660
    %v2666 = vlaneseq
    %v2667 = vshrl.u32 %v2666, 7
    %v2668 = vsub.s32 %v2585, %v2667
    %v2669 = vrot.slane %v2255, %v2668
    %v2670 = vsel %vm2590, %v2669, %v2665
    %v2671 = vlaneseq
    %v2672 = vshrl.u32 %v2671, 7
    %v2673 = vsub.s32 %v2353, %v2672
    %v2674 = vrot.slane %v2256, %v2673
    %v2675 = vlaneseq
    %v2676 = vshrl.u32 %v2675, 7
    %v2677 = vsub.s32 %v2487, %v2676
    %v2678 = vrot.slane %v2257, %v2677
    %v2679 = vsel %vm2492, %v2678, %v2674
    %v2680 = vlaneseq
    %v2681 = vshrl.u32 %v2680, 7
    %v2682 = vsub.s32 %v2494, %v2681
    %v2683 = vrot.slane %v2258, %v2682
    %v2684 = vsel %vm2499, %v2683, %v2679
    %v2685 = vlaneseq
    %v2686 = vshrl.u32 %v2685, 7
    %v2687 = vsub.s32 %v2501, %v2686
    %v2688 = vrot.slane %v2259, %v2687
    %v2689 = vsel %vm2506, %v2688, %v2684
    %v2690 = vlaneseq
    %v2691 = vshrl.u32 %v2690, 7
    %v2692 = vsub.s32 %v2508, %v2691
    %v2693 = vrot.slane %v2260, %v2692
    %v2694 = vsel %vm2513, %v2693, %v2689
    %v2695 = vlaneseq
    %v2696 = vshrl.u32 %v2695, 7
    %v2697 = vsub.s32 %v2515, %v2696
    %v2698 = vrot.slane %v2261, %v2697
    %v2699 = vsel %vm2520, %v2698, %v2694
    %v2700 = vlaneseq
    %v2701 = vshrl.u32 %v2700, 7
    %v2702 = vsub.s32 %v2522, %v2701
    %v2703 = vrot.slane %v2262, %v2702
    %v2704 = vsel %vm2527, %v2703, %v2699
    %v2705 = vlaneseq
    %v2706 = vshrl.u32 %v2705, 7
    %v2707 = vsub.s32 %v2529, %v2706
    %v2708 = vrot.slane %v2263, %v2707
    %v2709 = vsel %vm2534, %v2708, %v2704
    %v2710 = vlaneseq
    %v2711 = vshrl.u32 %v2710, 7
    %v2712 = vsub.s32 %v2536, %v2711
    %v2713 = vrot.slane %v2264, %v2712
    %v2714 = vsel %vm2541, %v2713, %v2709
    %v2715 = vlaneseq
    %v2716 = vshrl.u32 %v2715, 7
    %v2717 = vsub.s32 %v2543, %v2716
    %v2718 = vrot.slane %v2265, %v2717
    %v2719 = vsel %vm2548, %v2718, %v2714
    %v2720 = vlaneseq
    %v2721 = vshrl.u32 %v2720, 7
    %v2722 = vsub.s32 %v2550, %v2721
    %v2723 = vrot.slane %v2266, %v2722
    %v2724 = vsel %vm2555, %v2723, %v2719
    %v2725 = vlaneseq
    %v2726 = vshrl.u32 %v2725, 7
    %v2727 = vsub.s32 %v2557, %v2726
    %v2728 = vrot.slane %v2267, %v2727
    %v2729 = vsel %vm2562, %v2728, %v2724
    %v2730 = vlaneseq
    %v2731 = vshrl.u32 %v2730, 7
    %v2732 = vsub.s32 %v2564, %v2731
    %v2733 = vrot.slane %v2268, %v2732
    %v2734 = vsel %vm2569, %v2733, %v2729
    %v2735 = vlaneseq
    %v2736 = vshrl.u32 %v2735, 7
    %v2737 = vsub.s32 %v2571, %v2736
    %v2738 = vrot.slane %v2269, %v2737
    %v2739 = vsel %vm2576, %v2738, %v2734
    %v2740 = vlaneseq
    %v2741 = vshrl.u32 %v2740, 7
    %v2742 = vsub.s32 %v2578, %v2741
    %v2743 = vrot.slane %v2270, %v2742
    %v2744 = vsel %vm2583, %v2743, %v2739
    %v2745 = vlaneseq
    %v2746 = vshrl.u32 %v2745, 7
    %v2747 = vsub.s32 %v2585, %v2746
    %v2748 = vrot.slane %v2271, %v2747
    %v2749 = vsel %vm2590, %v2748, %v2744
    %v2750 = vlaneseq
    %v2751 = vshrl.u32 %v2750, 7
    %v2752 = vsub.s32 %v2353, %v2751
    %v2753 = vrot.slane %v2272, %v2752
    %v2754 = vlaneseq
    %v2755 = vshrl.u32 %v2754, 7
    %v2756 = vsub.s32 %v2487, %v2755
    %v2757 = vrot.slane %v2273, %v2756
    %v2758 = vsel %vm2492, %v2757, %v2753
    %v2759 = vlaneseq
    %v2760 = vshrl.u32 %v2759, 7
    %v2761 = vsub.s32 %v2494, %v2760
    %v2762 = vrot.slane %v2274, %v2761
    %v2763 = vsel %vm2499, %v2762, %v2758
    %v2764 = vlaneseq
    %v2765 = vshrl.u32 %v2764, 7
    %v2766 = vsub.s32 %v2501, %v2765
    %v2767 = vrot.slane %v2275, %v2766
    %v2768 = vsel %vm2506, %v2767, %v2763
    %v2769 = vlaneseq
    %v2770 = vshrl.u32 %v2769, 7
    %v2771 = vsub.s32 %v2508, %v2770
    %v2772 = vrot.slane %v2276, %v2771
    %v2773 = vsel %vm2513, %v2772, %v2768
    %v2774 = vlaneseq
    %v2775 = vshrl.u32 %v2774, 7
    %v2776 = vsub.s32 %v2515, %v2775
    %v2777 = vrot.slane %v2277, %v2776
    %v2778 = vsel %vm2520, %v2777, %v2773
    %v2779 = vlaneseq
    %v2780 = vshrl.u32 %v2779, 7
    %v2781 = vsub.s32 %v2522, %v2780
    %v2782 = vrot.slane %v2278, %v2781
    %v2783 = vsel %vm2527, %v2782, %v2778
    %v2784 = vlaneseq
    %v2785 = vshrl.u32 %v2784, 7
    %v2786 = vsub.s32 %v2529, %v2785
    %v2787 = vrot.slane %v2279, %v2786
    %v2788 = vsel %vm2534, %v2787, %v2783
    %v2789 = vlaneseq
    %v2790 = vshrl.u32 %v2789, 7
    %v2791 = vsub.s32 %v2536, %v2790
    %v2792 = vrot.slane %v2280, %v2791
    %v2793 = vsel %vm2541, %v2792, %v2788
    %v2794 = vlaneseq
    %v2795 = vshrl.u32 %v2794, 7
    %v2796 = vsub.s32 %v2543, %v2795
    %v2797 = vrot.slane %v2281, %v2796
    %v2798 = vsel %vm2548, %v2797, %v2793
    %v2799 = vlaneseq
    %v2800 = vshrl.u32 %v2799, 7
    %v2801 = vsub.s32 %v2550, %v2800
    %v2802 = vrot.slane %v2282, %v2801
    %v2803 = vsel %vm2555, %v2802, %v2798
    %v2804 = vlaneseq
    %v2805 = vshrl.u32 %v2804, 7
    %v2806 = vsub.s32 %v2557, %v2805
    %v2807 = vrot.slane %v2283, %v2806
    %v2808 = vsel %vm2562, %v2807, %v2803
    %v2809 = vlaneseq
    %v2810 = vshrl.u32 %v2809, 7
    %v2811 = vsub.s32 %v2564, %v2810
    %v2812 = vrot.slane %v2284, %v2811
    %v2813 = vsel %vm2569, %v2812, %v2808
    %v2814 = vlaneseq
    %v2815 = vshrl.u32 %v2814, 7
    %v2816 = vsub.s32 %v2571, %v2815
    %v2817 = vrot.slane %v2285, %v2816
    %v2818 = vsel %vm2576, %v2817, %v2813
    %v2819 = vlaneseq
    %v2820 = vshrl.u32 %v2819, 7
    %v2821 = vsub.s32 %v2578, %v2820
    %v2822 = vrot.slane %v2286, %v2821
    %v2823 = vsel %vm2583, %v2822, %v2818
    %v2824 = vlaneseq
    %v2825 = vshrl.u32 %v2824, 7
    %v2826 = vsub.s32 %v2585, %v2825
    %v2827 = vrot.slane %v2287, %v2826
    %v2828 = vsel %vm2590, %v2827, %v2823
    %v2829 = vlaneseq
    %v2830 = vshrl.u32 %v2829, 7
    %v2831 = vsub.s32 %v2353, %v2830
    %v2832 = vrot.slane %v2288, %v2831
    %v2833 = vlaneseq
    %v2834 = vshrl.u32 %v2833, 7
    %v2835 = vsub.s32 %v2487, %v2834
    %v2836 = vrot.slane %v2289, %v2835
    %v2837 = vsel %vm2492, %v2836, %v2832
    %v2838 = vlaneseq
    %v2839 = vshrl.u32 %v2838, 7
    %v2840 = vsub.s32 %v2494, %v2839
    %v2841 = vrot.slane %v2290, %v2840
    %v2842 = vsel %vm2499, %v2841, %v2837
    %v2843 = vlaneseq
    %v2844 = vshrl.u32 %v2843, 7
    %v2845 = vsub.s32 %v2501, %v2844
    %v2846 = vrot.slane %v2291, %v2845
    %v2847 = vsel %vm2506, %v2846, %v2842
    %v2848 = vlaneseq
    %v2849 = vshrl.u32 %v2848, 7
    %v2850 = vsub.s32 %v2508, %v2849
    %v2851 = vrot.slane %v2292, %v2850
    %v2852 = vsel %vm2513, %v2851, %v2847
    %v2853 = vlaneseq
    %v2854 = vshrl.u32 %v2853, 7
    %v2855 = vsub.s32 %v2515, %v2854
    %v2856 = vrot.slane %v2293, %v2855
    %v2857 = vsel %vm2520, %v2856, %v2852
    %v2858 = vlaneseq
    %v2859 = vshrl.u32 %v2858, 7
    %v2860 = vsub.s32 %v2522, %v2859
    %v2861 = vrot.slane %v2294, %v2860
    %v2862 = vsel %vm2527, %v2861, %v2857
    %v2863 = vlaneseq
    %v2864 = vshrl.u32 %v2863, 7
    %v2865 = vsub.s32 %v2529, %v2864
    %v2866 = vrot.slane %v2295, %v2865
    %v2867 = vsel %vm2534, %v2866, %v2862
    %v2868 = vlaneseq
    %v2869 = vshrl.u32 %v2868, 7
    %v2870 = vsub.s32 %v2536, %v2869
    %v2871 = vrot.slane %v2296, %v2870
    %v2872 = vsel %vm2541, %v2871, %v2867
    %v2873 = vlaneseq
    %v2874 = vshrl.u32 %v2873, 7
    %v2875 = vsub.s32 %v2543, %v2874
    %v2876 = vrot.slane %v2297, %v2875
    %v2877 = vsel %vm2548, %v2876, %v2872
    %v2878 = vlaneseq
    %v2879 = vshrl.u32 %v2878, 7
    %v2880 = vsub.s32 %v2550, %v2879
    %v2881 = vrot.slane %v2298, %v2880
    %v2882 = vsel %vm2555, %v2881, %v2877
    %v2883 = vlaneseq
    %v2884 = vshrl.u32 %v2883, 7
    %v2885 = vsub.s32 %v2557, %v2884
    %v2886 = vrot.slane %v2299, %v2885
    %v2887 = vsel %vm2562, %v2886, %v2882
    %v2888 = vlaneseq
    %v2889 = vshrl.u32 %v2888, 7
    %v2890 = vsub.s32 %v2564, %v2889
    %v2891 = vrot.slane %v2300, %v2890
    %v2892 = vsel %vm2569, %v2891, %v2887
    %v2893 = vlaneseq
    %v2894 = vshrl.u32 %v2893, 7
    %v2895 = vsub.s32 %v2571, %v2894
    %v2896 = vrot.slane %v2301, %v2895
    %v2897 = vsel %vm2576, %v2896, %v2892
    %v2898 = vlaneseq
    %v2899 = vshrl.u32 %v2898, 7
    %v2900 = vsub.s32 %v2578, %v2899
    %v2901 = vrot.slane %v2302, %v2900
    %v2902 = vsel %vm2583, %v2901, %v2897
    %v2903 = vlaneseq
    %v2904 = vshrl.u32 %v2903, 7
    %v2905 = vsub.s32 %v2585, %v2904
    %v2906 = vrot.slane %v2303, %v2905
    %v2907 = vsel %vm2590, %v2906, %v2902
    %v2908 = vlaneseq
    %v2909 = vshrl.u32 %v2908, 7
    %v2910 = vsub.s32 %v2353, %v2909
    %v2911 = vrot.slane %v2304, %v2910
    %v2912 = vlaneseq
    %v2913 = vshrl.u32 %v2912, 7
    %v2914 = vsub.s32 %v2487, %v2913
    %v2915 = vrot.slane %v2305, %v2914
    %v2916 = vsel %vm2492, %v2915, %v2911
    %v2917 = vlaneseq
    %v2918 = vshrl.u32 %v2917, 7
    %v2919 = vsub.s32 %v2494, %v2918
    %v2920 = vrot.slane %v2306, %v2919
    %v2921 = vsel %vm2499, %v2920, %v2916
    %v2922 = vlaneseq
    %v2923 = vshrl.u32 %v2922, 7
    %v2924 = vsub.s32 %v2501, %v2923
    %v2925 = vrot.slane %v2307, %v2924
    %v2926 = vsel %vm2506, %v2925, %v2921
    %v2927 = vlaneseq
    %v2928 = vshrl.u32 %v2927, 7
    %v2929 = vsub.s32 %v2508, %v2928
    %v2930 = vrot.slane %v2308, %v2929
    %v2931 = vsel %vm2513, %v2930, %v2926
    %v2932 = vlaneseq
    %v2933 = vshrl.u32 %v2932, 7
    %v2934 = vsub.s32 %v2515, %v2933
    %v2935 = vrot.slane %v2309, %v2934
    %v2936 = vsel %vm2520, %v2935, %v2931
    %v2937 = vlaneseq
    %v2938 = vshrl.u32 %v2937, 7
    %v2939 = vsub.s32 %v2522, %v2938
    %v2940 = vrot.slane %v2310, %v2939
    %v2941 = vsel %vm2527, %v2940, %v2936
    %v2942 = vlaneseq
    %v2943 = vshrl.u32 %v2942, 7
    %v2944 = vsub.s32 %v2529, %v2943
    %v2945 = vrot.slane %v2311, %v2944
    %v2946 = vsel %vm2534, %v2945, %v2941
    %v2947 = vlaneseq
    %v2948 = vshrl.u32 %v2947, 7
    %v2949 = vsub.s32 %v2536, %v2948
    %v2950 = vrot.slane %v2312, %v2949
    %v2951 = vsel %vm2541, %v2950, %v2946
    %v2952 = vlaneseq
    %v2953 = vshrl.u32 %v2952, 7
    %v2954 = vsub.s32 %v2543, %v2953
    %v2955 = vrot.slane %v2313, %v2954
    %v2956 = vsel %vm2548, %v2955, %v2951
    %v2957 = vlaneseq
    %v2958 = vshrl.u32 %v2957, 7
    %v2959 = vsub.s32 %v2550, %v2958
    %v2960 = vrot.slane %v2314, %v2959
    %v2961 = vsel %vm2555, %v2960, %v2956
    %v2962 = vlaneseq
    %v2963 = vshrl.u32 %v2962, 7
    %v2964 = vsub.s32 %v2557, %v2963
    %v2965 = vrot.slane %v2315, %v2964
    %v2966 = vsel %vm2562, %v2965, %v2961
    %v2967 = vlaneseq
    %v2968 = vshrl.u32 %v2967, 7
    %v2969 = vsub.s32 %v2564, %v2968
    %v2970 = vrot.slane %v2316, %v2969
    %v2971 = vsel %vm2569, %v2970, %v2966
    %v2972 = vlaneseq
    %v2973 = vshrl.u32 %v2972, 7
    %v2974 = vsub.s32 %v2571, %v2973
    %v2975 = vrot.slane %v2317, %v2974
    %v2976 = vsel %vm2576, %v2975, %v2971
    %v2977 = vlaneseq
    %v2978 = vshrl.u32 %v2977, 7
    %v2979 = vsub.s32 %v2578, %v2978
    %v2980 = vrot.slane %v2318, %v2979
    %v2981 = vsel %vm2583, %v2980, %v2976
    %v2982 = vlaneseq
    %v2983 = vshrl.u32 %v2982, 7
    %v2984 = vsub.s32 %v2585, %v2983
    %v2985 = vrot.slane %v2319, %v2984
    %v2986 = vsel %vm2590, %v2985, %v2981
    %v2987 = vlaneseq
    %v2988 = vshrl.u32 %v2987, 7
    %v2989 = vsub.s32 %v2353, %v2988
    %v2990 = vrot.slane %v2320, %v2989
    %v2991 = vlaneseq
    %v2992 = vshrl.u32 %v2991, 7
    %v2993 = vsub.s32 %v2487, %v2992
    %v2994 = vrot.slane %v2321, %v2993
    %v2995 = vsel %vm2492, %v2994, %v2990
    %v2996 = vlaneseq
    %v2997 = vshrl.u32 %v2996, 7
    %v2998 = vsub.s32 %v2494, %v2997
    %v2999 = vrot.slane %v2322, %v2998
    %v3000 = vsel %vm2499, %v2999, %v2995
    %v3001 = vlaneseq
    %v3002 = vshrl.u32 %v3001, 7
    %v3003 = vsub.s32 %v2501, %v3002
    %v3004 = vrot.slane %v2323, %v3003
    %v3005 = vsel %vm2506, %v3004, %v3000
    %v3006 = vlaneseq
    %v3007 = vshrl.u32 %v3006, 7
    %v3008 = vsub.s32 %v2508, %v3007
    %v3009 = vrot.slane %v2324, %v3008
    %v3010 = vsel %vm2513, %v3009, %v3005
    %v3011 = vlaneseq
    %v3012 = vshrl.u32 %v3011, 7
    %v3013 = vsub.s32 %v2515, %v3012
    %v3014 = vrot.slane %v2325, %v3013
    %v3015 = vsel %vm2520, %v3014, %v3010
    %v3016 = vlaneseq
    %v3017 = vshrl.u32 %v3016, 7
    %v3018 = vsub.s32 %v2522, %v3017
    %v3019 = vrot.slane %v2326, %v3018
    %v3020 = vsel %vm2527, %v3019, %v3015
    %v3021 = vlaneseq
    %v3022 = vshrl.u32 %v3021, 7
    %v3023 = vsub.s32 %v2529, %v3022
    %v3024 = vrot.slane %v2327, %v3023
    %v3025 = vsel %vm2534, %v3024, %v3020
    %v3026 = vlaneseq
    %v3027 = vshrl.u32 %v3026, 7
    %v3028 = vsub.s32 %v2536, %v3027
    %v3029 = vrot.slane %v2328, %v3028
    %v3030 = vsel %vm2541, %v3029, %v3025
    %v3031 = vlaneseq
    %v3032 = vshrl.u32 %v3031, 7
    %v3033 = vsub.s32 %v2543, %v3032
    %v3034 = vrot.slane %v2329, %v3033
    %v3035 = vsel %vm2548, %v3034, %v3030
    %v3036 = vlaneseq
    %v3037 = vshrl.u32 %v3036, 7
    %v3038 = vsub.s32 %v2550, %v3037
    %v3039 = vrot.slane %v2330, %v3038
    %v3040 = vsel %vm2555, %v3039, %v3035
    %v3041 = vlaneseq
    %v3042 = vshrl.u32 %v3041, 7
    %v3043 = vsub.s32 %v2557, %v3042
    %v3044 = vrot.slane %v2331, %v3043
    %v3045 = vsel %vm2562, %v3044, %v3040
    %v3046 = vlaneseq
    %v3047 = vshrl.u32 %v3046, 7
    %v3048 = vsub.s32 %v2564, %v3047
    %v3049 = vrot.slane %v2332, %v3048
    %v3050 = vsel %vm2569, %v3049, %v3045
    %v3051 = vlaneseq
    %v3052 = vshrl.u32 %v3051, 7
    %v3053 = vsub.s32 %v2571, %v3052
    %v3054 = vrot.slane %v2333, %v3053
    %v3055 = vsel %vm2576, %v3054, %v3050
    %v3056 = vlaneseq
    %v3057 = vshrl.u32 %v3056, 7
    %v3058 = vsub.s32 %v2578, %v3057
    %v3059 = vrot.slane %v2334, %v3058
    %v3060 = vsel %vm2583, %v3059, %v3055
    %v3061 = vlaneseq
    %v3062 = vshrl.u32 %v3061, 7
    %v3063 = vsub.s32 %v2585, %v3062
    %v3064 = vrot.slane %v2335, %v3063
    %v3065 = vsel %vm2590, %v3064, %v3060
    %v3066 = vlaneseq
    %v3067 = vshrl.u32 %v3066, 7
    %v3068 = vsub.s32 %v2353, %v3067
    %v3069 = vrot.slane %v2336, %v3068
    %v3070 = vlaneseq
    %v3071 = vshrl.u32 %v3070, 7
    %v3072 = vsub.s32 %v2487, %v3071
    %v3073 = vrot.slane %v2337, %v3072
    %v3074 = vsel %vm2492, %v3073, %v3069
    %v3075 = vlaneseq
    %v3076 = vshrl.u32 %v3075, 7
    %v3077 = vsub.s32 %v2494, %v3076
    %v3078 = vrot.slane %v2338, %v3077
    %v3079 = vsel %vm2499, %v3078, %v3074
    %v3080 = vlaneseq
    %v3081 = vshrl.u32 %v3080, 7
    %v3082 = vsub.s32 %v2501, %v3081
    %v3083 = vrot.slane %v2339, %v3082
    %v3084 = vsel %vm2506, %v3083, %v3079
    %v3085 = vlaneseq
    %v3086 = vshrl.u32 %v3085, 7
    %v3087 = vsub.s32 %v2508, %v3086
    %v3088 = vrot.slane %v2340, %v3087
    %v3089 = vsel %vm2513, %v3088, %v3084
    %v3090 = vlaneseq
    %v3091 = vshrl.u32 %v3090, 7
    %v3092 = vsub.s32 %v2515, %v3091
    %v3093 = vrot.slane %v2341, %v3092
    %v3094 = vsel %vm2520, %v3093, %v3089
    %v3095 = vlaneseq
    %v3096 = vshrl.u32 %v3095, 7
    %v3097 = vsub.s32 %v2522, %v3096
    %v3098 = vrot.slane %v2342, %v3097
    %v3099 = vsel %vm2527, %v3098, %v3094
    %v3100 = vlaneseq
    %v3101 = vshrl.u32 %v3100, 7
    %v3102 = vsub.s32 %v2529, %v3101
    %v3103 = vrot.slane %v2343, %v3102
    %v3104 = vsel %vm2534, %v3103, %v3099
    %v3105 = vlaneseq
    %v3106 = vshrl.u32 %v3105, 7
    %v3107 = vsub.s32 %v2536, %v3106
    %v3108 = vrot.slane %v2344, %v3107
    %v3109 = vsel %vm2541, %v3108, %v3104
    %v3110 = vlaneseq
    %v3111 = vshrl.u32 %v3110, 7
    %v3112 = vsub.s32 %v2543, %v3111
    %v3113 = vrot.slane %v2345, %v3112
    %v3114 = vsel %vm2548, %v3113, %v3109
    %v3115 = vlaneseq
    %v3116 = vshrl.u32 %v3115, 7
    %v3117 = vsub.s32 %v2550, %v3116
    %v3118 = vrot.slane %v2346, %v3117
    %v3119 = vsel %vm2555, %v3118, %v3114
    %v3120 = vlaneseq
    %v3121 = vshrl.u32 %v3120, 7
    %v3122 = vsub.s32 %v2557, %v3121
    %v3123 = vrot.slane %v2347, %v3122
    %v3124 = vsel %vm2562, %v3123, %v3119
    %v3125 = vlaneseq
    %v3126 = vshrl.u32 %v3125, 7
    %v3127 = vsub.s32 %v2564, %v3126
    %v3128 = vrot.slane %v2348, %v3127
    %v3129 = vsel %vm2569, %v3128, %v3124
    %v3130 = vlaneseq
    %v3131 = vshrl.u32 %v3130, 7
    %v3132 = vsub.s32 %v2571, %v3131
    %v3133 = vrot.slane %v2349, %v3132
    %v3134 = vsel %vm2576, %v3133, %v3129
    %v3135 = vlaneseq
    %v3136 = vshrl.u32 %v3135, 7
    %v3137 = vsub.s32 %v2578, %v3136
    %v3138 = vrot.slane %v2350, %v3137
    %v3139 = vsel %vm2583, %v3138, %v3134
    %v3140 = vlaneseq
    %v3141 = vshrl.u32 %v3140, 7
    %v3142 = vsub.s32 %v2585, %v3141
    %v3143 = vrot.slane %v2351, %v3142
    %v3144 = vsel %vm2590, %v3143, %v3139
    %vm3145 = vcmask 1041409
    %v3146 = vsel %vm3145, %v2670, %v2591
    %vm3147 = vcmask 1042434
    %v3148 = vsel %vm3147, %v2749, %v3146
    %vm3149 = vcmask 1043459
    %v3150 = vsel %vm3149, %v2828, %v3148
    %vm3151 = vcmask 1044484
    %v3152 = vsel %vm3151, %v2907, %v3150
    %vm3153 = vcmask 1045509
    %v3154 = vsel %vm3153, %v2986, %v3152
    %vm3155 = vcmask 1046534
    %v3156 = vsel %vm3155, %v3065, %v3154
    %vm3157 = vcmask 1047559
    %v3158 = vsel %vm3157, %v3144, %v3156
    %v3160 = vsel %vm2354, %v3158, -inf
    %3161 = vmax.xlane.f32.xlu0 %v3160
    %v3162 = vpop.xlane.xlu0 %3161
    %v3163 = vsub.f32 %v3160, %v3162
    %v3164 = vmul.f32 %v3163, 1.442695
    %v3165 = vpow.pop %v3164
    %3166 = vadd.xlane.f32.xlu0 %v3165
    %v3167 = vpop.xlane.xlu0 %3166
    %v3168 = vrcp.pop %v3167
    %v3169 = vmul.f32 %v3165, %v3168
    %v3170 = vlaneseq
    %v3171 = vshrl.u32 %v3170, 7
    %v3172 = vsub.s32 0, %v3171
    %v3173 = vrot.slane %v3169, %v3172
    %3175 = vbcast.lane.b32.xlu0 %v3173, 256
    %v3176 = vpop.permute.xlu0 %3175
    %s3178 = sor.u32 256, 8
    %3179 = vbcast.lane.b32.xlu0 %v3173, %s3178
    %v3180 = vpop.permute.xlu0 %3179
    %s3182 = sor.u32 256, 16
    %3183 = vbcast.lane.b32.xlu0 %v3173, %s3182
    %v3184 = vpop.permute.xlu0 %3183
    %s3186 = sor.u32 256, 24
    %3187 = vbcast.lane.b32.xlu0 %v3173, %s3186
    %v3188 = vpop.permute.xlu0 %3187
    %s3190 = sor.u32 256, 32
    %3191 = vbcast.lane.b32.xlu0 %v3173, %s3190
    %v3192 = vpop.permute.xlu0 %3191
    %s3194 = sor.u32 256, 40
    %3195 = vbcast.lane.b32.xlu0 %v3173, %s3194
    %v3196 = vpop.permute.xlu0 %3195
    %s3198 = sor.u32 256, 48
    %3199 = vbcast.lane.b32.xlu0 %v3173, %s3198
    %v3200 = vpop.permute.xlu0 %3199
    %s3202 = sor.u32 256, 56
    %3203 = vbcast.lane.b32.xlu0 %v3173, %s3202
    %v3204 = vpop.permute.xlu0 %3203
    %s3206 = sor.u32 256, 64
    %3207 = vbcast.lane.b32.xlu0 %v3173, %s3206
    %v3208 = vpop.permute.xlu0 %3207
    %s3210 = sor.u32 256, 72
    %3211 = vbcast.lane.b32.xlu0 %v3173, %s3210
    %v3212 = vpop.permute.xlu0 %3211
    %s3214 = sor.u32 256, 80
    %3215 = vbcast.lane.b32.xlu0 %v3173, %s3214
    %v3216 = vpop.permute.xlu0 %3215
    %s3218 = sor.u32 256, 88
    %3219 = vbcast.lane.b32.xlu0 %v3173, %s3218
    %v3220 = vpop.permute.xlu0 %3219
    %s3222 = sor.u32 256, 96
    %3223 = vbcast.lane.b32.xlu0 %v3173, %s3222
    %v3224 = vpop.permute.xlu0 %3223
    %s3226 = sor.u32 256, 104
    %3227 = vbcast.lane.b32.xlu0 %v3173, %s3226
    %v3228 = vpop.permute.xlu0 %3227
    %s3230 = sor.u32 256, 112
    %3231 = vbcast.lane.b32.xlu0 %v3173, %s3230
    %v3232 = vpop.permute.xlu0 %3231
    %s3234 = sor.u32 256, 120
    %3235 = vbcast.lane.b32.xlu0 %v3173, %s3234
    %v3236 = vpop.permute.xlu0 %3235
    %v3237 = vlaneseq
    %v3238 = vshrl.u32 %v3237, 7
    %v3239 = vsub.s32 1, %v3238
    %v3240 = vrot.slane %v3169, %v3239
    %3242 = vbcast.lane.b32.xlu0 %v3240, 256
    %v3243 = vpop.permute.xlu0 %3242
    %s3245 = sor.u32 256, 8
    %3246 = vbcast.lane.b32.xlu0 %v3240, %s3245
    %v3247 = vpop.permute.xlu0 %3246
    %s3249 = sor.u32 256, 16
    %3250 = vbcast.lane.b32.xlu0 %v3240, %s3249
    %v3251 = vpop.permute.xlu0 %3250
    %s3253 = sor.u32 256, 24
    %3254 = vbcast.lane.b32.xlu0 %v3240, %s3253
    %v3255 = vpop.permute.xlu0 %3254
    %s3257 = sor.u32 256, 32
    %3258 = vbcast.lane.b32.xlu0 %v3240, %s3257
    %v3259 = vpop.permute.xlu0 %3258
    %s3261 = sor.u32 256, 40
    %3262 = vbcast.lane.b32.xlu0 %v3240, %s3261
    %v3263 = vpop.permute.xlu0 %3262
    %s3265 = sor.u32 256, 48
    %3266 = vbcast.lane.b32.xlu0 %v3240, %s3265
    %v3267 = vpop.permute.xlu0 %3266
    %s3269 = sor.u32 256, 56
    %3270 = vbcast.lane.b32.xlu0 %v3240, %s3269
    %v3271 = vpop.permute.xlu0 %3270
    %s3273 = sor.u32 256, 64
    %3274 = vbcast.lane.b32.xlu0 %v3240, %s3273
    %v3275 = vpop.permute.xlu0 %3274
    %s3277 = sor.u32 256, 72
    %3278 = vbcast.lane.b32.xlu0 %v3240, %s3277
    %v3279 = vpop.permute.xlu0 %3278
    %s3281 = sor.u32 256, 80
    %3282 = vbcast.lane.b32.xlu0 %v3240, %s3281
    %v3283 = vpop.permute.xlu0 %3282
    %s3285 = sor.u32 256, 88
    %3286 = vbcast.lane.b32.xlu0 %v3240, %s3285
    %v3287 = vpop.permute.xlu0 %3286
    %s3289 = sor.u32 256, 96
    %3290 = vbcast.lane.b32.xlu0 %v3240, %s3289
    %v3291 = vpop.permute.xlu0 %3290
    %s3293 = sor.u32 256, 104
    %3294 = vbcast.lane.b32.xlu0 %v3240, %s3293
    %v3295 = vpop.permute.xlu0 %3294
    %s3297 = sor.u32 256, 112
    %3298 = vbcast.lane.b32.xlu0 %v3240, %s3297
    %v3299 = vpop.permute.xlu0 %3298
    %s3301 = sor.u32 256, 120
    %3302 = vbcast.lane.b32.xlu0 %v3240, %s3301
    %v3303 = vpop.permute.xlu0 %3302
    %v3304 = vlaneseq
    %v3305 = vshrl.u32 %v3304, 7
    %v3306 = vsub.s32 2, %v3305
    %v3307 = vrot.slane %v3169, %v3306
    %3309 = vbcast.lane.b32.xlu0 %v3307, 256
    %v3310 = vpop.permute.xlu0 %3309
    %s3312 = sor.u32 256, 8
    %3313 = vbcast.lane.b32.xlu0 %v3307, %s3312
    %v3314 = vpop.permute.xlu0 %3313
    %s3316 = sor.u32 256, 16
    %3317 = vbcast.lane.b32.xlu0 %v3307, %s3316
    %v3318 = vpop.permute.xlu0 %3317
    %s3320 = sor.u32 256, 24
    %3321 = vbcast.lane.b32.xlu0 %v3307, %s3320
    %v3322 = vpop.permute.xlu0 %3321
    %s3324 = sor.u32 256, 32
    %3325 = vbcast.lane.b32.xlu0 %v3307, %s3324
    %v3326 = vpop.permute.xlu0 %3325
    %s3328 = sor.u32 256, 40
    %3329 = vbcast.lane.b32.xlu0 %v3307, %s3328
    %v3330 = vpop.permute.xlu0 %3329
    %s3332 = sor.u32 256, 48
    %3333 = vbcast.lane.b32.xlu0 %v3307, %s3332
    %v3334 = vpop.permute.xlu0 %3333
    %s3336 = sor.u32 256, 56
    %3337 = vbcast.lane.b32.xlu0 %v3307, %s3336
    %v3338 = vpop.permute.xlu0 %3337
    %s3340 = sor.u32 256, 64
    %3341 = vbcast.lane.b32.xlu0 %v3307, %s3340
    %v3342 = vpop.permute.xlu0 %3341
    %s3344 = sor.u32 256, 72
    %3345 = vbcast.lane.b32.xlu0 %v3307, %s3344
    %v3346 = vpop.permute.xlu0 %3345
    %s3348 = sor.u32 256, 80
    %3349 = vbcast.lane.b32.xlu0 %v3307, %s3348
    %v3350 = vpop.permute.xlu0 %3349
    %s3352 = sor.u32 256, 88
    %3353 = vbcast.lane.b32.xlu0 %v3307, %s3352
    %v3354 = vpop.permute.xlu0 %3353
    %s3356 = sor.u32 256, 96
    %3357 = vbcast.lane.b32.xlu0 %v3307, %s3356
    %v3358 = vpop.permute.xlu0 %3357
    %s3360 = sor.u32 256, 104
    %3361 = vbcast.lane.b32.xlu0 %v3307, %s3360
    %v3362 = vpop.permute.xlu0 %3361
    %s3364 = sor.u32 256, 112
    %3365 = vbcast.lane.b32.xlu0 %v3307, %s3364
    %v3366 = vpop.permute.xlu0 %3365
    %s3368 = sor.u32 256, 120
    %3369 = vbcast.lane.b32.xlu0 %v3307, %s3368
    %v3370 = vpop.permute.xlu0 %3369
    %v3371 = vlaneseq
    %v3372 = vshrl.u32 %v3371, 7
    %v3373 = vsub.s32 3, %v3372
    %v3374 = vrot.slane %v3169, %v3373
    %3376 = vbcast.lane.b32.xlu0 %v3374, 256
    %v3377 = vpop.permute.xlu0 %3376
    %s3379 = sor.u32 256, 8
    %3380 = vbcast.lane.b32.xlu0 %v3374, %s3379
    %v3381 = vpop.permute.xlu0 %3380
    %s3383 = sor.u32 256, 16
    %3384 = vbcast.lane.b32.xlu0 %v3374, %s3383
    %v3385 = vpop.permute.xlu0 %3384
    %s3387 = sor.u32 256, 24
    %3388 = vbcast.lane.b32.xlu0 %v3374, %s3387
    %v3389 = vpop.permute.xlu0 %3388
    %s3391 = sor.u32 256, 32
    %3392 = vbcast.lane.b32.xlu0 %v3374, %s3391
    %v3393 = vpop.permute.xlu0 %3392
    %s3395 = sor.u32 256, 40
    %3396 = vbcast.lane.b32.xlu0 %v3374, %s3395
    %v3397 = vpop.permute.xlu0 %3396
    %s3399 = sor.u32 256, 48
    %3400 = vbcast.lane.b32.xlu0 %v3374, %s3399
    %v3401 = vpop.permute.xlu0 %3400
    %s3403 = sor.u32 256, 56
    %3404 = vbcast.lane.b32.xlu0 %v3374, %s3403
    %v3405 = vpop.permute.xlu0 %3404
    %s3407 = sor.u32 256, 64
    %3408 = vbcast.lane.b32.xlu0 %v3374, %s3407
    %v3409 = vpop.permute.xlu0 %3408
    %s3411 = sor.u32 256, 72
    %3412 = vbcast.lane.b32.xlu0 %v3374, %s3411
    %v3413 = vpop.permute.xlu0 %3412
    %s3415 = sor.u32 256, 80
    %3416 = vbcast.lane.b32.xlu0 %v3374, %s3415
    %v3417 = vpop.permute.xlu0 %3416
    %s3419 = sor.u32 256, 88
    %3420 = vbcast.lane.b32.xlu0 %v3374, %s3419
    %v3421 = vpop.permute.xlu0 %3420
    %s3423 = sor.u32 256, 96
    %3424 = vbcast.lane.b32.xlu0 %v3374, %s3423
    %v3425 = vpop.permute.xlu0 %3424
    %s3427 = sor.u32 256, 104
    %3428 = vbcast.lane.b32.xlu0 %v3374, %s3427
    %v3429 = vpop.permute.xlu0 %3428
    %s3431 = sor.u32 256, 112
    %3432 = vbcast.lane.b32.xlu0 %v3374, %s3431
    %v3433 = vpop.permute.xlu0 %3432
    %s3435 = sor.u32 256, 120
    %3436 = vbcast.lane.b32.xlu0 %v3374, %s3435
    %v3437 = vpop.permute.xlu0 %3436
    %v3438 = vlaneseq
    %v3439 = vshrl.u32 %v3438, 7
    %v3440 = vsub.s32 4, %v3439
    %v3441 = vrot.slane %v3169, %v3440
    %3443 = vbcast.lane.b32.xlu0 %v3441, 256
    %v3444 = vpop.permute.xlu0 %3443
    %s3446 = sor.u32 256, 8
    %3447 = vbcast.lane.b32.xlu0 %v3441, %s3446
    %v3448 = vpop.permute.xlu0 %3447
    %s3450 = sor.u32 256, 16
    %3451 = vbcast.lane.b32.xlu0 %v3441, %s3450
    %v3452 = vpop.permute.xlu0 %3451
    %s3454 = sor.u32 256, 24
    %3455 = vbcast.lane.b32.xlu0 %v3441, %s3454
    %v3456 = vpop.permute.xlu0 %3455
    %s3458 = sor.u32 256, 32
    %3459 = vbcast.lane.b32.xlu0 %v3441, %s3458
    %v3460 = vpop.permute.xlu0 %3459
    %s3462 = sor.u32 256, 40
    %3463 = vbcast.lane.b32.xlu0 %v3441, %s3462
    %v3464 = vpop.permute.xlu0 %3463
    %s3466 = sor.u32 256, 48
    %3467 = vbcast.lane.b32.xlu0 %v3441, %s3466
    %v3468 = vpop.permute.xlu0 %3467
    %s3470 = sor.u32 256, 56
    %3471 = vbcast.lane.b32.xlu0 %v3441, %s3470
    %v3472 = vpop.permute.xlu0 %3471
    %s3474 = sor.u32 256, 64
    %3475 = vbcast.lane.b32.xlu0 %v3441, %s3474
    %v3476 = vpop.permute.xlu0 %3475
    %s3478 = sor.u32 256, 72
    %3479 = vbcast.lane.b32.xlu0 %v3441, %s3478
    %v3480 = vpop.permute.xlu0 %3479
    %s3482 = sor.u32 256, 80
    %3483 = vbcast.lane.b32.xlu0 %v3441, %s3482
    %v3484 = vpop.permute.xlu0 %3483
    %s3486 = sor.u32 256, 88
    %3487 = vbcast.lane.b32.xlu0 %v3441, %s3486
    %v3488 = vpop.permute.xlu0 %3487
    %s3490 = sor.u32 256, 96
    %3491 = vbcast.lane.b32.xlu0 %v3441, %s3490
    %v3492 = vpop.permute.xlu0 %3491
    %s3494 = sor.u32 256, 104
    %3495 = vbcast.lane.b32.xlu0 %v3441, %s3494
    %v3496 = vpop.permute.xlu0 %3495
    %s3498 = sor.u32 256, 112
    %3499 = vbcast.lane.b32.xlu0 %v3441, %s3498
    %v3500 = vpop.permute.xlu0 %3499
    %s3502 = sor.u32 256, 120
    %3503 = vbcast.lane.b32.xlu0 %v3441, %s3502
    %v3504 = vpop.permute.xlu0 %3503
    %v3505 = vlaneseq
    %v3506 = vshrl.u32 %v3505, 7
    %v3507 = vsub.s32 5, %v3506
    %v3508 = vrot.slane %v3169, %v3507
    %3510 = vbcast.lane.b32.xlu0 %v3508, 256
    %v3511 = vpop.permute.xlu0 %3510
    %s3513 = sor.u32 256, 8
    %3514 = vbcast.lane.b32.xlu0 %v3508, %s3513
    %v3515 = vpop.permute.xlu0 %3514
    %s3517 = sor.u32 256, 16
    %3518 = vbcast.lane.b32.xlu0 %v3508, %s3517
    %v3519 = vpop.permute.xlu0 %3518
    %s3521 = sor.u32 256, 24
    %3522 = vbcast.lane.b32.xlu0 %v3508, %s3521
    %v3523 = vpop.permute.xlu0 %3522
    %s3525 = sor.u32 256, 32
    %3526 = vbcast.lane.b32.xlu0 %v3508, %s3525
    %v3527 = vpop.permute.xlu0 %3526
    %s3529 = sor.u32 256, 40
    %3530 = vbcast.lane.b32.xlu0 %v3508, %s3529
    %v3531 = vpop.permute.xlu0 %3530
    %s3533 = sor.u32 256, 48
    %3534 = vbcast.lane.b32.xlu0 %v3508, %s3533
    %v3535 = vpop.permute.xlu0 %3534
    %s3537 = sor.u32 256, 56
    %3538 = vbcast.lane.b32.xlu0 %v3508, %s3537
    %v3539 = vpop.permute.xlu0 %3538
    %s3541 = sor.u32 256, 64
    %3542 = vbcast.lane.b32.xlu0 %v3508, %s3541
    %v3543 = vpop.permute.xlu0 %3542
    %s3545 = sor.u32 256, 72
    %3546 = vbcast.lane.b32.xlu0 %v3508, %s3545
    %v3547 = vpop.permute.xlu0 %3546
    %s3549 = sor.u32 256, 80
    %3550 = vbcast.lane.b32.xlu0 %v3508, %s3549
    %v3551 = vpop.permute.xlu0 %3550
    %s3553 = sor.u32 256, 88
    %3554 = vbcast.lane.b32.xlu0 %v3508, %s3553
    %v3555 = vpop.permute.xlu0 %3554
    %s3557 = sor.u32 256, 96
    %3558 = vbcast.lane.b32.xlu0 %v3508, %s3557
    %v3559 = vpop.permute.xlu0 %3558
    %s3561 = sor.u32 256, 104
    %3562 = vbcast.lane.b32.xlu0 %v3508, %s3561
    %v3563 = vpop.permute.xlu0 %3562
    %s3565 = sor.u32 256, 112
    %3566 = vbcast.lane.b32.xlu0 %v3508, %s3565
    %v3567 = vpop.permute.xlu0 %3566
    %s3569 = sor.u32 256, 120
    %3570 = vbcast.lane.b32.xlu0 %v3508, %s3569
    %v3571 = vpop.permute.xlu0 %3570
    %v3572 = vlaneseq
    %v3573 = vshrl.u32 %v3572, 7
    %v3574 = vsub.s32 6, %v3573
    %v3575 = vrot.slane %v3169, %v3574
    %3577 = vbcast.lane.b32.xlu0 %v3575, 256
    %v3578 = vpop.permute.xlu0 %3577
    %s3580 = sor.u32 256, 8
    %3581 = vbcast.lane.b32.xlu0 %v3575, %s3580
    %v3582 = vpop.permute.xlu0 %3581
    %s3584 = sor.u32 256, 16
    %3585 = vbcast.lane.b32.xlu0 %v3575, %s3584
    %v3586 = vpop.permute.xlu0 %3585
    %s3588 = sor.u32 256, 24
    %3589 = vbcast.lane.b32.xlu0 %v3575, %s3588
    %v3590 = vpop.permute.xlu0 %3589
    %s3592 = sor.u32 256, 32
    %3593 = vbcast.lane.b32.xlu0 %v3575, %s3592
    %v3594 = vpop.permute.xlu0 %3593
    %s3596 = sor.u32 256, 40
    %3597 = vbcast.lane.b32.xlu0 %v3575, %s3596
    %v3598 = vpop.permute.xlu0 %3597
    %s3600 = sor.u32 256, 48
    %3601 = vbcast.lane.b32.xlu0 %v3575, %s3600
    %v3602 = vpop.permute.xlu0 %3601
    %s3604 = sor.u32 256, 56
    %3605 = vbcast.lane.b32.xlu0 %v3575, %s3604
    %v3606 = vpop.permute.xlu0 %3605
    %s3608 = sor.u32 256, 64
    %3609 = vbcast.lane.b32.xlu0 %v3575, %s3608
    %v3610 = vpop.permute.xlu0 %3609
    %s3612 = sor.u32 256, 72
    %3613 = vbcast.lane.b32.xlu0 %v3575, %s3612
    %v3614 = vpop.permute.xlu0 %3613
    %s3616 = sor.u32 256, 80
    %3617 = vbcast.lane.b32.xlu0 %v3575, %s3616
    %v3618 = vpop.permute.xlu0 %3617
    %s3620 = sor.u32 256, 88
    %3621 = vbcast.lane.b32.xlu0 %v3575, %s3620
    %v3622 = vpop.permute.xlu0 %3621
    %s3624 = sor.u32 256, 96
    %3625 = vbcast.lane.b32.xlu0 %v3575, %s3624
    %v3626 = vpop.permute.xlu0 %3625
    %s3628 = sor.u32 256, 104
    %3629 = vbcast.lane.b32.xlu0 %v3575, %s3628
    %v3630 = vpop.permute.xlu0 %3629
    %s3632 = sor.u32 256, 112
    %3633 = vbcast.lane.b32.xlu0 %v3575, %s3632
    %v3634 = vpop.permute.xlu0 %3633
    %s3636 = sor.u32 256, 120
    %3637 = vbcast.lane.b32.xlu0 %v3575, %s3636
    %v3638 = vpop.permute.xlu0 %3637
    %v3639 = vlaneseq
    %v3640 = vshrl.u32 %v3639, 7
    %v3641 = vsub.s32 7, %v3640
    %v3642 = vrot.slane %v3169, %v3641
    %3644 = vbcast.lane.b32.xlu0 %v3642, 256
    %v3645 = vpop.permute.xlu0 %3644
    %s3647 = sor.u32 256, 8
    %3648 = vbcast.lane.b32.xlu0 %v3642, %s3647
    %v3649 = vpop.permute.xlu0 %3648
    %s3651 = sor.u32 256, 16
    %3652 = vbcast.lane.b32.xlu0 %v3642, %s3651
    %v3653 = vpop.permute.xlu0 %3652
    %s3655 = sor.u32 256, 24
    %3656 = vbcast.lane.b32.xlu0 %v3642, %s3655
    %v3657 = vpop.permute.xlu0 %3656
    %s3659 = sor.u32 256, 32
    %3660 = vbcast.lane.b32.xlu0 %v3642, %s3659
    %v3661 = vpop.permute.xlu0 %3660
    %s3663 = sor.u32 256, 40
    %3664 = vbcast.lane.b32.xlu0 %v3642, %s3663
    %v3665 = vpop.permute.xlu0 %3664
    %s3667 = sor.u32 256, 48
    %3668 = vbcast.lane.b32.xlu0 %v3642, %s3667
    %v3669 = vpop.permute.xlu0 %3668
    %s3671 = sor.u32 256, 56
    %3672 = vbcast.lane.b32.xlu0 %v3642, %s3671
    %v3673 = vpop.permute.xlu0 %3672
    %s3675 = sor.u32 256, 64
    %3676 = vbcast.lane.b32.xlu0 %v3642, %s3675
    %v3677 = vpop.permute.xlu0 %3676
    %s3679 = sor.u32 256, 72
    %3680 = vbcast.lane.b32.xlu0 %v3642, %s3679
    %v3681 = vpop.permute.xlu0 %3680
    %s3683 = sor.u32 256, 80
    %3684 = vbcast.lane.b32.xlu0 %v3642, %s3683
    %v3685 = vpop.permute.xlu0 %3684
    %s3687 = sor.u32 256, 88
    %3688 = vbcast.lane.b32.xlu0 %v3642, %s3687
    %v3689 = vpop.permute.xlu0 %3688
    %s3691 = sor.u32 256, 96
    %3692 = vbcast.lane.b32.xlu0 %v3642, %s3691
    %v3693 = vpop.permute.xlu0 %3692
    %s3695 = sor.u32 256, 104
    %3696 = vbcast.lane.b32.xlu0 %v3642, %s3695
    %v3697 = vpop.permute.xlu0 %3696
    %s3699 = sor.u32 256, 112
    %3700 = vbcast.lane.b32.xlu0 %v3642, %s3699
    %v3701 = vpop.permute.xlu0 %3700
    %s3703 = sor.u32 256, 120
    %3704 = vbcast.lane.b32.xlu0 %v3642, %s3703
    %v3705 = vpop.permute.xlu0 %3704
    %v3706 = vmul.f32 %v3176, %v35
    %v3707 = vmul.f32 %v3180, %v36
    %v3708 = vmul.f32 %v3184, %v37
    %v3709 = vmul.f32 %v3188, %v38
    %v3710 = vmul.f32 %v3192, %v39
    %v3711 = vmul.f32 %v3196, %v40
    %v3712 = vmul.f32 %v3200, %v41
    %v3713 = vmul.f32 %v3204, %v42
    %v3714 = vmul.f32 %v3208, %v43
    %v3715 = vmul.f32 %v3212, %v44
    %v3716 = vmul.f32 %v3216, %v45
    %v3717 = vmul.f32 %v3220, %v46
    %v3718 = vmul.f32 %v3224, %v47
    %v3719 = vmul.f32 %v3228, %v48
    %v3720 = vmul.f32 %v3232, %v49
    %v3721 = vmul.f32 %v3236, %v50
    %v3722 = vmul.f32 %v3243, %v51
    %v3723 = vmul.f32 %v3247, %v52
    %v3724 = vmul.f32 %v3251, %v53
    %v3725 = vmul.f32 %v3255, %v54
    %v3726 = vmul.f32 %v3259, %v55
    %v3727 = vmul.f32 %v3263, %v56
    %v3728 = vmul.f32 %v3267, %v57
    %v3729 = vmul.f32 %v3271, %v58
    %v3730 = vmul.f32 %v3275, %v59
    %v3731 = vmul.f32 %v3279, %v60
    %v3732 = vmul.f32 %v3283, %v61
    %v3733 = vmul.f32 %v3287, %v62
    %v3734 = vmul.f32 %v3291, %v63
    %v3735 = vmul.f32 %v3295, %v64
    %v3736 = vmul.f32 %v3299, %v65
    %v3737 = vmul.f32 %v3303, %v66
    %v3738 = vmul.f32 %v3310, %v67
    %v3739 = vmul.f32 %v3314, %v68
    %v3740 = vmul.f32 %v3318, %v69
    %v3741 = vmul.f32 %v3322, %v70
    %v3742 = vmul.f32 %v3326, %v71
    %v3743 = vmul.f32 %v3330, %v72
    %v3744 = vmul.f32 %v3334, %v73
    %v3745 = vmul.f32 %v3338, %v74
    %v3746 = vmul.f32 %v3342, %v75
    %v3747 = vmul.f32 %v3346, %v76
    %v3748 = vmul.f32 %v3350, %v77
    %v3749 = vmul.f32 %v3354, %v78
    %v3750 = vmul.f32 %v3358, %v79
    %v3751 = vmul.f32 %v3362, %v80
    %v3752 = vmul.f32 %v3366, %v81
    %v3753 = vmul.f32 %v3370, %v82
    %v3754 = vmul.f32 %v3377, %v83
    %v3755 = vmul.f32 %v3381, %v84
    %v3756 = vmul.f32 %v3385, %v85
    %v3757 = vmul.f32 %v3389, %v86
    %v3758 = vmul.f32 %v3393, %v87
    %v3759 = vmul.f32 %v3397, %v88
    %v3760 = vmul.f32 %v3401, %v89
    %v3761 = vmul.f32 %v3405, %v90
    %v3762 = vmul.f32 %v3409, %v91
    %v3763 = vmul.f32 %v3413, %v92
    %v3764 = vmul.f32 %v3417, %v93
    %v3765 = vmul.f32 %v3421, %v94
    %v3766 = vmul.f32 %v3425, %v95
    %v3767 = vmul.f32 %v3429, %v96
    %v3768 = vmul.f32 %v3433, %v97
    %v3769 = vmul.f32 %v3437, %v98
    %v3770 = vmul.f32 %v3444, %v99
    %v3771 = vmul.f32 %v3448, %v100
    %v3772 = vmul.f32 %v3452, %v101
    %v3773 = vmul.f32 %v3456, %v102
    %v3774 = vmul.f32 %v3460, %v103
    %v3775 = vmul.f32 %v3464, %v104
    %v3776 = vmul.f32 %v3468, %v105
    %v3777 = vmul.f32 %v3472, %v106
    %v3778 = vmul.f32 %v3476, %v107
    %v3779 = vmul.f32 %v3480, %v108
    %v3780 = vmul.f32 %v3484, %v109
    %v3781 = vmul.f32 %v3488, %v110
    %v3782 = vmul.f32 %v3492, %v111
    %v3783 = vmul.f32 %v3496, %v112
    %v3784 = vmul.f32 %v3500, %v113
    %v3785 = vmul.f32 %v3504, %v114
    %v3786 = vmul.f32 %v3511, %v115
    %v3787 = vmul.f32 %v3515, %v116
    %v3788 = vmul.f32 %v3519, %v117
    %v3789 = vmul.f32 %v3523, %v118
    %v3790 = vmul.f32 %v3527, %v119
    %v3791 = vmul.f32 %v3531, %v120
    %v3792 = vmul.f32 %v3535, %v121
    %v3793 = vmul.f32 %v3539, %v122
    %v3794 = vmul.f32 %v3543, %v123
    %v3795 = vmul.f32 %v3547, %v124
    %v3796 = vmul.f32 %v3551, %v125
    %v3797 = vmul.f32 %v3555, %v126
    %v3798 = vmul.f32 %v3559, %v127
    %v3799 = vmul.f32 %v3563, %v128
    %v3800 = vmul.f32 %v3567, %v129
    %v3801 = vmul.f32 %v3571, %v130
    %v3802 = vmul.f32 %v3578, %v131
    %v3803 = vmul.f32 %v3582, %v132
    %v3804 = vmul.f32 %v3586, %v133
    %v3805 = vmul.f32 %v3590, %v134
    %v3806 = vmul.f32 %v3594, %v135
    %v3807 = vmul.f32 %v3598, %v136
    %v3808 = vmul.f32 %v3602, %v137
    %v3809 = vmul.f32 %v3606, %v138
    %v3810 = vmul.f32 %v3610, %v139
    %v3811 = vmul.f32 %v3614, %v140
    %v3812 = vmul.f32 %v3618, %v141
    %v3813 = vmul.f32 %v3622, %v142
    %v3814 = vmul.f32 %v3626, %v143
    %v3815 = vmul.f32 %v3630, %v144
    %v3816 = vmul.f32 %v3634, %v145
    %v3817 = vmul.f32 %v3638, %v146
    %v3818 = vmul.f32 %v3645, %v147
    %v3819 = vmul.f32 %v3649, %v148
    %v3820 = vmul.f32 %v3653, %v149
    %v3821 = vmul.f32 %v3657, %v150
    %v3822 = vmul.f32 %v3661, %v151
    %v3823 = vmul.f32 %v3665, %v152
    %v3824 = vmul.f32 %v3669, %v153
    %v3825 = vmul.f32 %v3673, %v154
    %v3826 = vmul.f32 %v3677, %v155
    %v3827 = vmul.f32 %v3681, %v156
    %v3828 = vmul.f32 %v3685, %v157
    %v3829 = vmul.f32 %v3689, %v158
    %v3830 = vmul.f32 %v3693, %v159
    %v3831 = vmul.f32 %v3697, %v160
    %v3832 = vmul.f32 %v3701, %v161
    %v3833 = vmul.f32 %v3705, %v162
    %v3834 = vsel %vm175, %v3706, 0.0
    %v3835 = vsel %vm175, %v3707, 0.0
    %v3836 = vadd.f32 %v3834, %v3835
    %v3837 = vsel %vm175, %v3708, 0.0
    %v3838 = vadd.f32 %v3836, %v3837
    %v3839 = vsel %vm175, %v3709, 0.0
    %v3840 = vadd.f32 %v3838, %v3839
    %v3841 = vsel %vm175, %v3710, 0.0
    %v3842 = vadd.f32 %v3840, %v3841
    %v3843 = vsel %vm175, %v3711, 0.0
    %v3844 = vadd.f32 %v3842, %v3843
    %v3845 = vsel %vm175, %v3712, 0.0
    %v3846 = vadd.f32 %v3844, %v3845
    %v3847 = vsel %vm175, %v3713, 0.0
    %v3848 = vadd.f32 %v3846, %v3847
    %v3849 = vsel %vm175, %v3714, 0.0
    %v3850 = vadd.f32 %v3848, %v3849
    %v3851 = vsel %vm175, %v3715, 0.0
    %v3852 = vadd.f32 %v3850, %v3851
    %v3853 = vsel %vm175, %v3716, 0.0
    %v3854 = vadd.f32 %v3852, %v3853
    %v3855 = vsel %vm175, %v3717, 0.0
    %v3856 = vadd.f32 %v3854, %v3855
    %v3857 = vsel %vm175, %v3718, 0.0
    %v3858 = vadd.f32 %v3856, %v3857
    %v3859 = vsel %vm175, %v3719, 0.0
    %v3860 = vadd.f32 %v3858, %v3859
    %v3861 = vsel %vm175, %v3720, 0.0
    %v3862 = vadd.f32 %v3860, %v3861
    %v3863 = vsel %vm175, %v3721, 0.0
    %v3864 = vadd.f32 %v3862, %v3863
    %v3865 = vrot.slane %v3864, 4
    %v3866 = vadd.f32 %v3864, %v3865
    %v3867 = vrot.slane %v3866, 2
    %v3868 = vadd.f32 %v3866, %v3867
    %v3869 = vrot.slane %v3868, 1
    %v3870 = vadd.f32 %v3868, %v3869
    %v3871 = vsel %vm175, %v3722, 0.0
    %v3872 = vsel %vm175, %v3723, 0.0
    %v3873 = vadd.f32 %v3871, %v3872
    %v3874 = vsel %vm175, %v3724, 0.0
    %v3875 = vadd.f32 %v3873, %v3874
    %v3876 = vsel %vm175, %v3725, 0.0
    %v3877 = vadd.f32 %v3875, %v3876
    %v3878 = vsel %vm175, %v3726, 0.0
    %v3879 = vadd.f32 %v3877, %v3878
    %v3880 = vsel %vm175, %v3727, 0.0
    %v3881 = vadd.f32 %v3879, %v3880
    %v3882 = vsel %vm175, %v3728, 0.0
    %v3883 = vadd.f32 %v3881, %v3882
    %v3884 = vsel %vm175, %v3729, 0.0
    %v3885 = vadd.f32 %v3883, %v3884
    %v3886 = vsel %vm175, %v3730, 0.0
    %v3887 = vadd.f32 %v3885, %v3886
    %v3888 = vsel %vm175, %v3731, 0.0
    %v3889 = vadd.f32 %v3887, %v3888
    %v3890 = vsel %vm175, %v3732, 0.0
    %v3891 = vadd.f32 %v3889, %v3890
    %v3892 = vsel %vm175, %v3733, 0.0
    %v3893 = vadd.f32 %v3891, %v3892
    %v3894 = vsel %vm175, %v3734, 0.0
    %v3895 = vadd.f32 %v3893, %v3894
    %v3896 = vsel %vm175, %v3735, 0.0
    %v3897 = vadd.f32 %v3895, %v3896
    %v3898 = vsel %vm175, %v3736, 0.0
    %v3899 = vadd.f32 %v3897, %v3898
    %v3900 = vsel %vm175, %v3737, 0.0
    %v3901 = vadd.f32 %v3899, %v3900
    %v3902 = vrot.slane %v3901, 4
    %v3903 = vadd.f32 %v3901, %v3902
    %v3904 = vrot.slane %v3903, 2
    %v3905 = vadd.f32 %v3903, %v3904
    %v3906 = vrot.slane %v3905, 1
    %v3907 = vadd.f32 %v3905, %v3906
    %v3908 = vsel %vm175, %v3738, 0.0
    %v3909 = vsel %vm175, %v3739, 0.0
    %v3910 = vadd.f32 %v3908, %v3909
    %v3911 = vsel %vm175, %v3740, 0.0
    %v3912 = vadd.f32 %v3910, %v3911
    %v3913 = vsel %vm175, %v3741, 0.0
    %v3914 = vadd.f32 %v3912, %v3913
    %v3915 = vsel %vm175, %v3742, 0.0
    %v3916 = vadd.f32 %v3914, %v3915
    %v3917 = vsel %vm175, %v3743, 0.0
    %v3918 = vadd.f32 %v3916, %v3917
    %v3919 = vsel %vm175, %v3744, 0.0
    %v3920 = vadd.f32 %v3918, %v3919
    %v3921 = vsel %vm175, %v3745, 0.0
    %v3922 = vadd.f32 %v3920, %v3921
    %v3923 = vsel %vm175, %v3746, 0.0
    %v3924 = vadd.f32 %v3922, %v3923
    %v3925 = vsel %vm175, %v3747, 0.0
    %v3926 = vadd.f32 %v3924, %v3925
    %v3927 = vsel %vm175, %v3748, 0.0
    %v3928 = vadd.f32 %v3926, %v3927
    %v3929 = vsel %vm175, %v3749, 0.0
    %v3930 = vadd.f32 %v3928, %v3929
    %v3931 = vsel %vm175, %v3750, 0.0
    %v3932 = vadd.f32 %v3930, %v3931
    %v3933 = vsel %vm175, %v3751, 0.0
    %v3934 = vadd.f32 %v3932, %v3933
    %v3935 = vsel %vm175, %v3752, 0.0
    %v3936 = vadd.f32 %v3934, %v3935
    %v3937 = vsel %vm175, %v3753, 0.0
    %v3938 = vadd.f32 %v3936, %v3937
    %v3939 = vrot.slane %v3938, 4
    %v3940 = vadd.f32 %v3938, %v3939
    %v3941 = vrot.slane %v3940, 2
    %v3942 = vadd.f32 %v3940, %v3941
    %v3943 = vrot.slane %v3942, 1
    %v3944 = vadd.f32 %v3942, %v3943
    %v3945 = vsel %vm175, %v3754, 0.0
    %v3946 = vsel %vm175, %v3755, 0.0
    %v3947 = vadd.f32 %v3945, %v3946
    %v3948 = vsel %vm175, %v3756, 0.0
    %v3949 = vadd.f32 %v3947, %v3948
    %v3950 = vsel %vm175, %v3757, 0.0
    %v3951 = vadd.f32 %v3949, %v3950
    %v3952 = vsel %vm175, %v3758, 0.0
    %v3953 = vadd.f32 %v3951, %v3952
    %v3954 = vsel %vm175, %v3759, 0.0
    %v3955 = vadd.f32 %v3953, %v3954
    %v3956 = vsel %vm175, %v3760, 0.0
    %v3957 = vadd.f32 %v3955, %v3956
    %v3958 = vsel %vm175, %v3761, 0.0
    %v3959 = vadd.f32 %v3957, %v3958
    %v3960 = vsel %vm175, %v3762, 0.0
    %v3961 = vadd.f32 %v3959, %v3960
    %v3962 = vsel %vm175, %v3763, 0.0
    %v3963 = vadd.f32 %v3961, %v3962
    %v3964 = vsel %vm175, %v3764, 0.0
    %v3965 = vadd.f32 %v3963, %v3964
    %v3966 = vsel %vm175, %v3765, 0.0
    %v3967 = vadd.f32 %v3965, %v3966
    %v3968 = vsel %vm175, %v3766, 0.0
    %v3969 = vadd.f32 %v3967, %v3968
    %v3970 = vsel %vm175, %v3767, 0.0
    %v3971 = vadd.f32 %v3969, %v3970
    %v3972 = vsel %vm175, %v3768, 0.0
    %v3973 = vadd.f32 %v3971, %v3972
    %v3974 = vsel %vm175, %v3769, 0.0
    %v3975 = vadd.f32 %v3973, %v3974
    %v3976 = vrot.slane %v3975, 4
    %v3977 = vadd.f32 %v3975, %v3976
    %v3978 = vrot.slane %v3977, 2
    %v3979 = vadd.f32 %v3977, %v3978
    %v3980 = vrot.slane %v3979, 1
    %v3981 = vadd.f32 %v3979, %v3980
    %v3982 = vsel %vm175, %v3770, 0.0
    %v3983 = vsel %vm175, %v3771, 0.0
    %v3984 = vadd.f32 %v3982, %v3983
    %v3985 = vsel %vm175, %v3772, 0.0
    %v3986 = vadd.f32 %v3984, %v3985
    %v3987 = vsel %vm175, %v3773, 0.0
    %v3988 = vadd.f32 %v3986, %v3987
    %v3989 = vsel %vm175, %v3774, 0.0
    %v3990 = vadd.f32 %v3988, %v3989
    %v3991 = vsel %vm175, %v3775, 0.0
    %v3992 = vadd.f32 %v3990, %v3991
    %v3993 = vsel %vm175, %v3776, 0.0
    %v3994 = vadd.f32 %v3992, %v3993
    %v3995 = vsel %vm175, %v3777, 0.0
    %v3996 = vadd.f32 %v3994, %v3995
    %v3997 = vsel %vm175, %v3778, 0.0
    %v3998 = vadd.f32 %v3996, %v3997
    %v3999 = vsel %vm175, %v3779, 0.0
    %v4000 = vadd.f32 %v3998, %v3999
    %v4001 = vsel %vm175, %v3780, 0.0
    %v4002 = vadd.f32 %v4000, %v4001
    %v4003 = vsel %vm175, %v3781, 0.0
    %v4004 = vadd.f32 %v4002, %v4003
    %v4005 = vsel %vm175, %v3782, 0.0
    %v4006 = vadd.f32 %v4004, %v4005
    %v4007 = vsel %vm175, %v3783, 0.0
    %v4008 = vadd.f32 %v4006, %v4007
    %v4009 = vsel %vm175, %v3784, 0.0
    %v4010 = vadd.f32 %v4008, %v4009
    %v4011 = vsel %vm175, %v3785, 0.0
    %v4012 = vadd.f32 %v4010, %v4011
    %v4013 = vrot.slane %v4012, 4
    %v4014 = vadd.f32 %v4012, %v4013
    %v4015 = vrot.slane %v4014, 2
    %v4016 = vadd.f32 %v4014, %v4015
    %v4017 = vrot.slane %v4016, 1
    %v4018 = vadd.f32 %v4016, %v4017
    %v4019 = vsel %vm175, %v3786, 0.0
    %v4020 = vsel %vm175, %v3787, 0.0
    %v4021 = vadd.f32 %v4019, %v4020
    %v4022 = vsel %vm175, %v3788, 0.0
    %v4023 = vadd.f32 %v4021, %v4022
    %v4024 = vsel %vm175, %v3789, 0.0
    %v4025 = vadd.f32 %v4023, %v4024
    %v4026 = vsel %vm175, %v3790, 0.0
    %v4027 = vadd.f32 %v4025, %v4026
    %v4028 = vsel %vm175, %v3791, 0.0
    %v4029 = vadd.f32 %v4027, %v4028
    %v4030 = vsel %vm175, %v3792, 0.0
    %v4031 = vadd.f32 %v4029, %v4030
    %v4032 = vsel %vm175, %v3793, 0.0
    %v4033 = vadd.f32 %v4031, %v4032
    %v4034 = vsel %vm175, %v3794, 0.0
    %v4035 = vadd.f32 %v4033, %v4034
    %v4036 = vsel %vm175, %v3795, 0.0
    %v4037 = vadd.f32 %v4035, %v4036
    %v4038 = vsel %vm175, %v3796, 0.0
    %v4039 = vadd.f32 %v4037, %v4038
    %v4040 = vsel %vm175, %v3797, 0.0
    %v4041 = vadd.f32 %v4039, %v4040
    %v4042 = vsel %vm175, %v3798, 0.0
    %v4043 = vadd.f32 %v4041, %v4042
    %v4044 = vsel %vm175, %v3799, 0.0
    %v4045 = vadd.f32 %v4043, %v4044
    %v4046 = vsel %vm175, %v3800, 0.0
    %v4047 = vadd.f32 %v4045, %v4046
    %v4048 = vsel %vm175, %v3801, 0.0
    %v4049 = vadd.f32 %v4047, %v4048
    %v4050 = vrot.slane %v4049, 4
    %v4051 = vadd.f32 %v4049, %v4050
    %v4052 = vrot.slane %v4051, 2
    %v4053 = vadd.f32 %v4051, %v4052
    %v4054 = vrot.slane %v4053, 1
    %v4055 = vadd.f32 %v4053, %v4054
    %v4056 = vsel %vm175, %v3802, 0.0
    %v4057 = vsel %vm175, %v3803, 0.0
    %v4058 = vadd.f32 %v4056, %v4057
    %v4059 = vsel %vm175, %v3804, 0.0
    %v4060 = vadd.f32 %v4058, %v4059
    %v4061 = vsel %vm175, %v3805, 0.0
    %v4062 = vadd.f32 %v4060, %v4061
    %v4063 = vsel %vm175, %v3806, 0.0
    %v4064 = vadd.f32 %v4062, %v4063
    %v4065 = vsel %vm175, %v3807, 0.0
    %v4066 = vadd.f32 %v4064, %v4065
    %v4067 = vsel %vm175, %v3808, 0.0
    %v4068 = vadd.f32 %v4066, %v4067
    %v4069 = vsel %vm175, %v3809, 0.0
    %v4070 = vadd.f32 %v4068, %v4069
    %v4071 = vsel %vm175, %v3810, 0.0
    %v4072 = vadd.f32 %v4070, %v4071
    %v4073 = vsel %vm175, %v3811, 0.0
    %v4074 = vadd.f32 %v4072, %v4073
    %v4075 = vsel %vm175, %v3812, 0.0
    %v4076 = vadd.f32 %v4074, %v4075
    %v4077 = vsel %vm175, %v3813, 0.0
    %v4078 = vadd.f32 %v4076, %v4077
    %v4079 = vsel %vm175, %v3814, 0.0
    %v4080 = vadd.f32 %v4078, %v4079
    %v4081 = vsel %vm175, %v3815, 0.0
    %v4082 = vadd.f32 %v4080, %v4081
    %v4083 = vsel %vm175, %v3816, 0.0
    %v4084 = vadd.f32 %v4082, %v4083
    %v4085 = vsel %vm175, %v3817, 0.0
    %v4086 = vadd.f32 %v4084, %v4085
    %v4087 = vrot.slane %v4086, 4
    %v4088 = vadd.f32 %v4086, %v4087
    %v4089 = vrot.slane %v4088, 2
    %v4090 = vadd.f32 %v4088, %v4089
    %v4091 = vrot.slane %v4090, 1
    %v4092 = vadd.f32 %v4090, %v4091
    %v4093 = vsel %vm175, %v3818, 0.0
    %v4094 = vsel %vm175, %v3819, 0.0
    %v4095 = vadd.f32 %v4093, %v4094
    %v4096 = vsel %vm175, %v3820, 0.0
    %v4097 = vadd.f32 %v4095, %v4096
    %v4098 = vsel %vm175, %v3821, 0.0
    %v4099 = vadd.f32 %v4097, %v4098
    %v4100 = vsel %vm175, %v3822, 0.0
    %v4101 = vadd.f32 %v4099, %v4100
    %v4102 = vsel %vm175, %v3823, 0.0
    %v4103 = vadd.f32 %v4101, %v4102
    %v4104 = vsel %vm175, %v3824, 0.0
    %v4105 = vadd.f32 %v4103, %v4104
    %v4106 = vsel %vm175, %v3825, 0.0
    %v4107 = vadd.f32 %v4105, %v4106
    %v4108 = vsel %vm175, %v3826, 0.0
    %v4109 = vadd.f32 %v4107, %v4108
    %v4110 = vsel %vm175, %v3827, 0.0
    %v4111 = vadd.f32 %v4109, %v4110
    %v4112 = vsel %vm175, %v3828, 0.0
    %v4113 = vadd.f32 %v4111, %v4112
    %v4114 = vsel %vm175, %v3829, 0.0
    %v4115 = vadd.f32 %v4113, %v4114
    %v4116 = vsel %vm175, %v3830, 0.0
    %v4117 = vadd.f32 %v4115, %v4116
    %v4118 = vsel %vm175, %v3831, 0.0
    %v4119 = vadd.f32 %v4117, %v4118
    %v4120 = vsel %vm175, %v3832, 0.0
    %v4121 = vadd.f32 %v4119, %v4120
    %v4122 = vsel %vm175, %v3833, 0.0
    %v4123 = vadd.f32 %v4121, %v4122
    %v4124 = vrot.slane %v4123, 4
    %v4125 = vadd.f32 %v4123, %v4124
    %v4126 = vrot.slane %v4125, 2
    %v4127 = vadd.f32 %v4125, %v4126
    %v4128 = vrot.slane %v4127, 1
    %v4129 = vadd.f32 %v4127, %v4128
    %v4138 = vsel %vm3145, %v3907, %v3870
    %v4139 = vsel %vm3147, %v3944, %v4138
    %v4140 = vsel %vm3149, %v3981, %v4139
    %v4141 = vsel %vm3151, %v4018, %v4140
    %v4142 = vsel %vm3153, %v4055, %v4141
    %v4143 = vsel %vm3155, %v4092, %v4142
    %v4144 = vsel %vm3157, %v4129, %v4143
    %4146 = vst.msk [vmem:[#allocation3] sm:$0xff] %vm175, %v4144
    %4147 = vst [vmem:[#allocation5] sm:$0xff] %v3169
    // Predicated region
    $region34: #{tpu_custom_call.1} parent=1 // pred_check
      _
    $region35: #{tpu_custom_call.1} parent=1 // pred_check_branch
      %4149 = sbr.rel (0) target = $region37
    $region36: #{tpu_custom_call.1} parent=1 // pred_region
      %s4151 = ssub.s32 128, 128
      %4152 = vsyncadd [#allocation4], %s4151
      %s4154 = sshll.u32 [#allocation3], 4
      %s4155 = int_to_ptr.vmem [resolvable:$true] %s4154
      %4157 = dma.vmem_to_hbm [thread:$0]  %s4155, 128, %s8, [#allocation4]
    $region37: #{tpu_custom_call.1} parent=1 // pred_fallthru
      _
    // Predicated region
    $region38: #{tpu_custom_call.1} parent=1 // pred_check
      _
    $region39: #{tpu_custom_call.1} parent=1 // pred_check_branch
      %4159 = sbr.rel (0) target = $region41
    $region40: #{tpu_custom_call.1} parent=1 // pred_region
      %s4161 = ssub.s32 128, 128
      %4162 = vsyncadd [#allocation6], %s4161
      %s4164 = sshll.u32 [#allocation5], 4
      %s4165 = int_to_ptr.vmem [resolvable:$true] %s4164
      %4167 = dma.vmem_to_hbm [thread:$0]  %s4165, 128, %s9, [#allocation6]
    $region41: #{tpu_custom_call.1} parent=1 // pred_fallthru
      _
    // Predicated region
    $region42: #{tpu_custom_call.1} parent=1 // pred_check
      _
    $region43: #{tpu_custom_call.1} parent=1 // pred_check_branch
      %4169 = sbr.rel (0) target = $region45
    $region44: #{tpu_custom_call.1} parent=1 // pred_region
      %4170 = dma.done [#allocation4], 128
    $region45: #{tpu_custom_call.1} parent=1 // pred_fallthru
      _
    // Predicated region
    $region46: #{tpu_custom_call.1} parent=1 // pred_check
      _
    $region47: #{tpu_custom_call.1} parent=1 // pred_check_branch
      %4172 = sbr.rel (0) target = $region49
    $region48: #{tpu_custom_call.1} parent=1 // pred_region
      %4173 = dma.done [#allocation6], 128
    $region49: #{tpu_custom_call.1} parent=1 // pred_fallthru
      _
    %4174 = vsyncpa [#allocation4], 1
    %4175 = vsyncpa [#allocation6], 1

</llo_original>
